<compile_context>
chip_gen: v7x
topology: tpu7x:2x2x1
jax: 0.10.0
libtpu: 0.0.40
codegen_flags: <defaults>
</compile_context>

<pallas_src>
from functools import partial

import jax
import jax.numpy as jnp
import numpy as np
from jax.experimental import pallas as pl
from jax.experimental.pallas import tpu as pltpu

NEG_SLOPE = 0.01  # F.leaky_relu default negative_slope


# ---------------------------------------------------------------------------
# Kernel
# ---------------------------------------------------------------------------
def pred_layer_kernel(q_ref, agg_ref, aemb_ref,
                      wq_ref, vq_ref, wp1_ref, wp2_ref, vp_ref, pred_ref,
                      score_ref, *, matmul_dtype, approx_recip):
    Bt, Lq, H2 = q_ref.shape
    Lp = agg_ref.shape[1]
    A = aemb_ref.shape[1]
    H = wq_ref.shape[1]

    def mm(a, w_ref):
        # MXU matmul; operands in matmul_dtype (bf16 by default -- the MXU is
        # bf16-native on v5e/v6e/v7x), accumulation always f32.
        return jnp.dot(a.astype(matmul_dtype), w_ref[...].astype(matmul_dtype),
                       preferred_element_type=jnp.float32)

    def recip(x):
        # approx=True -> EUP vrcp (otherwise-idle slot) on the bf16 path;
        # exact reciprocal on the f32 path so the 1e-5 self-test stays tight.
        return pl.reciprocal(x, approx=approx_recip)

    vq_row = vq_ref[...].astype(jnp.float32)   # (1, H)
    vp_row = vp_ref[...].astype(jnp.float32)   # (1, H)

    # --- question attention: sj = vq(tanh(Wq q)); softmax over Lq; rq ---------
    h = jnp.tanh(mm(q_ref[...].reshape(Bt * Lq, H2), wq_ref))             # (Bt*Lq, H)  MXU
    # NOTE: sj/sp are kept in (Bt, L, 1) layout (softmax along sublanes).  A
    # lane-major (Bt, L) layout would cut XLU/vreg waste for large L, but the
    # broadcast back over 2H then needs a lane->sublane relayout; at the L used
    # here the sublane reduction is cheap, so the known-good layout is kept.
    sj = jnp.sum(h.reshape(Bt, Lq, H) * vq_row, axis=-1, keepdims=True)   # (Bt, Lq, 1)
    sj = sj - jnp.max(sj, axis=1, keepdims=True)
    eq = jnp.exp(sj)
    attn_q = eq * recip(jnp.sum(eq, axis=1, keepdims=True))               # softmax over Lq
    # Re-read q from the already-resident VMEM input buffer at the point of use
    # instead of holding the full f32 tile live in vregs across the attention.
    rq = jnp.sum(attn_q * q_ref[...].astype(jnp.float32), axis=1)         # (Bt, 2H)

    # --- passage attention conditioned on rq ----------------------------------
    p1 = mm(agg_ref[...].reshape(Bt * Lp, H2), wp1_ref).reshape(Bt, Lp, H)  # MXU
    p2 = mm(rq, wp2_ref)                                                  # (Bt, H)    MXU
    sp = jnp.sum((p1 + p2[:, None, :]) * vp_row, axis=-1, keepdims=True)  # (Bt, Lp, 1)
    sp = sp - jnp.max(sp, axis=1, keepdims=True)
    ep = jnp.exp(sp)
    attn_p = ep * recip(jnp.sum(ep, axis=1, keepdims=True))               # softmax over Lp
    rp = jnp.sum(attn_p * agg_ref[...].astype(jnp.float32), axis=1)       # (Bt, 2H)

    # --- encoder_output = dropout(leaky_relu(prediction(rp))), p=0 -> identity
    # TODO(synk): dropout with p>0 would need pltpu.prng_seed/prng_random_bits here.
    enc = mm(rp, pred_ref)                                                # (Bt, E)    MXU
    enc = jnp.where(enc > 0, enc, NEG_SLOPE * enc)

    # --- score = softmax over answers of <a_embedding[b,a,:], enc[b,:]> -------
    logits = jnp.sum(aemb_ref[...].astype(jnp.float32) * enc[:, None, :],
                     axis=-1)                                             # (Bt, A)
    logits = logits - jnp.max(logits, axis=-1, keepdims=True)
    el = jnp.exp(logits)
    score = el * recip(jnp.sum(el, axis=-1, keepdims=True))               # (Bt, A)

    # Lane-dense writeback: one (1, A, Bt) slab per grid step, batch tile on the
    # lane axis.  The (Bt, A) -> (A, Bt) transpose is expressed as an identity
    # contraction on the MXU (exact in f32) to avoid an XLU transpose of a tiny,
    # non-tile-aligned array.
    ridx = jax.lax.broadcasted_iota(jnp.int32, (A, A), 0)
    cidx = jax.lax.broadcasted_iota(jnp.int32, (A, A), 1)
    eye_a = (ridx == cidx).astype(jnp.float32)
    score_t = jax.lax.dot_general(eye_a, score, (((1,), (1,)), ((), ())),
                                  preferred_element_type=jnp.float32)     # (A, Bt)
    score_ref[...] = score_t[None].astype(score_ref.dtype)


# ---------------------------------------------------------------------------
# Host-side helpers: chip-aware tiling / VMEM budgeting
# ---------------------------------------------------------------------------
def _tpu_topology():
    """Returns (multi_tensorcore, per_core_vmem_bytes) with safe fallbacks."""
    kind = ""
    try:
        kind = jax.devices()[0].device_kind.lower()
    except Exception:
        pass
    multi = ("v7" in kind) or ("tpu7" in kind)       # v7x: 2 TensorCores / chip
    vmem = (64 << 20) if multi else (128 << 20)      # v7x: 64 MiB/TC, v5e/v6e: 128 MiB
    try:
        cap = int(getattr(pltpu.get_tpu_info(), "vmem_capacity_bytes", 0) or 0)
        if cap > 0:
            vmem = min(vmem, cap)
    except Exception:
        pass
    return multi, vmem


def _per_step_vmem_bytes(bb, Lq, Lp, A, H, H2, E, stream_itemsize):
    f32 = 4
    tiles = 2 * bb * (Lq * H2 + Lp * H2 + A * E) * stream_itemsize   # double-buffered inputs
    tiles += 2 * A * bb * f32                                        # double-buffered out slab
    weights = (3 * H2 * H + H2 * E + 2 * H) * stream_itemsize        # single-buffered weights
    inter = bb * ((Lq + Lp) * (H + H2) + 2 * (H2 + E) + 2 * (Lq + Lp + A)) * f32
    return tiles + weights + inter


def _choose_block_b(B, Lq, Lp, A, H, H2, E, stream_itemsize, budget, multi_core):
    # Enough rows per step to fill the MXU M dimension (~512 rows of q/agg).
    bb = max(1, min(B, 512 // max(Lq, Lp, 1)))
    # Respect the per-step VMEM budget.
    while bb > 1 and _per_step_vmem_bytes(bb, Lq, Lp, A, H, H2, E, stream_itemsize) > budget:
        bb = max(1, bb // 2)
    # Only v7x (2 TensorCores) benefits from >= 2 grid steps; v5e/v6e are
    # single-core, where extra steps only add per-step pipeline overhead.
    if multi_core and B >= 2:
        bb = min(bb, pl.cdiv(B, 2))
    # Prefer a block size that divides B (avoids a wrapper-side jnp.pad copy of
    # all inputs) and, on v7x, an even number of steps (balanced TC sharding).
    div = None
    for d in range(bb, 0, -1):
        if B % d == 0:
            div = d
            break
    if div is not None and div * 2 >= bb:
        g = B // div
        if (not multi_core) or g == 1 or g % 2 == 0:
            return div
    return bb


# ---------------------------------------------------------------------------
# Forward wrapper
# ---------------------------------------------------------------------------
def pred_layer_forward(q_encoder, aggregation, a_embedding, params, *,
                       block_b=None, matmul_dtype=jnp.bfloat16, stream_dtype=None,
                       is_train=True, is_argmax=True, labels=None, max_margin=False):
    """Pallas TPU port of Pred_Layer.forward.

    is_train=False returns argmax(score)/score (matching the PyTorch module);
    is_train=True returns (score, loss).
    """
    B, Lq, H2 = q_encoder.shape
    _, Lp, _ = aggregation.shape
    _, A, E = a_embedding.shape
    H = H2 // 2

    if stream_dtype is None:
        # Stream activations/weights at the MXU operand precision: halves the
        # HBM->VMEM DMA bytes on the (DMA/overhead-bound) bf16 path.
        stream_dtype = matmul_dtype
    s_item = jnp.dtype(stream_dtype).itemsize

    multi_core, vmem_cap = _tpu_topology()
    budget = min(vmem_cap // 2, 48 << 20)

    if block_b is None:
        block_b = _choose_block_b(B, Lq, Lp, A, H, H2, E, s_item, budget, multi_core)
    block_b = max(1, min(block_b, B))

    grid_b = pl.cdiv(B, block_b)
    if multi_core and grid_b > 1 and grid_b % 2 == 1:
        grid_b += 1            # even step count -> balanced v7x megacore sharding
    B_pad = grid_b * block_b

    def prep(x):
        x = x.astype(stream_dtype)
        if x.shape[0] != B_pad:   # only when no suitable divisor block size exists
            x = jnp.pad(x, [(0, B_pad - x.shape[0])] + [(0, 0)] * (x.ndim - 1))
        return x

    q_p, agg_p, aemb_p = prep(q_encoder), prep(aggregation), prep(a_embedding)

    # Linear weights pre-transposed (out,in) -> (in,out) for row-major MXU matmuls.
    wq_t = params["Wq"].T.astype(stream_dtype)            # (2H, H)
    wp1_t = params["Wp1"].T.astype(stream_dtype)          # (2H, H)
    wp2_t = params["Wp2"].T.astype(stream_dtype)          # (2H, H)
    pred_t = params["prediction"].T.astype(stream_dtype)  # (2H, E)
    vq_row = params["vq"].astype(stream_dtype)            # (1, H)  N=1 matvec on VPU
    vp_row = params["vp"].astype(stream_dtype)            # (1, H)

    est = _per_step_vmem_bytes(block_b, Lq, Lp, A, H, H2, E, s_item)
    vmem_limit = int(min(vmem_cap * 3 // 4, max(32 << 20, 2 * est + (4 << 20))))

    kernel = partial(
        pred_layer_kernel,
        matmul_dtype=matmul_dtype,
        approx_recip=(jnp.dtype(matmul_dtype) != jnp.dtype(jnp.float32)))

    def build(single_buffer_weights):
        def data_spec(shape):
            return pl.BlockSpec(shape, lambda b: (b, 0, 0))

        def weight_spec(shape):
            if single_buffer_weights:
                # Constant index_map -> one buffer is enough; frees VMEM so the
                # batch tile can stay large (matters most on v7x's 64 MiB/TC).
                return pl.BlockSpec(shape, lambda b: (0,) * len(shape),
                                    pipeline_mode=pl.Buffered(1))
            return pl.BlockSpec(shape, lambda b: (0,) * len(shape))

        return pl.pallas_call(
            kernel,
            out_shape=jax.ShapeDtypeStruct((grid_b, A, block_b), jnp.float32),
            grid_spec=pltpu.PrefetchScalarGridSpec(
                num_scalar_prefetch=0,
                grid=(grid_b,),
                in_specs=[
                    data_spec((block_b, Lq, H2)),
                    data_spec((block_b, Lp, H2)),
                    data_spec((block_b, A, E)),
                    weight_spec((H2, H)),   # Wq^T
                    weight_spec((1, H)),    # vq
                    weight_spec((H2, H)),   # Wp1^T
                    weight_spec((H2, H)),   # Wp2^T
                    weight_spec((1, H)),    # vp
                    weight_spec((H2, E)),   # prediction^T
                ],
                out_specs=pl.BlockSpec((1, A, block_b), lambda b: (b, 0, 0)),
            ),
            compiler_params=pltpu.CompilerParams(
                dimension_semantics=("parallel",),
                vmem_limit_bytes=vmem_limit),
        )

    args = (q_p, agg_p, aemb_p, wq_t, vq_row, wp1_t, wp2_t, vp_row, pred_t)
    try:
        out = build(True)(*args)
    except Exception:
        # Fallback for JAX versions where pl.Buffered(1) single-buffering of the
        # constant weight blocks is not accepted by the Mosaic lowering.
        out = build(False)(*args)

    # (grid_b, A, block_b) lane-dense slabs -> (B, A); padded rows sliced off.
    score = jnp.transpose(out, (0, 2, 1)).reshape(B_pad, A)[:B]

    if not is_train:
        return jnp.argmax(score, axis=1) if is_argmax else score

    if labels is None:
        correct_answer = score[:, 0]
    else:
        correct_answer = score[jnp.arange(B), jnp.asarray(labels)]

    if max_margin:
        u = 1.5
        margin = u + correct_answer - jnp.max(score, axis=1)
        loss = jnp.mean(jnp.maximum(0.0, margin))
    else:
        loss = -jnp.mean(jnp.log(correct_answer))
    return score, loss


# ---------------------------------------------------------------------------
# Pure-JAX reference + param init (for the self-test)
# ---------------------------------------------------------------------------
def reference_forward(q, agg, aemb, params):
    lin = lambda x, w: x @ w.T
    sj = jnp.swapaxes(lin(jnp.tanh(lin(q, params["Wq"])), params["vq"]), 1, 2)
    rq = jax.nn.softmax(sj, axis=2) @ q
    sp = lin(lin(agg, params["Wp1"]) + lin(rq, params["Wp2"]), params["vp"])
    sp = jax.nn.softmax(jnp.swapaxes(sp, 1, 2), axis=2)
    rp = sp @ agg
    enc = jax.nn.leaky_relu(lin(rp, params["prediction"]), NEG_SLOPE)
    logits = (aemb @ jnp.swapaxes(enc, 1, 2))[..., 0]
    score = jax.nn.softmax(logits, axis=1)
    loss = -jnp.mean(jnp.log(score[:, 0]))
    return score, loss


def init_params(key, hidden_size, emb_size):
    H, H2, E = hidden_size, 2 * hidden_size, emb_size
    ks = jax.random.split(key, 6)

    def linear_w(k, out_f, in_f):
        bound = 1.0 / np.sqrt(in_f)
        return jax.random.uniform(k, (out_f, in_f), jnp.float32, -bound, bound)

    return {
        "Wq": linear_w(ks[0], H, H2),
        "vq": linear_w(ks[1], 1, H),
        "Wp1": linear_w(ks[2], H, H2),
        "Wp2": linear_w(ks[3], H, H2),
        "vp": linear_w(ks[4], 1, H),
        "prediction": linear_w(ks[5], E, H2),
    }


if __name__ == "__main__":
    # small shapes consistent with the forward pass
    B, H, Lq, Lp, A = 8, 32, 8, 8, 4
    H2, E = 2 * H, 64  # a_embedding last dim must equal emb_size

    key = jax.random.PRNGKey(0)
    kq, ka, ke, kp = jax.random.split(key, 4)
    q_encoder = jax.random.normal(kq, (B, Lq, H2), jnp.float32)
    aggregation = jax.random.normal(ka, (B, Lp, H2), jnp.float32)
    a_embedding = jax.random.normal(ke, (B, A, E), jnp.float32)
    params = init_params(kp, H, E)

    ref_score, ref_loss = reference_forward(q_encoder, aggregation, a_embedding, params)

    # f32 MXU path: exact check against the reference.
    score32, loss32 = pred_layer_forward(q_encoder, aggregation, a_embedding, params,
                                         matmul_dtype=jnp.float32)
    jax.block_until_ready((score32, loss32))
    np.testing.assert_allclose(np.asarray(score32), np.asarray(ref_score),
                               rtol=1e-5, atol=1e-5)
    np.testing.assert_allclose(np.asarray(loss32), np.asarray(ref_loss),
                               rtol=1e-5, atol=1e-5)

    # Production default: bf16 MXU operands + bf16 input streaming (loose check).
    score16, loss16 = pred_layer_forward(q_encoder, aggregation, a_embedding, params)
    jax.block_until_ready((score16, loss16))
    np.testing.assert_allclose(np.asarray(score16), np.asarray(ref_score),
                               rtol=0.1, atol=0.1)
    assert np.isfinite(np.asarray(loss16)).all()

    print("KERNEL_OK")
</pallas_src>

<mosaic_0001>
module attributes {stable_mosaic.version = 11 : i64} {
  func.func @pred_layer_kernel(%arg0: i32, %arg1: memref<8x8x64xf32, #tpu.memory_space<vmem>>, %arg2: memref<8x8x64xf32, #tpu.memory_space<vmem>>, %arg3: memref<8x4x64xf32, #tpu.memory_space<vmem>>, %arg4: memref<64x32xf32, #tpu.memory_space<vmem>>, %arg5: memref<1x32xf32, #tpu.memory_space<vmem>>, %arg6: memref<64x32xf32, #tpu.memory_space<vmem>>, %arg7: memref<64x32xf32, #tpu.memory_space<vmem>>, %arg8: memref<1x32xf32, #tpu.memory_space<vmem>>, %arg9: memref<64x64xf32, #tpu.memory_space<vmem>>, %arg10: memref<1x4x8xf32, #tpu.memory_space<vmem>>) attributes {dimension_semantics = [#tpu.dimension_semantics<parallel>], iteration_bounds = array<i64: 1>, scalar_prefetch = 0 : i64, scratch_operands = 0 : i64, tpu.core_type = #tpu.core_type<tc>, window_params = [{transform_indices = @transform_0, window_bounds = array<i64: 8, 8, 64>}, {transform_indices = @transform_1, window_bounds = array<i64: 8, 8, 64>}, {transform_indices = @transform_2, window_bounds = array<i64: 8, 4, 64>}, {pipeline_mode = #tpu.pipeline_mode<synchronous>, transform_indices = @transform_3, window_bounds = array<i64: 64, 32>}, {pipeline_mode = #tpu.pipeline_mode<synchronous>, transform_indices = @transform_4, window_bounds = array<i64: 1, 32>}, {pipeline_mode = #tpu.pipeline_mode<synchronous>, transform_indices = @transform_5, window_bounds = array<i64: 64, 32>}, {pipeline_mode = #tpu.pipeline_mode<synchronous>, transform_indices = @transform_6, window_bounds = array<i64: 64, 32>}, {pipeline_mode = #tpu.pipeline_mode<synchronous>, transform_indices = @transform_7, window_bounds = array<i64: 1, 32>}, {pipeline_mode = #tpu.pipeline_mode<synchronous>, transform_indices = @transform_8, window_bounds = array<i64: 64, 64>}, {transform_indices = @transform_9, window_bounds = array<i64: 1, 4, 8>}]} {
    %c0 = arith.constant 0 : index
    %c0_0 = arith.constant 0 : index
    %0 = vector.load %arg5[%c0, %c0_0] : memref<1x32xf32, #tpu.memory_space<vmem>>, vector<1x32xf32>
    %c0_1 = arith.constant 0 : index
    %c0_2 = arith.constant 0 : index
    %1 = vector.load %arg8[%c0_1, %c0_2] : memref<1x32xf32, #tpu.memory_space<vmem>>, vector<1x32xf32>
    %c0_3 = arith.constant 0 : index
    %c0_4 = arith.constant 0 : index
    %c0_5 = arith.constant 0 : index
    %2 = vector.load %arg1[%c0_3, %c0_4, %c0_5] : memref<8x8x64xf32, #tpu.memory_space<vmem>>, vector<8x8x64xf32>
    %3 = vector.shape_cast %2 : vector<8x8x64xf32> to vector<64x64xf32>
    %c0_6 = arith.constant 0 : index
    %c0_7 = arith.constant 0 : index
    %4 = vector.load %arg4[%c0_6, %c0_7] : memref<64x32xf32, #tpu.memory_space<vmem>>, vector<64x32xf32>
    %cst = arith.constant dense<0.000000e+00> : vector<64x32xf32>
    %5 = tpu.matmul %3, %4, %cst {dimension_numbers = #tpu.dot_dimension_numbers<[1], [0], [0], [1], [0, 0, 1, 1], [], []>} : vector<64x64xf32>, vector<64x32xf32>, vector<64x32xf32> -> vector<64x32xf32>
    %6 = math.tanh %5 : vector<64x32xf32>
    %7 = vector.shape_cast %6 : vector<64x32xf32> to vector<8x8x32xf32>
    %8 = vector.shape_cast %0 : vector<1x32xf32> to vector<1x1x32xf32>
    %9 = vector.broadcast %8 : vector<1x1x32xf32> to vector<8x8x32xf32>
    %10 = arith.mulf %7, %9 : vector<8x8x32xf32>
    %cst_8 = arith.constant dense<0.000000e+00> : vector<8x8xf32>
    %11 = vector.multi_reduction <add>, %10, %cst_8 [2] : vector<8x8x32xf32> to vector<8x8xf32>
    %12 = vector.shape_cast %11 : vector<8x8xf32> to vector<8x8x1xf32>
    %cst_9 = arith.constant dense<0xFF800000> : vector<8x1xf32>
    %13 = vector.multi_reduction <maximumf>, %12, %cst_9 [1] : vector<8x8x1xf32> to vector<8x1xf32>
    %14 = vector.shape_cast %13 : vector<8x1xf32> to vector<8x1x1xf32>
    %15 = vector.broadcast %14 : vector<8x1x1xf32> to vector<8x8x1xf32>
    %16 = arith.subf %12, %15 : vector<8x8x1xf32>
    %17 = math.exp %16 : vector<8x8x1xf32>
    %cst_10 = arith.constant dense<0.000000e+00> : vector<8x1xf32>
    %18 = vector.multi_reduction <add>, %17, %cst_10 [1] : vector<8x8x1xf32> to vector<8x1xf32>
    %19 = vector.shape_cast %18 : vector<8x1xf32> to vector<8x1x1xf32>
    %20 = tpu.reciprocal %19 : vector<8x1x1xf32> -> vector<8x1x1xf32>
    %21 = vector.broadcast %20 : vector<8x1x1xf32> to vector<8x8x1xf32>
    %22 = arith.mulf %17, %21 : vector<8x8x1xf32>
    %c0_11 = arith.constant 0 : index
    %c0_12 = arith.constant 0 : index
    %c0_13 = arith.constant 0 : index
    %23 = vector.load %arg1[%c0_11, %c0_12, %c0_13] : memref<8x8x64xf32, #tpu.memory_space<vmem>>, vector<8x8x64xf32>
    %24 = vector.broadcast %22 : vector<8x8x1xf32> to vector<8x8x64xf32>
    %25 = arith.mulf %24, %23 : vector<8x8x64xf32>
    %cst_14 = arith.constant dense<0.000000e+00> : vector<8x64xf32>
    %26 = vector.multi_reduction <add>, %25, %cst_14 [1] : vector<8x8x64xf32> to vector<8x64xf32>
    %c0_15 = arith.constant 0 : index
    %c0_16 = arith.constant 0 : index
    %c0_17 = arith.constant 0 : index
    %27 = vector.load %arg2[%c0_15, %c0_16, %c0_17] : memref<8x8x64xf32, #tpu.memory_space<vmem>>, vector<8x8x64xf32>
    %28 = vector.shape_cast %27 : vector<8x8x64xf32> to vector<64x64xf32>
    %c0_18 = arith.constant 0 : index
    %c0_19 = arith.constant 0 : index
    %29 = vector.load %arg6[%c0_18, %c0_19] : memref<64x32xf32, #tpu.memory_space<vmem>>, vector<64x32xf32>
    %cst_20 = arith.constant dense<0.000000e+00> : vector<64x32xf32>
    %30 = tpu.matmul %28, %29, %cst_20 {dimension_numbers = #tpu.dot_dimension_numbers<[1], [0], [0], [1], [0, 0, 1, 1], [], []>} : vector<64x64xf32>, vector<64x32xf32>, vector<64x32xf32> -> vector<64x32xf32>
    %31 = vector.shape_cast %30 : vector<64x32xf32> to vector<8x8x32xf32>
    %c0_21 = arith.constant 0 : index
    %c0_22 = arith.constant 0 : index
    %32 = vector.load %arg7[%c0_21, %c0_22] : memref<64x32xf32, #tpu.memory_space<vmem>>, vector<64x32xf32>
    %cst_23 = arith.constant dense<0.000000e+00> : vector<8x32xf32>
    %33 = tpu.matmul %26, %32, %cst_23 {dimension_numbers = #tpu.dot_dimension_numbers<[1], [0], [0], [1], [0, 0, 1, 1], [], []>} : vector<8x64xf32>, vector<64x32xf32>, vector<8x32xf32> -> vector<8x32xf32>
    %34 = vector.shape_cast %33 : vector<8x32xf32> to vector<8x1x32xf32>
    %35 = vector.broadcast %34 : vector<8x1x32xf32> to vector<8x8x32xf32>
    %36 = arith.addf %31, %35 : vector<8x8x32xf32>
    %37 = vector.shape_cast %1 : vector<1x32xf32> to vector<1x1x32xf32>
    %38 = vector.broadcast %37 : vector<1x1x32xf32> to vector<8x8x32xf32>
    %39 = arith.mulf %36, %38 : vector<8x8x32xf32>
    %cst_24 = arith.constant dense<0.000000e+00> : vector<8x8xf32>
    %40 = vector.multi_reduction <add>, %39, %cst_24 [2] : vector<8x8x32xf32> to vector<8x8xf32>
    %41 = vector.shape_cast %40 : vector<8x8xf32> to vector<8x8x1xf32>
    %cst_25 = arith.constant dense<0xFF800000> : vector<8x1xf32>
    %42 = vector.multi_reduction <maximumf>, %41, %cst_25 [1] : vector<8x8x1xf32> to vector<8x1xf32>
    %43 = vector.shape_cast %42 : vector<8x1xf32> to vector<8x1x1xf32>
    %44 = vector.broadcast %43 : vector<8x1x1xf32> to vector<8x8x1xf32>
    %45 = arith.subf %41, %44 : vector<8x8x1xf32>
    %46 = math.exp %45 : vector<8x8x1xf32>
    %cst_26 = arith.constant dense<0.000000e+00> : vector<8x1xf32>
    %47 = vector.multi_reduction <add>, %46, %cst_26 [1] : vector<8x8x1xf32> to vector<8x1xf32>
    %48 = vector.shape_cast %47 : vector<8x1xf32> to vector<8x1x1xf32>
    %49 = tpu.reciprocal %48 : vector<8x1x1xf32> -> vector<8x1x1xf32>
    %50 = vector.broadcast %49 : vector<8x1x1xf32> to vector<8x8x1xf32>
    %51 = arith.mulf %46, %50 : vector<8x8x1xf32>
    %c0_27 = arith.constant 0 : index
    %c0_28 = arith.constant 0 : index
    %c0_29 = arith.constant 0 : index
    %52 = vector.load %arg2[%c0_27, %c0_28, %c0_29] : memref<8x8x64xf32, #tpu.memory_space<vmem>>, vector<8x8x64xf32>
    %53 = vector.broadcast %51 : vector<8x8x1xf32> to vector<8x8x64xf32>
    %54 = arith.mulf %53, %52 : vector<8x8x64xf32>
    %cst_30 = arith.constant dense<0.000000e+00> : vector<8x64xf32>
    %55 = vector.multi_reduction <add>, %54, %cst_30 [1] : vector<8x8x64xf32> to vector<8x64xf32>
    %c0_31 = arith.constant 0 : index
    %c0_32 = arith.constant 0 : index
    %56 = vector.load %arg9[%c0_31, %c0_32] : memref<64x64xf32, #tpu.memory_space<vmem>>, vector<64x64xf32>
    %cst_33 = arith.constant dense<0.000000e+00> : vector<8x64xf32>
    %57 = tpu.matmul %55, %56, %cst_33 {dimension_numbers = #tpu.dot_dimension_numbers<[1], [0], [0], [1], [0, 0, 1, 1], [], []>} : vector<8x64xf32>, vector<64x64xf32>, vector<8x64xf32> -> vector<8x64xf32>
    %cst_34 = arith.constant 0.000000e+00 : f32
    %58 = vector.broadcast %cst_34 : f32 to vector<8x64xf32>
    %59 = arith.cmpf ogt, %57, %58 : vector<8x64xf32>
    %cst_35 = arith.constant 0.00999999977 : f32
    %60 = vector.broadcast %cst_35 : f32 to vector<8x64xf32>
    %61 = arith.mulf %60, %57 : vector<8x64xf32>
    %62 = arith.select %59, %57, %61 : vector<8x64xi1>, vector<8x64xf32>
    %c0_36 = arith.constant 0 : index
    %c0_37 = arith.constant 0 : index
    %c0_38 = arith.constant 0 : index
    %63 = vector.load %arg3[%c0_36, %c0_37, %c0_38] : memref<8x4x64xf32, #tpu.memory_space<vmem>>, vector<8x4x64xf32>
    %64 = vector.shape_cast %62 : vector<8x64xf32> to vector<8x1x64xf32>
    %65 = vector.broadcast %64 : vector<8x1x64xf32> to vector<8x4x64xf32>
    %66 = arith.mulf %63, %65 : vector<8x4x64xf32>
    %cst_39 = arith.constant dense<0.000000e+00> : vector<8x4xf32>
    %67 = vector.multi_reduction <add>, %66, %cst_39 [2] : vector<8x4x64xf32> to vector<8x4xf32>
    %cst_40 = arith.constant dense<0xFF800000> : vector<8xf32>
    %68 = vector.multi_reduction <maximumf>, %67, %cst_40 [1] : vector<8x4xf32> to vector<8xf32>
    %69 = vector.shape_cast %68 : vector<8xf32> to vector<8x1xf32>
    %70 = vector.broadcast %69 : vector<8x1xf32> to vector<8x4xf32>
    %71 = arith.subf %67, %70 : vector<8x4xf32>
    %72 = math.exp %71 : vector<8x4xf32>
    %cst_41 = arith.constant dense<0.000000e+00> : vector<8xf32>
    %73 = vector.multi_reduction <add>, %72, %cst_41 [1] : vector<8x4xf32> to vector<8xf32>
    %74 = vector.shape_cast %73 : vector<8xf32> to vector<8x1xf32>
    %75 = tpu.reciprocal %74 : vector<8x1xf32> -> vector<8x1xf32>
    %76 = vector.broadcast %75 : vector<8x1xf32> to vector<8x4xf32>
    %77 = arith.mulf %72, %76 : vector<8x4xf32>
    %78 = tpu.iota {dimensions = array<i32: 0>} : vector<4x4xi32>
    %79 = tpu.iota {dimensions = array<i32: 1>} : vector<4x4xi32>
    %80 = arith.cmpi eq, %78, %79 : vector<4x4xi32>
    %81 = arith.extui %80 : vector<4x4xi1> to vector<4x4xi32>
    %82 = arith.sitofp %81 : vector<4x4xi32> to vector<4x4xf32>
    %cst_42 = arith.constant dense<0.000000e+00> : vector<4x8xf32>
    %83 = tpu.matmul %82, %77, %cst_42 {dimension_numbers = #tpu.dot_dimension_numbers<[1], [1], [0], [0], [0, 0, 1, 0], [], []>} : vector<4x4xf32>, vector<8x4xf32>, vector<4x8xf32> -> vector<4x8xf32>
    %84 = vector.shape_cast %83 : vector<4x8xf32> to vector<1x4x8xf32>
    %c0_43 = arith.constant 0 : index
    %c0_44 = arith.constant 0 : index
    %c0_45 = arith.constant 0 : index
    %85 = vector.load %arg10[%c0_43, %c0_44, %c0_45] : memref<1x4x8xf32, #tpu.memory_space<vmem>>, vector<1x4x8xf32>
    tpu.vector_store %arg10[%c0_43, %c0_44, %c0_45], %84 {strides = array<i32>} : memref<1x4x8xf32, #tpu.memory_space<vmem>>, vector<1x4x8xf32>,
    return
  }
  func.func @transform_0(%arg0: i32) -> (i32, i32, i32) {
    %c0_i32 = arith.constant 0 : i32
    %c0_i32_0 = arith.constant 0 : i32
    %c0_i32_1 = arith.constant 0 : i32
    return %arg0, %c0_i32, %c0_i32_0 : i32, i32, i32
  }
  func.func @transform_1(%arg0: i32) -> (i32, i32, i32) {
    %c0_i32 = arith.constant 0 : i32
    %c0_i32_0 = arith.constant 0 : i32
    %c0_i32_1 = arith.constant 0 : i32
    return %arg0, %c0_i32, %c0_i32_0 : i32, i32, i32
  }
  func.func @transform_2(%arg0: i32) -> (i32, i32, i32) {
    %c0_i32 = arith.constant 0 : i32
    %c0_i32_0 = arith.constant 0 : i32
    %c0_i32_1 = arith.constant 0 : i32
    return %arg0, %c0_i32, %c0_i32_0 : i32, i32, i32
  }
  func.func @transform_3(%arg0: i32) -> (i32, i32) {
    %c0_i32 = arith.constant 0 : i32
    %c0_i32_0 = arith.constant 0 : i32
    %c0_i32_1 = arith.constant 0 : i32
    return %c0_i32, %c0_i32_0 : i32, i32
  }
  func.func @transform_4(%arg0: i32) -> (i32, i32) {
    %c0_i32 = arith.constant 0 : i32
    %c0_i32_0 = arith.constant 0 : i32
    %c0_i32_1 = arith.constant 0 : i32
    return %c0_i32, %c0_i32_0 : i32, i32
  }
  func.func @transform_5(%arg0: i32) -> (i32, i32) {
    %c0_i32 = arith.constant 0 : i32
    %c0_i32_0 = arith.constant 0 : i32
    %c0_i32_1 = arith.constant 0 : i32
    return %c0_i32, %c0_i32_0 : i32, i32
  }
  func.func @transform_6(%arg0: i32) -> (i32, i32) {
    %c0_i32 = arith.constant 0 : i32
    %c0_i32_0 = arith.constant 0 : i32
    %c0_i32_1 = arith.constant 0 : i32
    return %c0_i32, %c0_i32_0 : i32, i32
  }
  func.func @transform_7(%arg0: i32) -> (i32, i32) {
    %c0_i32 = arith.constant 0 : i32
    %c0_i32_0 = arith.constant 0 : i32
    %c0_i32_1 = arith.constant 0 : i32
    return %c0_i32, %c0_i32_0 : i32, i32
  }
  func.func @transform_8(%arg0: i32) -> (i32, i32) {
    %c0_i32 = arith.constant 0 : i32
    %c0_i32_0 = arith.constant 0 : i32
    %c0_i32_1 = arith.constant 0 : i32
    return %c0_i32, %c0_i32_0 : i32, i32
  }
  func.func @transform_9(%arg0: i32) -> (i32, i32, i32) {
    %c0_i32 = arith.constant 0 : i32
    %c0_i32_0 = arith.constant 0 : i32
    %c0_i32_1 = arith.constant 0 : i32
    return %arg0, %c0_i32, %c0_i32_0 : i32, i32, i32
  }
}

module attributes {stable_mosaic.version = 11 : i64} {
  func.func @pred_layer_kernel(%arg0: i32, %arg1: memref<8x8x64xf32, #tpu.memory_space<vmem>>, %arg2: memref<8x8x64xf32, #tpu.memory_space<vmem>>, %arg3: memref<8x4x64xf32, #tpu.memory_space<vmem>>, %arg4: memref<64x32xf32, #tpu.memory_space<vmem>>, %arg5: memref<1x32xf32, #tpu.memory_space<vmem>>, %arg6: memref<64x32xf32, #tpu.memory_space<vmem>>, %arg7: memref<64x32xf32, #tpu.memory_space<vmem>>, %arg8: memref<1x32xf32, #tpu.memory_space<vmem>>, %arg9: memref<64x64xf32, #tpu.memory_space<vmem>>, %arg10: memref<1x4x8xf32, #tpu.memory_space<vmem>>) attributes {dimension_semantics = [#tpu.dimension_semantics<parallel>], iteration_bounds = array<i64: 1>, scalar_prefetch = 0 : i64, scratch_operands = 0 : i64, tpu.core_type = #tpu.core_type<tc>, window_params = [{transform_indices = @transform_0, window_bounds = array<i64: 8, 8, 64>}, {transform_indices = @transform_1, window_bounds = array<i64: 8, 8, 64>}, {transform_indices = @transform_2, window_bounds = array<i64: 8, 4, 64>}, {pipeline_mode = #tpu.pipeline_mode<synchronous>, transform_indices = @transform_3, window_bounds = array<i64: 64, 32>}, {pipeline_mode = #tpu.pipeline_mode<synchronous>, transform_indices = @transform_4, window_bounds = array<i64: 1, 32>}, {pipeline_mode = #tpu.pipeline_mode<synchronous>, transform_indices = @transform_5, window_bounds = array<i64: 64, 32>}, {pipeline_mode = #tpu.pipeline_mode<synchronous>, transform_indices = @transform_6, window_bounds = array<i64: 64, 32>}, {pipeline_mode = #tpu.pipeline_mode<synchronous>, transform_indices = @transform_7, window_bounds = array<i64: 1, 32>}, {pipeline_mode = #tpu.pipeline_mode<synchronous>, transform_indices = @transform_8, window_bounds = array<i64: 64, 64>}, {transform_indices = @transform_9, window_bounds = array<i64: 1, 4, 8>}]} {
    %c0 = arith.constant 0 : index
    %c0_0 = arith.constant 0 : index
    %0 = vector.load %arg5[%c0, %c0_0] : memref<1x32xf32, #tpu.memory_space<vmem>>, vector<1x32xf32>
    %c0_1 = arith.constant 0 : index
    %c0_2 = arith.constant 0 : index
    %1 = vector.load %arg8[%c0_1, %c0_2] : memref<1x32xf32, #tpu.memory_space<vmem>>, vector<1x32xf32>
    %c0_3 = arith.constant 0 : index
    %c0_4 = arith.constant 0 : index
    %c0_5 = arith.constant 0 : index
    %2 = vector.load %arg1[%c0_3, %c0_4, %c0_5] : memref<8x8x64xf32, #tpu.memory_space<vmem>>, vector<8x8x64xf32>
    %3 = vector.shape_cast %2 : vector<8x8x64xf32> to vector<64x64xf32>
    %c0_6 = arith.constant 0 : index
    %c0_7 = arith.constant 0 : index
    %4 = vector.load %arg4[%c0_6, %c0_7] : memref<64x32xf32, #tpu.memory_space<vmem>>, vector<64x32xf32>
    %cst = arith.constant dense<0.000000e+00> : vector<64x32xf32>
    %5 = tpu.matmul %3, %4, %cst {dimension_numbers = #tpu.dot_dimension_numbers<[1], [0], [0], [1], [0, 0, 1, 1], [], []>} : vector<64x64xf32>, vector<64x32xf32>, vector<64x32xf32> -> vector<64x32xf32>
    %6 = math.tanh %5 : vector<64x32xf32>
    %7 = vector.shape_cast %6 : vector<64x32xf32> to vector<8x8x32xf32>
    %8 = vector.shape_cast %0 : vector<1x32xf32> to vector<1x1x32xf32>
    %9 = vector.broadcast %8 : vector<1x1x32xf32> to vector<8x8x32xf32>
    %10 = arith.mulf %7, %9 : vector<8x8x32xf32>
    %cst_8 = arith.constant dense<0.000000e+00> : vector<8x8xf32>
    %11 = vector.multi_reduction <add>, %10, %cst_8 [2] : vector<8x8x32xf32> to vector<8x8xf32>
    %12 = vector.shape_cast %11 : vector<8x8xf32> to vector<8x8x1xf32>
    %cst_9 = arith.constant dense<0xFF800000> : vector<8x1xf32>
    %13 = vector.multi_reduction <maximumf>, %12, %cst_9 [1] : vector<8x8x1xf32> to vector<8x1xf32>
    %14 = vector.shape_cast %13 : vector<8x1xf32> to vector<8x1x1xf32>
    %15 = vector.broadcast %14 : vector<8x1x1xf32> to vector<8x8x1xf32>
    %16 = arith.subf %12, %15 : vector<8x8x1xf32>
    %17 = math.exp %16 : vector<8x8x1xf32>
    %cst_10 = arith.constant dense<0.000000e+00> : vector<8x1xf32>
    %18 = vector.multi_reduction <add>, %17, %cst_10 [1] : vector<8x8x1xf32> to vector<8x1xf32>
    %19 = vector.shape_cast %18 : vector<8x1xf32> to vector<8x1x1xf32>
    %20 = tpu.reciprocal %19 : vector<8x1x1xf32> -> vector<8x1x1xf32>
    %21 = vector.broadcast %20 : vector<8x1x1xf32> to vector<8x8x1xf32>
    %22 = arith.mulf %17, %21 : vector<8x8x1xf32>
    %c0_11 = arith.constant 0 : index
    %c0_12 = arith.constant 0 : index
    %c0_13 = arith.constant 0 : index
    %23 = vector.load %arg1[%c0_11, %c0_12, %c0_13] : memref<8x8x64xf32, #tpu.memory_space<vmem>>, vector<8x8x64xf32>
    %24 = vector.broadcast %22 : vector<8x8x1xf32> to vector<8x8x64xf32>
    %25 = arith.mulf %24, %23 : vector<8x8x64xf32>
    %cst_14 = arith.constant dense<0.000000e+00> : vector<8x64xf32>
    %26 = vector.multi_reduction <add>, %25, %cst_14 [1] : vector<8x8x64xf32> to vector<8x64xf32>
    %c0_15 = arith.constant 0 : index
    %c0_16 = arith.constant 0 : index
    %c0_17 = arith.constant 0 : index
    %27 = vector.load %arg2[%c0_15, %c0_16, %c0_17] : memref<8x8x64xf32, #tpu.memory_space<vmem>>, vector<8x8x64xf32>
    %28 = vector.shape_cast %27 : vector<8x8x64xf32> to vector<64x64xf32>
    %c0_18 = arith.constant 0 : index
    %c0_19 = arith.constant 0 : index
    %29 = vector.load %arg6[%c0_18, %c0_19] : memref<64x32xf32, #tpu.memory_space<vmem>>, vector<64x32xf32>
    %cst_20 = arith.constant dense<0.000000e+00> : vector<64x32xf32>
    %30 = tpu.matmul %28, %29, %cst_20 {dimension_numbers = #tpu.dot_dimension_numbers<[1], [0], [0], [1], [0, 0, 1, 1], [], []>} : vector<64x64xf32>, vector<64x32xf32>, vector<64x32xf32> -> vector<64x32xf32>
    %31 = vector.shape_cast %30 : vector<64x32xf32> to vector<8x8x32xf32>
    %c0_21 = arith.constant 0 : index
    %c0_22 = arith.constant 0 : index
    %32 = vector.load %arg7[%c0_21, %c0_22] : memref<64x32xf32, #tpu.memory_space<vmem>>, vector<64x32xf32>
    %cst_23 = arith.constant dense<0.000000e+00> : vector<8x32xf32>
    %33 = tpu.matmul %26, %32, %cst_23 {dimension_numbers = #tpu.dot_dimension_numbers<[1], [0], [0], [1], [0, 0, 1, 1], [], []>} : vector<8x64xf32>, vector<64x32xf32>, vector<8x32xf32> -> vector<8x32xf32>
    %34 = vector.shape_cast %33 : vector<8x32xf32> to vector<8x1x32xf32>
    %35 = vector.broadcast %34 : vector<8x1x32xf32> to vector<8x8x32xf32>
    %36 = arith.addf %31, %35 : vector<8x8x32xf32>
    %37 = vector.shape_cast %1 : vector<1x32xf32> to vector<1x1x32xf32>
    %38 = vector.broadcast %37 : vector<1x1x32xf32> to vector<8x8x32xf32>
    %39 = arith.mulf %36, %38 : vector<8x8x32xf32>
    %cst_24 = arith.constant dense<0.000000e+00> : vector<8x8xf32>
    %40 = vector.multi_reduction <add>, %39, %cst_24 [2] : vector<8x8x32xf32> to vector<8x8xf32>
    %41 = vector.shape_cast %40 : vector<8x8xf32> to vector<8x8x1xf32>
    %cst_25 = arith.constant dense<0xFF800000> : vector<8x1xf32>
    %42 = vector.multi_reduction <maximumf>, %41, %cst_25 [1] : vector<8x8x1xf32> to vector<8x1xf32>
    %43 = vector.shape_cast %42 : vector<8x1xf32> to vector<8x1x1xf32>
    %44 = vector.broadcast %43 : vector<8x1x1xf32> to vector<8x8x1xf32>
    %45 = arith.subf %41, %44 : vector<8x8x1xf32>
    %46 = math.exp %45 : vector<8x8x1xf32>
    %cst_26 = arith.constant dense<0.000000e+00> : vector<8x1xf32>
    %47 = vector.multi_reduction <add>, %46, %cst_26 [1] : vector<8x8x1xf32> to vector<8x1xf32>
    %48 = vector.shape_cast %47 : vector<8x1xf32> to vector<8x1x1xf32>
    %49 = tpu.reciprocal %48 : vector<8x1x1xf32> -> vector<8x1x1xf32>
    %50 = vector.broadcast %49 : vector<8x1x1xf32> to vector<8x8x1xf32>
    %51 = arith.mulf %46, %50 : vector<8x8x1xf32>
    %c0_27 = arith.constant 0 : index
    %c0_28 = arith.constant 0 : index
    %c0_29 = arith.constant 0 : index
    %52 = vector.load %arg2[%c0_27, %c0_28, %c0_29] : memref<8x8x64xf32, #tpu.memory_space<vmem>>, vector<8x8x64xf32>
    %53 = vector.broadcast %51 : vector<8x8x1xf32> to vector<8x8x64xf32>
    %54 = arith.mulf %53, %52 : vector<8x8x64xf32>
    %cst_30 = arith.constant dense<0.000000e+00> : vector<8x64xf32>
    %55 = vector.multi_reduction <add>, %54, %cst_30 [1] : vector<8x8x64xf32> to vector<8x64xf32>
    %c0_31 = arith.constant 0 : index
    %c0_32 = arith.constant 0 : index
    %56 = vector.load %arg9[%c0_31, %c0_32] : memref<64x64xf32, #tpu.memory_space<vmem>>, vector<64x64xf32>
    %cst_33 = arith.constant dense<0.000000e+00> : vector<8x64xf32>
    %57 = tpu.matmul %55, %56, %cst_33 {dimension_numbers = #tpu.dot_dimension_numbers<[1], [0], [0], [1], [0, 0, 1, 1], [], []>} : vector<8x64xf32>, vector<64x64xf32>, vector<8x64xf32> -> vector<8x64xf32>
    %cst_34 = arith.constant 0.000000e+00 : f32
    %58 = vector.broadcast %cst_34 : f32 to vector<8x64xf32>
    %59 = arith.cmpf ogt, %57, %58 : vector<8x64xf32>
    %cst_35 = arith.constant 0.00999999977 : f32
    %60 = vector.broadcast %cst_35 : f32 to vector<8x64xf32>
    %61 = arith.mulf %60, %57 : vector<8x64xf32>
    %62 = arith.select %59, %57, %61 : vector<8x64xi1>, vector<8x64xf32>
    %c0_36 = arith.constant 0 : index
    %c0_37 = arith.constant 0 : index
    %c0_38 = arith.constant 0 : index
    %63 = vector.load %arg3[%c0_36, %c0_37, %c0_38] : memref<8x4x64xf32, #tpu.memory_space<vmem>>, vector<8x4x64xf32>
    %64 = vector.shape_cast %62 : vector<8x64xf32> to vector<8x1x64xf32>
    %65 = vector.broadcast %64 : vector<8x1x64xf32> to vector<8x4x64xf32>
    %66 = arith.mulf %63, %65 : vector<8x4x64xf32>
    %cst_39 = arith.constant dense<0.000000e+00> : vector<8x4xf32>
    %67 = vector.multi_reduction <add>, %66, %cst_39 [2] : vector<8x4x64xf32> to vector<8x4xf32>
    %cst_40 = arith.constant dense<0xFF800000> : vector<8xf32>
    %68 = vector.multi_reduction <maximumf>, %67, %cst_40 [1] : vector<8x4xf32> to vector<8xf32>
    %69 = vector.shape_cast %68 : vector<8xf32> to vector<8x1xf32>
    %70 = vector.broadcast %69 : vector<8x1xf32> to vector<8x4xf32>
    %71 = arith.subf %67, %70 : vector<8x4xf32>
    %72 = math.exp %71 : vector<8x4xf32>
    %cst_41 = arith.constant dense<0.000000e+00> : vector<8xf32>
    %73 = vector.multi_reduction <add>, %72, %cst_41 [1] : vector<8x4xf32> to vector<8xf32>
    %74 = vector.shape_cast %73 : vector<8xf32> to vector<8x1xf32>
    %75 = tpu.reciprocal %74 : vector<8x1xf32> -> vector<8x1xf32>
    %76 = vector.broadcast %75 : vector<8x1xf32> to vector<8x4xf32>
    %77 = arith.mulf %72, %76 : vector<8x4xf32>
    %78 = tpu.iota {dimensions = array<i32: 0>} : vector<4x4xi32>
    %79 = tpu.iota {dimensions = array<i32: 1>} : vector<4x4xi32>
    %80 = arith.cmpi eq, %78, %79 : vector<4x4xi32>
    %81 = arith.extui %80 : vector<4x4xi1> to vector<4x4xi32>
    %82 = arith.sitofp %81 : vector<4x4xi32> to vector<4x4xf32>
    %cst_42 = arith.constant dense<0.000000e+00> : vector<4x8xf32>
    %83 = tpu.matmul %82, %77, %cst_42 {dimension_numbers = #tpu.dot_dimension_numbers<[1], [1], [0], [0], [0, 0, 1, 0], [], []>} : vector<4x4xf32>, vector<8x4xf32>, vector<4x8xf32> -> vector<4x8xf32>
    %84 = vector.shape_cast %83 : vector<4x8xf32> to vector<1x4x8xf32>
    %c0_43 = arith.constant 0 : index
    %c0_44 = arith.constant 0 : index
    %c0_45 = arith.constant 0 : index
    %85 = vector.load %arg10[%c0_43, %c0_44, %c0_45] : memref<1x4x8xf32, #tpu.memory_space<vmem>>, vector<1x4x8xf32>
    tpu.vector_store %arg10[%c0_43, %c0_44, %c0_45], %84 {strides = array<i32>} : memref<1x4x8xf32, #tpu.memory_space<vmem>>, vector<1x4x8xf32>,
    return
  }
  func.func @transform_0(%arg0: i32) -> (i32, i32, i32) {
    %c0_i32 = arith.constant 0 : i32
    %c0_i32_0 = arith.constant 0 : i32
    %c0_i32_1 = arith.constant 0 : i32
    return %arg0, %c0_i32, %c0_i32_0 : i32, i32, i32
  }
  func.func @transform_1(%arg0: i32) -> (i32, i32, i32) {
    %c0_i32 = arith.constant 0 : i32
    %c0_i32_0 = arith.constant 0 : i32
    %c0_i32_1 = arith.constant 0 : i32
    return %arg0, %c0_i32, %c0_i32_0 : i32, i32, i32
  }
  func.func @transform_2(%arg0: i32) -> (i32, i32, i32) {
    %c0_i32 = arith.constant 0 : i32
    %c0_i32_0 = arith.constant 0 : i32
    %c0_i32_1 = arith.constant 0 : i32
    return %arg0, %c0_i32, %c0_i32_0 : i32, i32, i32
  }
  func.func @transform_3(%arg0: i32) -> (i32, i32) {
    %c0_i32 = arith.constant 0 : i32
    %c0_i32_0 = arith.constant 0 : i32
    %c0_i32_1 = arith.constant 0 : i32
    return %c0_i32, %c0_i32_0 : i32, i32
  }
  func.func @transform_4(%arg0: i32) -> (i32, i32) {
    %c0_i32 = arith.constant 0 : i32
    %c0_i32_0 = arith.constant 0 : i32
    %c0_i32_1 = arith.constant 0 : i32
    return %c0_i32, %c0_i32_0 : i32, i32
  }
  func.func @transform_5(%arg0: i32) -> (i32, i32) {
    %c0_i32 = arith.constant 0 : i32
    %c0_i32_0 = arith.constant 0 : i32
    %c0_i32_1 = arith.constant 0 : i32
    return %c0_i32, %c0_i32_0 : i32, i32
  }
  func.func @transform_6(%arg0: i32) -> (i32, i32) {
    %c0_i32 = arith.constant 0 : i32
    %c0_i32_0 = arith.constant 0 : i32
    %c0_i32_1 = arith.constant 0 : i32
    return %c0_i32, %c0_i32_0 : i32, i32
  }
  func.func @transform_7(%arg0: i32) -> (i32, i32) {
    %c0_i32 = arith.constant 0 : i32
    %c0_i32_0 = arith.constant 0 : i32
    %c0_i32_1 = arith.constant 0 : i32
    return %c0_i32, %c0_i32_0 : i32, i32
  }
  func.func @transform_8(%arg0: i32) -> (i32, i32) {
    %c0_i32 = arith.constant 0 : i32
    %c0_i32_0 = arith.constant 0 : i32
    %c0_i32_1 = arith.constant 0 : i32
    return %c0_i32, %c0_i32_0 : i32, i32
  }
  func.func @transform_9(%arg0: i32) -> (i32, i32, i32) {
    %c0_i32 = arith.constant 0 : i32
    %c0_i32_0 = arith.constant 0 : i32
    %c0_i32_1 = arith.constant 0 : i32
    return %arg0, %c0_i32, %c0_i32_0 : i32, i32, i32
  }
}

</mosaic_0001>

<llo_original>
// kernel: tpu_custom_call.1
$region0: #{tpu_custom_call.1}
  #allocation0 [shape = 'u32[]', space=smem, size = 0x4, offset = 0x4, fixed_abs, tag = 'smem constant byte address 0x4 - core index']
  #allocation1 [shape = 'u32[144,128]{1,0:T(1,128)}', space=vmem, size = 0x12000, scoped, tag = 'internal scratch']
  %s0 = inlined_call_operand.vmem [shape: f32[8,8,64], index: 0, kind: input, shape index: {}]
  %s1 = inlined_call_operand.vmem [shape: f32[8,8,64], index: 1, kind: input, shape index: {}]
  %s2 = inlined_call_operand.vmem [shape: f32[8,4,64], index: 2, kind: input, shape index: {}]
  %s3 = inlined_call_operand.vmem [shape: f32[64,32], index: 3, kind: input, shape index: {}]
  %s4 = inlined_call_operand.vmem [shape: f32[1,32], index: 4, kind: input, shape index: {}]
  %s5 = inlined_call_operand.vmem [shape: f32[64,32], index: 5, kind: input, shape index: {}]
  %s6 = inlined_call_operand.vmem [shape: f32[64,32], index: 6, kind: input, shape index: {}]
  %s7 = inlined_call_operand.vmem [shape: f32[1,32], index: 7, kind: input, shape index: {}]
  %s8 = inlined_call_operand.vmem [shape: f32[64,64], index: 8, kind: input, shape index: {}]
  %s9 = inlined_call_operand.hbm [shape: f32[1,4,8], index: 9, kind: output, shape index: {}]
  %s10 = sld [smem:[#allocation0]]
  $region46: #{tpu_custom_call.1} parent=0
    _
  %s12 = ssub.s32 1, %s10
  %s13 = scalar_select 0, %s12, %s10
  $region1: #{tpu_custom_call.1} parent=0
    #allocation2 [shape = 'u8[2048]{0}', space=vmem, size = 0x800, scoped, tag = 'output window, operand 0, single buffered']
    #allocation3 [shape = 's32[1]{0}', space=sflag, size = 0x4, scoped, tag = 'scoped memory for tpu_custom_call.1']
    %14 = vsyncpa [#allocation3], 0
    // Predicated region
    $region2: #{tpu_custom_call.1} parent=1 // pred_check
      _
    $region3: #{tpu_custom_call.1} parent=1 // pred_check_branch
      %16 = sbr.rel (0) target = $region5
    $region4: #{tpu_custom_call.1} parent=1 // pred_region
      _
    $region5: #{tpu_custom_call.1} parent=1 // pred_fallthru
      _
    // Predicated region
    $region6: #{tpu_custom_call.1} parent=1 // pred_check
      _
    $region7: #{tpu_custom_call.1} parent=1 // pred_check_branch
      %18 = sbr.rel (0) target = $region9
    $region8: #{tpu_custom_call.1} parent=1 // pred_region
      _
    $region9: #{tpu_custom_call.1} parent=1 // pred_fallthru
      _
    // Predicated region
    $region10: #{tpu_custom_call.1} parent=1 // pred_check
      _
    $region11: #{tpu_custom_call.1} parent=1 // pred_check_branch
      %20 = sbr.rel (0) target = $region13
    $region12: #{tpu_custom_call.1} parent=1 // pred_region
      _
    $region13: #{tpu_custom_call.1} parent=1 // pred_fallthru
      _
    // Predicated region
    $region14: #{tpu_custom_call.1} parent=1 // pred_check
      _
    $region15: #{tpu_custom_call.1} parent=1 // pred_check_branch
      %22 = sbr.rel (0) target = $region17
    $region16: #{tpu_custom_call.1} parent=1 // pred_region
      _
    $region17: #{tpu_custom_call.1} parent=1 // pred_fallthru
      _
    // Predicated region
    $region18: #{tpu_custom_call.1} parent=1 // pred_check
      _
    $region19: #{tpu_custom_call.1} parent=1 // pred_check_branch
      %24 = sbr.rel (0) target = $region21
    $region20: #{tpu_custom_call.1} parent=1 // pred_region
      _
    $region21: #{tpu_custom_call.1} parent=1 // pred_fallthru
      _
    // Predicated region
    $region22: #{tpu_custom_call.1} parent=1 // pred_check
      _
    $region23: #{tpu_custom_call.1} parent=1 // pred_check_branch
      %26 = sbr.rel (0) target = $region25
    $region24: #{tpu_custom_call.1} parent=1 // pred_region
      _
    $region25: #{tpu_custom_call.1} parent=1 // pred_fallthru
      _
    // Predicated region
    $region26: #{tpu_custom_call.1} parent=1 // pred_check
      _
    $region27: #{tpu_custom_call.1} parent=1 // pred_check_branch
      %28 = sbr.rel (0) target = $region29
    $region28: #{tpu_custom_call.1} parent=1 // pred_region
      _
    $region29: #{tpu_custom_call.1} parent=1 // pred_fallthru
      _
    // Predicated region
    $region30: #{tpu_custom_call.1} parent=1 // pred_check
      _
    $region31: #{tpu_custom_call.1} parent=1 // pred_check_branch
      %30 = sbr.rel (0) target = $region33
    $region32: #{tpu_custom_call.1} parent=1 // pred_region
      _
    $region33: #{tpu_custom_call.1} parent=1 // pred_fallthru
      _
    // Predicated region
    $region34: #{tpu_custom_call.1} parent=1 // pred_check
      _
    $region35: #{tpu_custom_call.1} parent=1 // pred_check_branch
      %32 = sbr.rel (0) target = $region37
    $region36: #{tpu_custom_call.1} parent=1 // pred_region
      _
    $region37: #{tpu_custom_call.1} parent=1 // pred_fallthru
      _
    %v33 = vld [vmem:[%s4] sm:$0x1]
    %v34 = vld [vmem:[%s7] sm:$0x1]
    %v35 = vld [vmem:[%s0] sm:$0xff]
    %v36 = vld [vmem:[%s0 + $0x8] sm:$0xff]
    %v37 = vld [vmem:[%s0 + $0x10] sm:$0xff]
    %v38 = vld [vmem:[%s0 + $0x18] sm:$0xff]
    %v39 = vld [vmem:[%s0 + $0x20] sm:$0xff]
    %v40 = vld [vmem:[%s0 + $0x28] sm:$0xff]
    %v41 = vld [vmem:[%s0 + $0x30] sm:$0xff]
    %v42 = vld [vmem:[%s0 + $0x38] sm:$0xff]
    %v43 = vld [vmem:[%s3] sm:$0xff]
    %v44 = vld [vmem:[%s3 + $0x8] sm:$0xff]
    %v45 = vld [vmem:[%s3 + $0x10] sm:$0xff]
    %v46 = vld [vmem:[%s3 + $0x18] sm:$0xff]
    %v47 = vld [vmem:[%s3 + $0x20] sm:$0xff]
    %v48 = vld [vmem:[%s3 + $0x28] sm:$0xff]
    %v49 = vld [vmem:[%s3 + $0x30] sm:$0xff]
    %v50 = vld [vmem:[%s3 + $0x38] sm:$0xff]
    %vm51 = vcmask 523264
    %v53 = vsel %vm51, %v35, 0
    %v56 = vsel %vm51, %v36, 0
    %v59 = vsel %vm51, %v37, 0
    %v62 = vsel %vm51, %v38, 0
    %v65 = vsel %vm51, %v39, 0
    %v68 = vsel %vm51, %v40, 0
    %v71 = vsel %vm51, %v41, 0
    %v74 = vsel %vm51, %v42, 0
    %76 = vmatprep.subr.mxu0 0.0
    %77 = vmatpush1.msra.mxu0 %v43
    %78 = vmatprep.subr.mxu0 0.0
    %79 = vmatpush1.msra.mxu0 %v44
    %80 = vmatprep.subr.mxu0 0.0
    %81 = vmatpush1.msra.mxu0 %v45
    %82 = vmatprep.subr.mxu0 0.0
    %83 = vmatpush1.msra.mxu0 %v46
    %84 = vmatprep.subr.mxu0 0.0
    %85 = vmatpush1.msra.mxu0 %v47
    %86 = vmatprep.subr.mxu0 0.0
    %87 = vmatpush1.msra.mxu0 %v48
    %88 = vmatprep.subr.mxu0 0.0
    %89 = vmatpush1.msra.mxu0 %v49
    %90 = vmatprep.subr.mxu0 0.0
    %91 = vmatpush1.msra.mxu0 %v50
    %92 = vmatprep.subr.mxu0 0.0
    %93 = vmatpush1.msra.mxu0 0.0
    %94 = vmatprep.subr.mxu0 0.0
    %95 = vmatpush1.msra.mxu0 0.0
    %96 = vmatprep.subr.mxu0 0.0
    %97 = vmatpush1.msra.mxu0 0.0
    %98 = vmatprep.subr.mxu0 0.0
    %99 = vmatpush1.msra.mxu0 0.0
    %100 = vmatprep.subr.mxu0 0.0
    %101 = vmatpush1.msra.mxu0 0.0
    %102 = vmatprep.subr.mxu0 0.0
    %103 = vmatpush1.msra.mxu0 0.0
    %104 = vmatprep.subr.mxu0 0.0
    %105 = vmatpush1.msra.mxu0 0.0
    %106 = vmatprep.subr.mxu0 0.0
    %107 = vmatpush1.msra.mxu0 0.0
    %108 = vmatprep.subr.mxu0 0.0
    %109 = vmatpush1.msra.mxu0 0.0
    %110 = vmatprep.subr.mxu0 0.0
    %111 = vmatpush1.msra.mxu0 0.0
    %112 = vmatprep.subr.mxu0 0.0
    %113 = vmatpush1.msra.mxu0 0.0
    %114 = vmatprep.subr.mxu0 0.0
    %115 = vmatpush1.msra.mxu0 0.0
    %116 = vmatprep.subr.mxu0 0.0
    %117 = vmatpush1.msra.mxu0 0.0
    %118 = vmatprep.subr.mxu0 0.0
    %119 = vmatpush1.msra.mxu0 0.0
    %120 = vmatprep.subr.mxu0 0.0
    %121 = vmatpush1.msra.mxu0 0.0
    %122 = vmatprep.subr.mxu0 0.0
    %123 = vmatpush1.msra.mxu0 0.0
    %124 = vmatprep.subr.mxu0 0.0
    %125 = vmatpush1.msra.mxu0 0.0
    %126 = vmatprep.subr.mxu0 0.0
    %127 = vmatpush1.msra.mxu0 0.0
    %128 = vmatprep.subr.mxu0 0.0
    %129 = vmatpush1.msra.mxu0 0.0
    %130 = vmatprep.subr.mxu0 0.0
    %131 = vmatpush1.msra.mxu0 0.0
    %132 = vmatprep.subr.mxu0 0.0
    %133 = vmatpush1.msra.mxu0 0.0
    %134 = vmatprep.subr.mxu0 0.0
    %135 = vmatpush1.msra.mxu0 0.0
    %136 = vmatprep.subr.mxu0 0.0
    %137 = vmatpush1.msra.mxu0 0.0
    %138 = vmatprep.subr.mxu0 0.0
    %139 = vmatpush1.msra.mxu0 0.0
    %140 = vmatprep.mubr.f32.mxu0 0.0
    %141 = vmatmul.mubr.f32.gmra.mrb[0].mxu0 %v53
    %v142 = vpop.f32.mrb[0].mxu0
    %v143 = vadd.f32 0.0, %v142
    %v144 = vpop.f32.mrb[0].mxu0
    %145 = vmatprep.mubr.f32.mxu0 0.0
    %146 = vmatmul.mubr.f32.gmra.mrb[0].mxu0 %v56
    %v147 = vpop.f32.mrb[0].mxu0
    %v148 = vadd.f32 0.0, %v147
    %v149 = vpop.f32.mrb[0].mxu0
    %150 = vmatprep.mubr.f32.mxu0 0.0
    %151 = vmatmul.mubr.f32.gmra.mrb[0].mxu0 %v59
    %v152 = vpop.f32.mrb[0].mxu0
    %v153 = vadd.f32 0.0, %v152
    %v154 = vpop.f32.mrb[0].mxu0
    %155 = vmatprep.mubr.f32.mxu0 0.0
    %156 = vmatmul.mubr.f32.gmra.mrb[0].mxu0 %v62
    %v157 = vpop.f32.mrb[0].mxu0
    %v158 = vadd.f32 0.0, %v157
    %v159 = vpop.f32.mrb[0].mxu0
    %160 = vmatprep.mubr.f32.mxu0 0.0
    %161 = vmatmul.mubr.f32.gmra.mrb[0].mxu0 %v65
    %v162 = vpop.f32.mrb[0].mxu0
    %v163 = vadd.f32 0.0, %v162
    %v164 = vpop.f32.mrb[0].mxu0
    %165 = vmatprep.mubr.f32.mxu0 0.0
    %166 = vmatmul.mubr.f32.gmra.mrb[0].mxu0 %v68
    %v167 = vpop.f32.mrb[0].mxu0
    %v168 = vadd.f32 0.0, %v167
    %v169 = vpop.f32.mrb[0].mxu0
    %170 = vmatprep.mubr.f32.mxu0 0.0
    %171 = vmatmul.mubr.f32.gmra.mrb[0].mxu0 %v71
    %v172 = vpop.f32.mrb[0].mxu0
    %v173 = vadd.f32 0.0, %v172
    %v174 = vpop.f32.mrb[0].mxu0
    %175 = vmatprep.mubr.f32.mxu0 0.0
    %176 = vmatmul.mubr.f32.gmra.mrb[0].mxu0 %v74
    %v177 = vpop.f32.mrb[0].mxu0
    %v178 = vadd.f32 0.0, %v177
    %v179 = vpop.f32.mrb[0].mxu0
    %180 = vdwg.mxu0
    %v181 = vtanh.pop %v143
    %v182 = vtanh.pop %v148
    %v183 = vtanh.pop %v153
    %v184 = vtanh.pop %v158
    %v185 = vtanh.pop %v163
    %v186 = vtanh.pop %v168
    %v187 = vtanh.pop %v173
    %v188 = vtanh.pop %v178
    %v190 = vlaneseq
    %v191 = vshrl.u32 %v190, 7
    %v192 = vsub.s32 0, %v191
    %v193 = vrot.slane %v33, %v192
    %v195 = vmul.f32 %v181, %v193
    %v196 = vmul.f32 %v182, %v193
    %v197 = vmul.f32 %v183, %v193
    %v198 = vmul.f32 %v184, %v193
    %v199 = vmul.f32 %v185, %v193
    %v200 = vmul.f32 %v186, %v193
    %v201 = vmul.f32 %v187, %v193
    %v202 = vmul.f32 %v188, %v193
    %vm203 = vcmask 261120
    %v204 = vsel %vm203, %v195, 0.0
    %205 = vadd.xlane.f32.xlu0 %v204
    %v206 = vpop.xlane.xlu0 %205
    %v207 = vsel %vm203, %v196, 0.0
    %208 = vadd.xlane.f32.xlu0 %v207
    %v209 = vpop.xlane.xlu0 %208
    %v210 = vsel %vm203, %v197, 0.0
    %211 = vadd.xlane.f32.xlu0 %v210
    %v212 = vpop.xlane.xlu0 %211
    %v213 = vsel %vm203, %v198, 0.0
    %214 = vadd.xlane.f32.xlu0 %v213
    %v215 = vpop.xlane.xlu0 %214
    %v216 = vsel %vm203, %v199, 0.0
    %217 = vadd.xlane.f32.xlu0 %v216
    %v218 = vpop.xlane.xlu0 %217
    %v219 = vsel %vm203, %v200, 0.0
    %220 = vadd.xlane.f32.xlu0 %v219
    %v221 = vpop.xlane.xlu0 %220
    %v222 = vsel %vm203, %v201, 0.0
    %223 = vadd.xlane.f32.xlu0 %v222
    %v224 = vpop.xlane.xlu0 %223
    %v225 = vsel %vm203, %v202, 0.0
    %226 = vadd.xlane.f32.xlu0 %v225
    %v227 = vpop.xlane.xlu0 %226
    %v228 = vrot.slane %v206, 4
    %v229 = vmax.f32 %v206, %v228
    %v230 = vrot.slane %v229, 2
    %v231 = vmax.f32 %v229, %v230
    %v232 = vrot.slane %v231, 1
    %v233 = vmax.f32 %v231, %v232
    %v234 = vrot.slane %v209, 4
    %v235 = vmax.f32 %v209, %v234
    %v236 = vrot.slane %v235, 2
    %v237 = vmax.f32 %v235, %v236
    %v238 = vrot.slane %v237, 1
    %v239 = vmax.f32 %v237, %v238
    %v240 = vrot.slane %v212, 4
    %v241 = vmax.f32 %v212, %v240
    %v242 = vrot.slane %v241, 2
    %v243 = vmax.f32 %v241, %v242
    %v244 = vrot.slane %v243, 1
    %v245 = vmax.f32 %v243, %v244
    %v246 = vrot.slane %v215, 4
    %v247 = vmax.f32 %v215, %v246
    %v248 = vrot.slane %v247, 2
    %v249 = vmax.f32 %v247, %v248
    %v250 = vrot.slane %v249, 1
    %v251 = vmax.f32 %v249, %v250
    %v252 = vrot.slane %v218, 4
    %v253 = vmax.f32 %v218, %v252
    %v254 = vrot.slane %v253, 2
    %v255 = vmax.f32 %v253, %v254
    %v256 = vrot.slane %v255, 1
    %v257 = vmax.f32 %v255, %v256
    %v258 = vrot.slane %v221, 4
    %v259 = vmax.f32 %v221, %v258
    %v260 = vrot.slane %v259, 2
    %v261 = vmax.f32 %v259, %v260
    %v262 = vrot.slane %v261, 1
    %v263 = vmax.f32 %v261, %v262
    %v264 = vrot.slane %v224, 4
    %v265 = vmax.f32 %v224, %v264
    %v266 = vrot.slane %v265, 2
    %v267 = vmax.f32 %v265, %v266
    %v268 = vrot.slane %v267, 1
    %v269 = vmax.f32 %v267, %v268
    %v270 = vrot.slane %v227, 4
    %v271 = vmax.f32 %v227, %v270
    %v272 = vrot.slane %v271, 2
    %v273 = vmax.f32 %v271, %v272
    %v274 = vrot.slane %v273, 1
    %v275 = vmax.f32 %v273, %v274
    %v276 = vsub.f32 %v206, %v233
    %v277 = vsub.f32 %v209, %v239
    %v278 = vsub.f32 %v212, %v245
    %v279 = vsub.f32 %v215, %v251
    %v280 = vsub.f32 %v218, %v257
    %v281 = vsub.f32 %v221, %v263
    %v282 = vsub.f32 %v224, %v269
    %v283 = vsub.f32 %v227, %v275
    %v284 = vmul.f32 %v276, 1.442695
    %v285 = vpow.pop %v284
    %v286 = vmul.f32 %v277, 1.442695
    %v287 = vpow.pop %v286
    %v288 = vmul.f32 %v278, 1.442695
    %v289 = vpow.pop %v288
    %v290 = vmul.f32 %v279, 1.442695
    %v291 = vpow.pop %v290
    %v292 = vmul.f32 %v280, 1.442695
    %v293 = vpow.pop %v292
    %v294 = vmul.f32 %v281, 1.442695
    %v295 = vpow.pop %v294
    %v296 = vmul.f32 %v282, 1.442695
    %v297 = vpow.pop %v296
    %v298 = vmul.f32 %v283, 1.442695
    %v299 = vpow.pop %v298
    %v300 = vrot.slane %v285, 4
    %v301 = vadd.f32 %v285, %v300
    %v302 = vrot.slane %v301, 2
    %v303 = vadd.f32 %v301, %v302
    %v304 = vrot.slane %v303, 1
    %v305 = vadd.f32 %v303, %v304
    %v306 = vrot.slane %v287, 4
    %v307 = vadd.f32 %v287, %v306
    %v308 = vrot.slane %v307, 2
    %v309 = vadd.f32 %v307, %v308
    %v310 = vrot.slane %v309, 1
    %v311 = vadd.f32 %v309, %v310
    %v312 = vrot.slane %v289, 4
    %v313 = vadd.f32 %v289, %v312
    %v314 = vrot.slane %v313, 2
    %v315 = vadd.f32 %v313, %v314
    %v316 = vrot.slane %v315, 1
    %v317 = vadd.f32 %v315, %v316
    %v318 = vrot.slane %v291, 4
    %v319 = vadd.f32 %v291, %v318
    %v320 = vrot.slane %v319, 2
    %v321 = vadd.f32 %v319, %v320
    %v322 = vrot.slane %v321, 1
    %v323 = vadd.f32 %v321, %v322
    %v324 = vrot.slane %v293, 4
    %v325 = vadd.f32 %v293, %v324
    %v326 = vrot.slane %v325, 2
    %v327 = vadd.f32 %v325, %v326
    %v328 = vrot.slane %v327, 1
    %v329 = vadd.f32 %v327, %v328
    %v330 = vrot.slane %v295, 4
    %v331 = vadd.f32 %v295, %v330
    %v332 = vrot.slane %v331, 2
    %v333 = vadd.f32 %v331, %v332
    %v334 = vrot.slane %v333, 1
    %v335 = vadd.f32 %v333, %v334
    %v336 = vrot.slane %v297, 4
    %v337 = vadd.f32 %v297, %v336
    %v338 = vrot.slane %v337, 2
    %v339 = vadd.f32 %v337, %v338
    %v340 = vrot.slane %v339, 1
    %v341 = vadd.f32 %v339, %v340
    %v342 = vrot.slane %v299, 4
    %v343 = vadd.f32 %v299, %v342
    %v344 = vrot.slane %v343, 2
    %v345 = vadd.f32 %v343, %v344
    %v346 = vrot.slane %v345, 1
    %v347 = vadd.f32 %v345, %v346
    %v348 = vrcp.pop %v305
    %v349 = vrcp.pop %v311
    %v350 = vrcp.pop %v317
    %v351 = vrcp.pop %v323
    %v352 = vrcp.pop %v329
    %v353 = vrcp.pop %v335
    %v354 = vrcp.pop %v341
    %v355 = vrcp.pop %v347
    %v356 = vmul.f32 %v285, %v348
    %v357 = vmul.f32 %v287, %v349
    %v358 = vmul.f32 %v289, %v350
    %v359 = vmul.f32 %v291, %v351
    %v360 = vmul.f32 %v293, %v352
    %v361 = vmul.f32 %v295, %v353
    %v362 = vmul.f32 %v297, %v354
    %v363 = vmul.f32 %v299, %v355
    %v364 = vmul.f32 %v356, %v35
    %v365 = vmul.f32 %v357, %v36
    %v366 = vmul.f32 %v358, %v37
    %v367 = vmul.f32 %v359, %v38
    %v368 = vmul.f32 %v360, %v39
    %v369 = vmul.f32 %v361, %v40
    %v370 = vmul.f32 %v362, %v41
    %v371 = vmul.f32 %v363, %v42
    %v372 = vsel %vm51, %v364, 0.0
    %v373 = vrot.slane %v372, 4
    %v374 = vadd.f32 %v372, %v373
    %v375 = vrot.slane %v374, 2
    %v376 = vadd.f32 %v374, %v375
    %v377 = vrot.slane %v376, 1
    %v378 = vadd.f32 %v376, %v377
    %v379 = vsel %vm51, %v365, 0.0
    %v380 = vrot.slane %v379, 4
    %v381 = vadd.f32 %v379, %v380
    %v382 = vrot.slane %v381, 2
    %v383 = vadd.f32 %v381, %v382
    %v384 = vrot.slane %v383, 1
    %v385 = vadd.f32 %v383, %v384
    %v386 = vsel %vm51, %v366, 0.0
    %v387 = vrot.slane %v386, 4
    %v388 = vadd.f32 %v386, %v387
    %v389 = vrot.slane %v388, 2
    %v390 = vadd.f32 %v388, %v389
    %v391 = vrot.slane %v390, 1
    %v392 = vadd.f32 %v390, %v391
    %v393 = vsel %vm51, %v367, 0.0
    %v394 = vrot.slane %v393, 4
    %v395 = vadd.f32 %v393, %v394
    %v396 = vrot.slane %v395, 2
    %v397 = vadd.f32 %v395, %v396
    %v398 = vrot.slane %v397, 1
    %v399 = vadd.f32 %v397, %v398
    %v400 = vsel %vm51, %v368, 0.0
    %v401 = vrot.slane %v400, 4
    %v402 = vadd.f32 %v400, %v401
    %v403 = vrot.slane %v402, 2
    %v404 = vadd.f32 %v402, %v403
    %v405 = vrot.slane %v404, 1
    %v406 = vadd.f32 %v404, %v405
    %v407 = vsel %vm51, %v369, 0.0
    %v408 = vrot.slane %v407, 4
    %v409 = vadd.f32 %v407, %v408
    %v410 = vrot.slane %v409, 2
    %v411 = vadd.f32 %v409, %v410
    %v412 = vrot.slane %v411, 1
    %v413 = vadd.f32 %v411, %v412
    %v414 = vsel %vm51, %v370, 0.0
    %v415 = vrot.slane %v414, 4
    %v416 = vadd.f32 %v414, %v415
    %v417 = vrot.slane %v416, 2
    %v418 = vadd.f32 %v416, %v417
    %v419 = vrot.slane %v418, 1
    %v420 = vadd.f32 %v418, %v419
    %v421 = vsel %vm51, %v371, 0.0
    %v422 = vrot.slane %v421, 4
    %v423 = vadd.f32 %v421, %v422
    %v424 = vrot.slane %v423, 2
    %v425 = vadd.f32 %v423, %v424
    %v426 = vrot.slane %v425, 1
    %v427 = vadd.f32 %v425, %v426
    %v428 = vld [vmem:[%s1] sm:$0xff]
    %v429 = vld [vmem:[%s1 + $0x8] sm:$0xff]
    %v430 = vld [vmem:[%s1 + $0x10] sm:$0xff]
    %v431 = vld [vmem:[%s1 + $0x18] sm:$0xff]
    %v432 = vld [vmem:[%s1 + $0x20] sm:$0xff]
    %v433 = vld [vmem:[%s1 + $0x28] sm:$0xff]
    %v434 = vld [vmem:[%s1 + $0x30] sm:$0xff]
    %v435 = vld [vmem:[%s1 + $0x38] sm:$0xff]
    %v436 = vld [vmem:[%s5] sm:$0xff]
    %v437 = vld [vmem:[%s5 + $0x8] sm:$0xff]
    %v438 = vld [vmem:[%s5 + $0x10] sm:$0xff]
    %v439 = vld [vmem:[%s5 + $0x18] sm:$0xff]
    %v440 = vld [vmem:[%s5 + $0x20] sm:$0xff]
    %v441 = vld [vmem:[%s5 + $0x28] sm:$0xff]
    %v442 = vld [vmem:[%s5 + $0x30] sm:$0xff]
    %v443 = vld [vmem:[%s5 + $0x38] sm:$0xff]
    %v445 = vsel %vm51, %v428, 0
    %v448 = vsel %vm51, %v429, 0
    %v451 = vsel %vm51, %v430, 0
    %v454 = vsel %vm51, %v431, 0
    %v457 = vsel %vm51, %v432, 0
    %v460 = vsel %vm51, %v433, 0
    %v463 = vsel %vm51, %v434, 0
    %v466 = vsel %vm51, %v435, 0
    %468 = vmatprep.subr.mxu0 0.0
    %469 = vmatpush1.msra.mxu0 %v436
    %470 = vmatprep.subr.mxu0 0.0
    %471 = vmatpush1.msra.mxu0 %v437
    %472 = vmatprep.subr.mxu0 0.0
    %473 = vmatpush1.msra.mxu0 %v438
    %474 = vmatprep.subr.mxu0 0.0
    %475 = vmatpush1.msra.mxu0 %v439
    %476 = vmatprep.subr.mxu0 0.0
    %477 = vmatpush1.msra.mxu0 %v440
    %478 = vmatprep.subr.mxu0 0.0
    %479 = vmatpush1.msra.mxu0 %v441
    %480 = vmatprep.subr.mxu0 0.0
    %481 = vmatpush1.msra.mxu0 %v442
    %482 = vmatprep.subr.mxu0 0.0
    %483 = vmatpush1.msra.mxu0 %v443
    %484 = vmatprep.subr.mxu0 0.0
    %485 = vmatpush1.msra.mxu0 0.0
    %486 = vmatprep.subr.mxu0 0.0
    %487 = vmatpush1.msra.mxu0 0.0
    %488 = vmatprep.subr.mxu0 0.0
    %489 = vmatpush1.msra.mxu0 0.0
    %490 = vmatprep.subr.mxu0 0.0
    %491 = vmatpush1.msra.mxu0 0.0
    %492 = vmatprep.subr.mxu0 0.0
    %493 = vmatpush1.msra.mxu0 0.0
    %494 = vmatprep.subr.mxu0 0.0
    %495 = vmatpush1.msra.mxu0 0.0
    %496 = vmatprep.subr.mxu0 0.0
    %497 = vmatpush1.msra.mxu0 0.0
    %498 = vmatprep.subr.mxu0 0.0
    %499 = vmatpush1.msra.mxu0 0.0
    %500 = vmatprep.subr.mxu0 0.0
    %501 = vmatpush1.msra.mxu0 0.0
    %502 = vmatprep.subr.mxu0 0.0
    %503 = vmatpush1.msra.mxu0 0.0
    %504 = vmatprep.subr.mxu0 0.0
    %505 = vmatpush1.msra.mxu0 0.0
    %506 = vmatprep.subr.mxu0 0.0
    %507 = vmatpush1.msra.mxu0 0.0
    %508 = vmatprep.subr.mxu0 0.0
    %509 = vmatpush1.msra.mxu0 0.0
    %510 = vmatprep.subr.mxu0 0.0
    %511 = vmatpush1.msra.mxu0 0.0
    %512 = vmatprep.subr.mxu0 0.0
    %513 = vmatpush1.msra.mxu0 0.0
    %514 = vmatprep.subr.mxu0 0.0
    %515 = vmatpush1.msra.mxu0 0.0
    %516 = vmatprep.subr.mxu0 0.0
    %517 = vmatpush1.msra.mxu0 0.0
    %518 = vmatprep.subr.mxu0 0.0
    %519 = vmatpush1.msra.mxu0 0.0
    %520 = vmatprep.subr.mxu0 0.0
    %521 = vmatpush1.msra.mxu0 0.0
    %522 = vmatprep.subr.mxu0 0.0
    %523 = vmatpush1.msra.mxu0 0.0
    %524 = vmatprep.subr.mxu0 0.0
    %525 = vmatpush1.msra.mxu0 0.0
    %526 = vmatprep.subr.mxu0 0.0
    %527 = vmatpush1.msra.mxu0 0.0
    %528 = vmatprep.subr.mxu0 0.0
    %529 = vmatpush1.msra.mxu0 0.0
    %530 = vmatprep.subr.mxu0 0.0
    %531 = vmatpush1.msra.mxu0 0.0
    %532 = vmatprep.mubr.f32.mxu0 0.0
    %533 = vmatmul.mubr.f32.gmra.mrb[0].mxu0 %v445
    %v534 = vpop.f32.mrb[0].mxu0
    %v535 = vadd.f32 0.0, %v534
    %v536 = vpop.f32.mrb[0].mxu0
    %537 = vmatprep.mubr.f32.mxu0 0.0
    %538 = vmatmul.mubr.f32.gmra.mrb[0].mxu0 %v448
    %v539 = vpop.f32.mrb[0].mxu0
    %v540 = vadd.f32 0.0, %v539
    %v541 = vpop.f32.mrb[0].mxu0
    %542 = vmatprep.mubr.f32.mxu0 0.0
    %543 = vmatmul.mubr.f32.gmra.mrb[0].mxu0 %v451
    %v544 = vpop.f32.mrb[0].mxu0
    %v545 = vadd.f32 0.0, %v544
    %v546 = vpop.f32.mrb[0].mxu0
    %547 = vmatprep.mubr.f32.mxu0 0.0
    %548 = vmatmul.mubr.f32.gmra.mrb[0].mxu0 %v454
    %v549 = vpop.f32.mrb[0].mxu0
    %v550 = vadd.f32 0.0, %v549
    %v551 = vpop.f32.mrb[0].mxu0
    %552 = vmatprep.mubr.f32.mxu0 0.0
    %553 = vmatmul.mubr.f32.gmra.mrb[0].mxu0 %v457
    %v554 = vpop.f32.mrb[0].mxu0
    %v555 = vadd.f32 0.0, %v554
    %v556 = vpop.f32.mrb[0].mxu0
    %557 = vmatprep.mubr.f32.mxu0 0.0
    %558 = vmatmul.mubr.f32.gmra.mrb[0].mxu0 %v460
    %v559 = vpop.f32.mrb[0].mxu0
    %v560 = vadd.f32 0.0, %v559
    %v561 = vpop.f32.mrb[0].mxu0
    %562 = vmatprep.mubr.f32.mxu0 0.0
    %563 = vmatmul.mubr.f32.gmra.mrb[0].mxu0 %v463
    %v564 = vpop.f32.mrb[0].mxu0
    %v565 = vadd.f32 0.0, %v564
    %v566 = vpop.f32.mrb[0].mxu0
    %567 = vmatprep.mubr.f32.mxu0 0.0
    %568 = vmatmul.mubr.f32.gmra.mrb[0].mxu0 %v466
    %v569 = vpop.f32.mrb[0].mxu0
    %v570 = vadd.f32 0.0, %v569
    %v571 = vpop.f32.mrb[0].mxu0
    %572 = vdwg.mxu0
    %v573 = vld [vmem:[%s6] sm:$0xff]
    %v574 = vld [vmem:[%s6 + $0x8] sm:$0xff]
    %v575 = vld [vmem:[%s6 + $0x10] sm:$0xff]
    %v576 = vld [vmem:[%s6 + $0x18] sm:$0xff]
    %v577 = vld [vmem:[%s6 + $0x20] sm:$0xff]
    %v578 = vld [vmem:[%s6 + $0x28] sm:$0xff]
    %v579 = vld [vmem:[%s6 + $0x30] sm:$0xff]
    %v580 = vld [vmem:[%s6 + $0x38] sm:$0xff]
    %vm589 = vcmask 1041409
    %v590 = vsel %vm589, %v385, %v378
    %vm591 = vcmask 1042434
    %v592 = vsel %vm591, %v392, %v590
    %vm593 = vcmask 1043459
    %v594 = vsel %vm593, %v399, %v592
    %vm595 = vcmask 1044484
    %v596 = vsel %vm595, %v406, %v594
    %vm597 = vcmask 1045509
    %v598 = vsel %vm597, %v413, %v596
    %vm599 = vcmask 1046534
    %v600 = vsel %vm599, %v420, %v598
    %vm601 = vcmask 1047559
    %v602 = vsel %vm601, %v427, %v600
    %v603 = vsel %vm51, %v602, 0
    %605 = vmatprep.subr.mxu0 0.0
    %606 = vmatpush1.msra.mxu0 %v573
    %607 = vmatprep.subr.mxu0 0.0
    %608 = vmatpush1.msra.mxu0 %v574
    %609 = vmatprep.subr.mxu0 0.0
    %610 = vmatpush1.msra.mxu0 %v575
    %611 = vmatprep.subr.mxu0 0.0
    %612 = vmatpush1.msra.mxu0 %v576
    %613 = vmatprep.subr.mxu0 0.0
    %614 = vmatpush1.msra.mxu0 %v577
    %615 = vmatprep.subr.mxu0 0.0
    %616 = vmatpush1.msra.mxu0 %v578
    %617 = vmatprep.subr.mxu0 0.0
    %618 = vmatpush1.msra.mxu0 %v579
    %619 = vmatprep.subr.mxu0 0.0
    %620 = vmatpush1.msra.mxu0 %v580
    %621 = vmatprep.subr.mxu0 0.0
    %622 = vmatpush1.msra.mxu0 0.0
    %623 = vmatprep.subr.mxu0 0.0
    %624 = vmatpush1.msra.mxu0 0.0
    %625 = vmatprep.subr.mxu0 0.0
    %626 = vmatpush1.msra.mxu0 0.0
    %627 = vmatprep.subr.mxu0 0.0
    %628 = vmatpush1.msra.mxu0 0.0
    %629 = vmatprep.subr.mxu0 0.0
    %630 = vmatpush1.msra.mxu0 0.0
    %631 = vmatprep.subr.mxu0 0.0
    %632 = vmatpush1.msra.mxu0 0.0
    %633 = vmatprep.subr.mxu0 0.0
    %634 = vmatpush1.msra.mxu0 0.0
    %635 = vmatprep.subr.mxu0 0.0
    %636 = vmatpush1.msra.mxu0 0.0
    %637 = vmatprep.subr.mxu0 0.0
    %638 = vmatpush1.msra.mxu0 0.0
    %639 = vmatprep.subr.mxu0 0.0
    %640 = vmatpush1.msra.mxu0 0.0
    %641 = vmatprep.subr.mxu0 0.0
    %642 = vmatpush1.msra.mxu0 0.0
    %643 = vmatprep.subr.mxu0 0.0
    %644 = vmatpush1.msra.mxu0 0.0
    %645 = vmatprep.subr.mxu0 0.0
    %646 = vmatpush1.msra.mxu0 0.0
    %647 = vmatprep.subr.mxu0 0.0
    %648 = vmatpush1.msra.mxu0 0.0
    %649 = vmatprep.subr.mxu0 0.0
    %650 = vmatpush1.msra.mxu0 0.0
    %651 = vmatprep.subr.mxu0 0.0
    %652 = vmatpush1.msra.mxu0 0.0
    %653 = vmatprep.subr.mxu0 0.0
    %654 = vmatpush1.msra.mxu0 0.0
    %655 = vmatprep.subr.mxu0 0.0
    %656 = vmatpush1.msra.mxu0 0.0
    %657 = vmatprep.subr.mxu0 0.0
    %658 = vmatpush1.msra.mxu0 0.0
    %659 = vmatprep.subr.mxu0 0.0
    %660 = vmatpush1.msra.mxu0 0.0
    %661 = vmatprep.subr.mxu0 0.0
    %662 = vmatpush1.msra.mxu0 0.0
    %663 = vmatprep.subr.mxu0 0.0
    %664 = vmatpush1.msra.mxu0 0.0
    %665 = vmatprep.subr.mxu0 0.0
    %666 = vmatpush1.msra.mxu0 0.0
    %667 = vmatprep.subr.mxu0 0.0
    %668 = vmatpush1.msra.mxu0 0.0
    %669 = vmatprep.mubr.f32.mxu0 0.0
    %670 = vmatmul.mubr.f32.gmra.mrb[0].mxu0 %v603
    %v671 = vpop.f32.mrb[0].mxu0
    %v672 = vadd.f32 0.0, %v671
    %v673 = vpop.f32.mrb[0].mxu0
    %674 = vdwg.mxu0
    %v676 = vcombine.high %v672, %v672
    %v678 = vunpack.c.l.s4 1966171168
    %v679 = vunpack.c.0.s8 %v678
    %v680 = vlaneseq
    %v681 = vshrl.u32 %v680, 7
    %v682 = vsub.s32 %v679, %v681
    %v683 = vrot.slane %v672, %v682
    %v685 = vunpack.c.l.s4 1966171168
    %v686 = vunpack.c.0.s8 %v685
    %v687 = vlaneseq
    %v688 = vshrl.u32 %v687, 7
    %v689 = vsub.s32 %v686, %v688
    %v690 = vrot.slane %v676, %v689
    %v691 = vcombine.high %v683, %v683
    %v692 = vcombine.high %v690, %v690
    %v694 = vunpack.c.l.s4 1966171168
    %v695 = vunpack.c.0.s8 %v694
    %v696 = vlaneseq
    %v697 = vshrl.u32 %v696, 7
    %v698 = vsub.s32 %v695, %v697
    %v699 = vrot.slane %v683, %v698
    %v701 = vunpack.c.l.s4 1966171168
    %v702 = vunpack.c.0.s8 %v701
    %v703 = vlaneseq
    %v704 = vshrl.u32 %v703, 7
    %v705 = vsub.s32 %v702, %v704
    %v706 = vrot.slane %v690, %v705
    %v708 = vunpack.c.l.s4 1966171168
    %v709 = vunpack.c.0.s8 %v708
    %v710 = vlaneseq
    %v711 = vshrl.u32 %v710, 7
    %v712 = vsub.s32 %v709, %v711
    %v713 = vrot.slane %v691, %v712
    %v715 = vunpack.c.l.s4 1966171168
    %v716 = vunpack.c.0.s8 %v715
    %v717 = vlaneseq
    %v718 = vshrl.u32 %v717, 7
    %v719 = vsub.s32 %v716, %v718
    %v720 = vrot.slane %v692, %v719
    %v721 = vcombine.high %v699, %v699
    %v722 = vcombine.high %v706, %v706
    %v723 = vcombine.high %v713, %v713
    %v724 = vcombine.high %v720, %v720
    %v725 = vlaneseq
    %v726 = vshrl.u32 %v725, 7
    %v727 = vsub.s32 0, %v726
    %v728 = vrot.slane %v699, %v727
    %v729 = vlaneseq
    %v730 = vshrl.u32 %v729, 7
    %v731 = vsub.s32 0, %v730
    %v732 = vrot.slane %v713, %v731
    %v733 = vlaneseq
    %v734 = vshrl.u32 %v733, 7
    %v735 = vsub.s32 0, %v734
    %v736 = vrot.slane %v721, %v735
    %v737 = vlaneseq
    %v738 = vshrl.u32 %v737, 7
    %v739 = vsub.s32 0, %v738
    %v740 = vrot.slane %v723, %v739
    %v741 = vlaneseq
    %v742 = vshrl.u32 %v741, 7
    %v743 = vsub.s32 0, %v742
    %v744 = vrot.slane %v706, %v743
    %v745 = vlaneseq
    %v746 = vshrl.u32 %v745, 7
    %v747 = vsub.s32 0, %v746
    %v748 = vrot.slane %v720, %v747
    %v749 = vlaneseq
    %v750 = vshrl.u32 %v749, 7
    %v751 = vsub.s32 0, %v750
    %v752 = vrot.slane %v722, %v751
    %v753 = vlaneseq
    %v754 = vshrl.u32 %v753, 7
    %v755 = vsub.s32 0, %v754
    %v756 = vrot.slane %v724, %v755
    %v765 = vadd.f32 %v535, %v728
    %v766 = vadd.f32 %v540, %v732
    %v767 = vadd.f32 %v545, %v736
    %v768 = vadd.f32 %v550, %v740
    %v769 = vadd.f32 %v555, %v744
    %v770 = vadd.f32 %v560, %v748
    %v771 = vadd.f32 %v565, %v752
    %v772 = vadd.f32 %v570, %v756
    %v774 = vlaneseq
    %v775 = vshrl.u32 %v774, 7
    %v776 = vsub.s32 0, %v775
    %v777 = vrot.slane %v34, %v776
    %v779 = vmul.f32 %v765, %v777
    %v780 = vmul.f32 %v766, %v777
    %v781 = vmul.f32 %v767, %v777
    %v782 = vmul.f32 %v768, %v777
    %v783 = vmul.f32 %v769, %v777
    %v784 = vmul.f32 %v770, %v777
    %v785 = vmul.f32 %v771, %v777
    %v786 = vmul.f32 %v772, %v777
    %v787 = vsel %vm203, %v779, 0.0
    %788 = vadd.xlane.f32.xlu0 %v787
    %v789 = vpop.xlane.xlu0 %788
    %v790 = vsel %vm203, %v780, 0.0
    %791 = vadd.xlane.f32.xlu0 %v790
    %v792 = vpop.xlane.xlu0 %791
    %v793 = vsel %vm203, %v781, 0.0
    %794 = vadd.xlane.f32.xlu0 %v793
    %v795 = vpop.xlane.xlu0 %794
    %v796 = vsel %vm203, %v782, 0.0
    %797 = vadd.xlane.f32.xlu0 %v796
    %v798 = vpop.xlane.xlu0 %797
    %v799 = vsel %vm203, %v783, 0.0
    %800 = vadd.xlane.f32.xlu0 %v799
    %v801 = vpop.xlane.xlu0 %800
    %v802 = vsel %vm203, %v784, 0.0
    %803 = vadd.xlane.f32.xlu0 %v802
    %v804 = vpop.xlane.xlu0 %803
    %v805 = vsel %vm203, %v785, 0.0
    %806 = vadd.xlane.f32.xlu0 %v805
    %v807 = vpop.xlane.xlu0 %806
    %v808 = vsel %vm203, %v786, 0.0
    %809 = vadd.xlane.f32.xlu0 %v808
    %v810 = vpop.xlane.xlu0 %809
    %v811 = vrot.slane %v789, 4
    %v812 = vmax.f32 %v789, %v811
    %v813 = vrot.slane %v812, 2
    %v814 = vmax.f32 %v812, %v813
    %v815 = vrot.slane %v814, 1
    %v816 = vmax.f32 %v814, %v815
    %v817 = vrot.slane %v792, 4
    %v818 = vmax.f32 %v792, %v817
    %v819 = vrot.slane %v818, 2
    %v820 = vmax.f32 %v818, %v819
    %v821 = vrot.slane %v820, 1
    %v822 = vmax.f32 %v820, %v821
    %v823 = vrot.slane %v795, 4
    %v824 = vmax.f32 %v795, %v823
    %v825 = vrot.slane %v824, 2
    %v826 = vmax.f32 %v824, %v825
    %v827 = vrot.slane %v826, 1
    %v828 = vmax.f32 %v826, %v827
    %v829 = vrot.slane %v798, 4
    %v830 = vmax.f32 %v798, %v829
    %v831 = vrot.slane %v830, 2
    %v832 = vmax.f32 %v830, %v831
    %v833 = vrot.slane %v832, 1
    %v834 = vmax.f32 %v832, %v833
    %v835 = vrot.slane %v801, 4
    %v836 = vmax.f32 %v801, %v835
    %v837 = vrot.slane %v836, 2
    %v838 = vmax.f32 %v836, %v837
    %v839 = vrot.slane %v838, 1
    %v840 = vmax.f32 %v838, %v839
    %v841 = vrot.slane %v804, 4
    %v842 = vmax.f32 %v804, %v841
    %v843 = vrot.slane %v842, 2
    %v844 = vmax.f32 %v842, %v843
    %v845 = vrot.slane %v844, 1
    %v846 = vmax.f32 %v844, %v845
    %v847 = vrot.slane %v807, 4
    %v848 = vmax.f32 %v807, %v847
    %v849 = vrot.slane %v848, 2
    %v850 = vmax.f32 %v848, %v849
    %v851 = vrot.slane %v850, 1
    %v852 = vmax.f32 %v850, %v851
    %v853 = vrot.slane %v810, 4
    %v854 = vmax.f32 %v810, %v853
    %v855 = vrot.slane %v854, 2
    %v856 = vmax.f32 %v854, %v855
    %v857 = vrot.slane %v856, 1
    %v858 = vmax.f32 %v856, %v857
    %v859 = vsub.f32 %v789, %v816
    %v860 = vsub.f32 %v792, %v822
    %v861 = vsub.f32 %v795, %v828
    %v862 = vsub.f32 %v798, %v834
    %v863 = vsub.f32 %v801, %v840
    %v864 = vsub.f32 %v804, %v846
    %v865 = vsub.f32 %v807, %v852
    %v866 = vsub.f32 %v810, %v858
    %v867 = vmul.f32 %v859, 1.442695
    %v868 = vpow.pop %v867
    %v869 = vmul.f32 %v860, 1.442695
    %v870 = vpow.pop %v869
    %v871 = vmul.f32 %v861, 1.442695
    %v872 = vpow.pop %v871
    %v873 = vmul.f32 %v862, 1.442695
    %v874 = vpow.pop %v873
    %v875 = vmul.f32 %v863, 1.442695
    %v876 = vpow.pop %v875
    %v877 = vmul.f32 %v864, 1.442695
    %v878 = vpow.pop %v877
    %v879 = vmul.f32 %v865, 1.442695
    %v880 = vpow.pop %v879
    %v881 = vmul.f32 %v866, 1.442695
    %v882 = vpow.pop %v881
    %v883 = vrot.slane %v868, 4
    %v884 = vadd.f32 %v868, %v883
    %v885 = vrot.slane %v884, 2
    %v886 = vadd.f32 %v884, %v885
    %v887 = vrot.slane %v886, 1
    %v888 = vadd.f32 %v886, %v887
    %v889 = vrot.slane %v870, 4
    %v890 = vadd.f32 %v870, %v889
    %v891 = vrot.slane %v890, 2
    %v892 = vadd.f32 %v890, %v891
    %v893 = vrot.slane %v892, 1
    %v894 = vadd.f32 %v892, %v893
    %v895 = vrot.slane %v872, 4
    %v896 = vadd.f32 %v872, %v895
    %v897 = vrot.slane %v896, 2
    %v898 = vadd.f32 %v896, %v897
    %v899 = vrot.slane %v898, 1
    %v900 = vadd.f32 %v898, %v899
    %v901 = vrot.slane %v874, 4
    %v902 = vadd.f32 %v874, %v901
    %v903 = vrot.slane %v902, 2
    %v904 = vadd.f32 %v902, %v903
    %v905 = vrot.slane %v904, 1
    %v906 = vadd.f32 %v904, %v905
    %v907 = vrot.slane %v876, 4
    %v908 = vadd.f32 %v876, %v907
    %v909 = vrot.slane %v908, 2
    %v910 = vadd.f32 %v908, %v909
    %v911 = vrot.slane %v910, 1
    %v912 = vadd.f32 %v910, %v911
    %v913 = vrot.slane %v878, 4
    %v914 = vadd.f32 %v878, %v913
    %v915 = vrot.slane %v914, 2
    %v916 = vadd.f32 %v914, %v915
    %v917 = vrot.slane %v916, 1
    %v918 = vadd.f32 %v916, %v917
    %v919 = vrot.slane %v880, 4
    %v920 = vadd.f32 %v880, %v919
    %v921 = vrot.slane %v920, 2
    %v922 = vadd.f32 %v920, %v921
    %v923 = vrot.slane %v922, 1
    %v924 = vadd.f32 %v922, %v923
    %v925 = vrot.slane %v882, 4
    %v926 = vadd.f32 %v882, %v925
    %v927 = vrot.slane %v926, 2
    %v928 = vadd.f32 %v926, %v927
    %v929 = vrot.slane %v928, 1
    %v930 = vadd.f32 %v928, %v929
    %v931 = vrcp.pop %v888
    %v932 = vrcp.pop %v894
    %v933 = vrcp.pop %v900
    %v934 = vrcp.pop %v906
    %v935 = vrcp.pop %v912
    %v936 = vrcp.pop %v918
    %v937 = vrcp.pop %v924
    %v938 = vrcp.pop %v930
    %v939 = vmul.f32 %v868, %v931
    %v940 = vmul.f32 %v870, %v932
    %v941 = vmul.f32 %v872, %v933
    %v942 = vmul.f32 %v874, %v934
    %v943 = vmul.f32 %v876, %v935
    %v944 = vmul.f32 %v878, %v936
    %v945 = vmul.f32 %v880, %v937
    %v946 = vmul.f32 %v882, %v938
    %v947 = vmul.f32 %v939, %v428
    %v948 = vmul.f32 %v940, %v429
    %v949 = vmul.f32 %v941, %v430
    %v950 = vmul.f32 %v942, %v431
    %v951 = vmul.f32 %v943, %v432
    %v952 = vmul.f32 %v944, %v433
    %v953 = vmul.f32 %v945, %v434
    %v954 = vmul.f32 %v946, %v435
    %v955 = vsel %vm51, %v947, 0.0
    %v956 = vrot.slane %v955, 4
    %v957 = vadd.f32 %v955, %v956
    %v958 = vrot.slane %v957, 2
    %v959 = vadd.f32 %v957, %v958
    %v960 = vrot.slane %v959, 1
    %v961 = vadd.f32 %v959, %v960
    %v962 = vsel %vm51, %v948, 0.0
    %v963 = vrot.slane %v962, 4
    %v964 = vadd.f32 %v962, %v963
    %v965 = vrot.slane %v964, 2
    %v966 = vadd.f32 %v964, %v965
    %v967 = vrot.slane %v966, 1
    %v968 = vadd.f32 %v966, %v967
    %v969 = vsel %vm51, %v949, 0.0
    %v970 = vrot.slane %v969, 4
    %v971 = vadd.f32 %v969, %v970
    %v972 = vrot.slane %v971, 2
    %v973 = vadd.f32 %v971, %v972
    %v974 = vrot.slane %v973, 1
    %v975 = vadd.f32 %v973, %v974
    %v976 = vsel %vm51, %v950, 0.0
    %v977 = vrot.slane %v976, 4
    %v978 = vadd.f32 %v976, %v977
    %v979 = vrot.slane %v978, 2
    %v980 = vadd.f32 %v978, %v979
    %v981 = vrot.slane %v980, 1
    %v982 = vadd.f32 %v980, %v981
    %v983 = vsel %vm51, %v951, 0.0
    %v984 = vrot.slane %v983, 4
    %v985 = vadd.f32 %v983, %v984
    %v986 = vrot.slane %v985, 2
    %v987 = vadd.f32 %v985, %v986
    %v988 = vrot.slane %v987, 1
    %v989 = vadd.f32 %v987, %v988
    %v990 = vsel %vm51, %v952, 0.0
    %v991 = vrot.slane %v990, 4
    %v992 = vadd.f32 %v990, %v991
    %v993 = vrot.slane %v992, 2
    %v994 = vadd.f32 %v992, %v993
    %v995 = vrot.slane %v994, 1
    %v996 = vadd.f32 %v994, %v995
    %v997 = vsel %vm51, %v953, 0.0
    %v998 = vrot.slane %v997, 4
    %v999 = vadd.f32 %v997, %v998
    %v1000 = vrot.slane %v999, 2
    %v1001 = vadd.f32 %v999, %v1000
    %v1002 = vrot.slane %v1001, 1
    %v1003 = vadd.f32 %v1001, %v1002
    %v1004 = vsel %vm51, %v954, 0.0
    %v1005 = vrot.slane %v1004, 4
    %v1006 = vadd.f32 %v1004, %v1005
    %v1007 = vrot.slane %v1006, 2
    %v1008 = vadd.f32 %v1006, %v1007
    %v1009 = vrot.slane %v1008, 1
    %v1010 = vadd.f32 %v1008, %v1009
    %v1011 = vld [vmem:[%s8] sm:$0xff]
    %v1012 = vld [vmem:[%s8 + $0x8] sm:$0xff]
    %v1013 = vld [vmem:[%s8 + $0x10] sm:$0xff]
    %v1014 = vld [vmem:[%s8 + $0x18] sm:$0xff]
    %v1015 = vld [vmem:[%s8 + $0x20] sm:$0xff]
    %v1016 = vld [vmem:[%s8 + $0x28] sm:$0xff]
    %v1017 = vld [vmem:[%s8 + $0x30] sm:$0xff]
    %v1018 = vld [vmem:[%s8 + $0x38] sm:$0xff]
    %v1027 = vsel %vm589, %v968, %v961
    %v1028 = vsel %vm591, %v975, %v1027
    %v1029 = vsel %vm593, %v982, %v1028
    %v1030 = vsel %vm595, %v989, %v1029
    %v1031 = vsel %vm597, %v996, %v1030
    %v1032 = vsel %vm599, %v1003, %v1031
    %v1033 = vsel %vm601, %v1010, %v1032
    %v1034 = vsel %vm51, %v1033, 0
    %1036 = vmatprep.subr.mxu0 0.0
    %1037 = vmatpush1.msra.mxu0 %v1011
    %1038 = vmatprep.subr.mxu0 0.0
    %1039 = vmatpush1.msra.mxu0 %v1012
    %1040 = vmatprep.subr.mxu0 0.0
    %1041 = vmatpush1.msra.mxu0 %v1013
    %1042 = vmatprep.subr.mxu0 0.0
    %1043 = vmatpush1.msra.mxu0 %v1014
    %1044 = vmatprep.subr.mxu0 0.0
    %1045 = vmatpush1.msra.mxu0 %v1015
    %1046 = vmatprep.subr.mxu0 0.0
    %1047 = vmatpush1.msra.mxu0 %v1016
    %1048 = vmatprep.subr.mxu0 0.0
    %1049 = vmatpush1.msra.mxu0 %v1017
    %1050 = vmatprep.subr.mxu0 0.0
    %1051 = vmatpush1.msra.mxu0 %v1018
    %1052 = vmatprep.subr.mxu0 0.0
    %1053 = vmatpush1.msra.mxu0 0.0
    %1054 = vmatprep.subr.mxu0 0.0
    %1055 = vmatpush1.msra.mxu0 0.0
    %1056 = vmatprep.subr.mxu0 0.0
    %1057 = vmatpush1.msra.mxu0 0.0
    %1058 = vmatprep.subr.mxu0 0.0
    %1059 = vmatpush1.msra.mxu0 0.0
    %1060 = vmatprep.subr.mxu0 0.0
    %1061 = vmatpush1.msra.mxu0 0.0
    %1062 = vmatprep.subr.mxu0 0.0
    %1063 = vmatpush1.msra.mxu0 0.0
    %1064 = vmatprep.subr.mxu0 0.0
    %1065 = vmatpush1.msra.mxu0 0.0
    %1066 = vmatprep.subr.mxu0 0.0
    %1067 = vmatpush1.msra.mxu0 0.0
    %1068 = vmatprep.subr.mxu0 0.0
    %1069 = vmatpush1.msra.mxu0 0.0
    %1070 = vmatprep.subr.mxu0 0.0
    %1071 = vmatpush1.msra.mxu0 0.0
    %1072 = vmatprep.subr.mxu0 0.0
    %1073 = vmatpush1.msra.mxu0 0.0
    %1074 = vmatprep.subr.mxu0 0.0
    %1075 = vmatpush1.msra.mxu0 0.0
    %1076 = vmatprep.subr.mxu0 0.0
    %1077 = vmatpush1.msra.mxu0 0.0
    %1078 = vmatprep.subr.mxu0 0.0
    %1079 = vmatpush1.msra.mxu0 0.0
    %1080 = vmatprep.subr.mxu0 0.0
    %1081 = vmatpush1.msra.mxu0 0.0
    %1082 = vmatprep.subr.mxu0 0.0
    %1083 = vmatpush1.msra.mxu0 0.0
    %1084 = vmatprep.subr.mxu0 0.0
    %1085 = vmatpush1.msra.mxu0 0.0
    %1086 = vmatprep.subr.mxu0 0.0
    %1087 = vmatpush1.msra.mxu0 0.0
    %1088 = vmatprep.subr.mxu0 0.0
    %1089 = vmatpush1.msra.mxu0 0.0
    %1090 = vmatprep.subr.mxu0 0.0
    %1091 = vmatpush1.msra.mxu0 0.0
    %1092 = vmatprep.subr.mxu0 0.0
    %1093 = vmatpush1.msra.mxu0 0.0
    %1094 = vmatprep.subr.mxu0 0.0
    %1095 = vmatpush1.msra.mxu0 0.0
    %1096 = vmatprep.subr.mxu0 0.0
    %1097 = vmatpush1.msra.mxu0 0.0
    %1098 = vmatprep.subr.mxu0 0.0
    %1099 = vmatpush1.msra.mxu0 0.0
    %1100 = vmatprep.mubr.f32.mxu0 0.0
    %1101 = vmatmul.mubr.f32.gmra.mrb[0].mxu0 %v1034
    %v1102 = vpop.f32.mrb[0].mxu0
    %v1103 = vadd.f32 0.0, %v1102
    %v1104 = vpop.f32.mrb[0].mxu0
    %1105 = vdwg.mxu0
    %vm1106 = vcmp.gt.f32.partialorder %v1103, 0.0
    %v1107 = vmul.f32 %v1103, 0.01
    %v1108 = vsel %vm1106, %v1103, %v1107
    %v1109 = vld [vmem:[%s2] sm:$0xf]
    %v1110 = vld [vmem:[%s2 + $0x4] sm:$0xf]
    %v1111 = vld [vmem:[%s2 + $0x8] sm:$0xf]
    %v1112 = vld [vmem:[%s2 + $0xc] sm:$0xf]
    %v1113 = vld [vmem:[%s2 + $0x10] sm:$0xf]
    %v1114 = vld [vmem:[%s2 + $0x14] sm:$0xf]
    %v1115 = vld [vmem:[%s2 + $0x18] sm:$0xf]
    %v1116 = vld [vmem:[%s2 + $0x1c] sm:$0xf]
    %v1118 = vcombine.high %v1108, %v1108
    %v1120 = vunpack.c.l.s4 1966171168
    %v1121 = vunpack.c.0.s8 %v1120
    %v1122 = vlaneseq
    %v1123 = vshrl.u32 %v1122, 7
    %v1124 = vsub.s32 %v1121, %v1123
    %v1125 = vrot.slane %v1108, %v1124
    %v1127 = vunpack.c.l.s4 1966171168
    %v1128 = vunpack.c.0.s8 %v1127
    %v1129 = vlaneseq
    %v1130 = vshrl.u32 %v1129, 7
    %v1131 = vsub.s32 %v1128, %v1130
    %v1132 = vrot.slane %v1118, %v1131
    %v1133 = vcombine.high %v1125, %v1125
    %v1134 = vcombine.high %v1132, %v1132
    %v1136 = vunpack.c.l.s4 1966171168
    %v1137 = vunpack.c.0.s8 %v1136
    %v1138 = vlaneseq
    %v1139 = vshrl.u32 %v1138, 7
    %v1140 = vsub.s32 %v1137, %v1139
    %v1141 = vrot.slane %v1125, %v1140
    %v1143 = vunpack.c.l.s4 1966171168
    %v1144 = vunpack.c.0.s8 %v1143
    %v1145 = vlaneseq
    %v1146 = vshrl.u32 %v1145, 7
    %v1147 = vsub.s32 %v1144, %v1146
    %v1148 = vrot.slane %v1132, %v1147
    %v1150 = vunpack.c.l.s4 1966171168
    %v1151 = vunpack.c.0.s8 %v1150
    %v1152 = vlaneseq
    %v1153 = vshrl.u32 %v1152, 7
    %v1154 = vsub.s32 %v1151, %v1153
    %v1155 = vrot.slane %v1133, %v1154
    %v1157 = vunpack.c.l.s4 1966171168
    %v1158 = vunpack.c.0.s8 %v1157
    %v1159 = vlaneseq
    %v1160 = vshrl.u32 %v1159, 7
    %v1161 = vsub.s32 %v1158, %v1160
    %v1162 = vrot.slane %v1134, %v1161
    %v1163 = vcombine.high %v1141, %v1141
    %v1164 = vcombine.high %v1148, %v1148
    %v1165 = vcombine.high %v1155, %v1155
    %v1166 = vcombine.high %v1162, %v1162
    %v1167 = vlaneseq
    %v1168 = vshrl.u32 %v1167, 7
    %v1169 = vsub.s32 0, %v1168
    %v1170 = vrot.slane %v1141, %v1169
    %v1171 = vlaneseq
    %v1172 = vshrl.u32 %v1171, 7
    %v1173 = vsub.s32 0, %v1172
    %v1174 = vrot.slane %v1155, %v1173
    %v1175 = vlaneseq
    %v1176 = vshrl.u32 %v1175, 7
    %v1177 = vsub.s32 0, %v1176
    %v1178 = vrot.slane %v1163, %v1177
    %v1179 = vlaneseq
    %v1180 = vshrl.u32 %v1179, 7
    %v1181 = vsub.s32 0, %v1180
    %v1182 = vrot.slane %v1165, %v1181
    %v1183 = vlaneseq
    %v1184 = vshrl.u32 %v1183, 7
    %v1185 = vsub.s32 0, %v1184
    %v1186 = vrot.slane %v1148, %v1185
    %v1187 = vlaneseq
    %v1188 = vshrl.u32 %v1187, 7
    %v1189 = vsub.s32 0, %v1188
    %v1190 = vrot.slane %v1162, %v1189
    %v1191 = vlaneseq
    %v1192 = vshrl.u32 %v1191, 7
    %v1193 = vsub.s32 0, %v1192
    %v1194 = vrot.slane %v1164, %v1193
    %v1195 = vlaneseq
    %v1196 = vshrl.u32 %v1195, 7
    %v1197 = vsub.s32 0, %v1196
    %v1198 = vrot.slane %v1166, %v1197
    %v1207 = vmul.f32 %v1109, %v1170
    %v1208 = vmul.f32 %v1110, %v1174
    %v1209 = vmul.f32 %v1111, %v1178
    %v1210 = vmul.f32 %v1112, %v1182
    %v1211 = vmul.f32 %v1113, %v1186
    %v1212 = vmul.f32 %v1114, %v1190
    %v1213 = vmul.f32 %v1115, %v1194
    %v1214 = vmul.f32 %v1116, %v1198
    %vm1215 = vcmask 519168
    %v1216 = vsel %vm1215, %v1207, 0.0
    %1217 = vadd.xlane.f32.xlu0 %v1216
    %v1218 = vpop.xlane.xlu0 %1217
    %v1219 = vsel %vm1215, %v1208, 0.0
    %1220 = vadd.xlane.f32.xlu0 %v1219
    %v1221 = vpop.xlane.xlu0 %1220
    %v1222 = vsel %vm1215, %v1209, 0.0
    %1223 = vadd.xlane.f32.xlu0 %v1222
    %v1224 = vpop.xlane.xlu0 %1223
    %v1225 = vsel %vm1215, %v1210, 0.0
    %1226 = vadd.xlane.f32.xlu0 %v1225
    %v1227 = vpop.xlane.xlu0 %1226
    %v1228 = vsel %vm1215, %v1211, 0.0
    %1229 = vadd.xlane.f32.xlu0 %v1228
    %v1230 = vpop.xlane.xlu0 %1229
    %v1231 = vsel %vm1215, %v1212, 0.0
    %1232 = vadd.xlane.f32.xlu0 %v1231
    %v1233 = vpop.xlane.xlu0 %1232
    %v1234 = vsel %vm1215, %v1213, 0.0
    %1235 = vadd.xlane.f32.xlu0 %v1234
    %v1236 = vpop.xlane.xlu0 %1235
    %v1237 = vsel %vm1215, %v1214, 0.0
    %1238 = vadd.xlane.f32.xlu0 %v1237
    %v1239 = vpop.xlane.xlu0 %1238
    %v1248 = vlaneseq
    %v1249 = vand.u32 %v1248, 127
    %v1250 = vlaneseq
    %v1251 = vshrl.u32 %v1250, 7
    %v1252 = vsub.s32 %v1249, %v1251
    %v1253 = vrot.slane %v1218, %v1252
    %v1254 = vlaneseq
    %v1255 = vshrl.u32 %v1254, 7
    %v1256 = vsub.s32 %v1249, %v1255
    %v1257 = vrot.slane %v1221, %v1256
    %v1258 = vlaneseq
    %v1259 = vshrl.u32 %v1258, 7
    %v1260 = vsub.s32 %v1249, %v1259
    %v1261 = vrot.slane %v1224, %v1260
    %v1262 = vlaneseq
    %v1263 = vshrl.u32 %v1262, 7
    %v1264 = vsub.s32 %v1249, %v1263
    %v1265 = vrot.slane %v1227, %v1264
    %v1266 = vlaneseq
    %v1267 = vshrl.u32 %v1266, 7
    %v1268 = vsub.s32 %v1249, %v1267
    %v1269 = vrot.slane %v1230, %v1268
    %v1270 = vlaneseq
    %v1271 = vshrl.u32 %v1270, 7
    %v1272 = vsub.s32 %v1249, %v1271
    %v1273 = vrot.slane %v1233, %v1272
    %v1274 = vlaneseq
    %v1275 = vshrl.u32 %v1274, 7
    %v1276 = vsub.s32 %v1249, %v1275
    %v1277 = vrot.slane %v1236, %v1276
    %v1278 = vlaneseq
    %v1279 = vshrl.u32 %v1278, 7
    %v1280 = vsub.s32 %v1249, %v1279
    %v1281 = vrot.slane %v1239, %v1280
    %v1282 = vsel %vm589, %v1257, %v1253
    %v1283 = vsel %vm591, %v1261, %v1282
    %v1284 = vsel %vm593, %v1265, %v1283
    %v1285 = vsel %vm595, %v1269, %v1284
    %v1286 = vsel %vm597, %v1273, %v1285
    %v1287 = vsel %vm599, %v1277, %v1286
    %v1288 = vsel %vm601, %v1281, %v1287
    %vm1290 = vcmask 31744
    %v1291 = vsel %vm1290, %v1288, -inf
    %1292 = vmax.xlane.f32.xlu0 %v1291
    %v1293 = vpop.xlane.xlu0 %1292
    %v1295 = vlaneseq
    %v1296 = vshrl.u32 %v1295, 7
    %v1297 = vsub.s32 0, %v1296
    %v1298 = vrot.slane %v1293, %v1297
    %v1299 = vlaneseq
    %v1300 = vshrl.u32 %v1299, 7
    %v1301 = vsub.s32 1, %v1300
    %v1302 = vrot.slane %v1293, %v1301
    %v1303 = vlaneseq
    %v1304 = vshrl.u32 %v1303, 7
    %v1305 = vsub.s32 2, %v1304
    %v1306 = vrot.slane %v1293, %v1305
    %v1307 = vlaneseq
    %v1308 = vshrl.u32 %v1307, 7
    %v1309 = vsub.s32 3, %v1308
    %v1310 = vrot.slane %v1293, %v1309
    %v1311 = vlaneseq
    %v1312 = vshrl.u32 %v1311, 7
    %v1313 = vsub.s32 4, %v1312
    %v1314 = vrot.slane %v1293, %v1313
    %v1315 = vlaneseq
    %v1316 = vshrl.u32 %v1315, 7
    %v1317 = vsub.s32 5, %v1316
    %v1318 = vrot.slane %v1293, %v1317
    %v1319 = vlaneseq
    %v1320 = vshrl.u32 %v1319, 7
    %v1321 = vsub.s32 6, %v1320
    %v1322 = vrot.slane %v1293, %v1321
    %v1323 = vlaneseq
    %v1324 = vshrl.u32 %v1323, 7
    %v1325 = vsub.s32 7, %v1324
    %v1326 = vrot.slane %v1293, %v1325
    %v1335 = vsub.f32 %v1218, %v1298
    %v1336 = vsub.f32 %v1221, %v1302
    %v1337 = vsub.f32 %v1224, %v1306
    %v1338 = vsub.f32 %v1227, %v1310
    %v1339 = vsub.f32 %v1230, %v1314
    %v1340 = vsub.f32 %v1233, %v1318
    %v1341 = vsub.f32 %v1236, %v1322
    %v1342 = vsub.f32 %v1239, %v1326
    %v1343 = vmul.f32 %v1335, 1.442695
    %v1344 = vpow.pop %v1343
    %v1345 = vmul.f32 %v1336, 1.442695
    %v1346 = vpow.pop %v1345
    %v1347 = vmul.f32 %v1337, 1.442695
    %v1348 = vpow.pop %v1347
    %v1349 = vmul.f32 %v1338, 1.442695
    %v1350 = vpow.pop %v1349
    %v1351 = vmul.f32 %v1339, 1.442695
    %v1352 = vpow.pop %v1351
    %v1353 = vmul.f32 %v1340, 1.442695
    %v1354 = vpow.pop %v1353
    %v1355 = vmul.f32 %v1341, 1.442695
    %v1356 = vpow.pop %v1355
    %v1357 = vmul.f32 %v1342, 1.442695
    %v1358 = vpow.pop %v1357
    %1367 = vset.pattern.permute.xlu0 0
    %1368 = vperm.xlu0 %1367, %v1344
    %v1369 = vpop.permute.xlu0 %1368
    %1370 = vset.pattern.permute.xlu0 0
    %1371 = vperm.xlu0 %1370, %v1346
    %v1372 = vpop.permute.xlu0 %1371
    %1373 = vset.pattern.permute.xlu0 0
    %1374 = vperm.xlu0 %1373, %v1348
    %v1375 = vpop.permute.xlu0 %1374
    %1376 = vset.pattern.permute.xlu0 0
    %1377 = vperm.xlu0 %1376, %v1350
    %v1378 = vpop.permute.xlu0 %1377
    %1379 = vset.pattern.permute.xlu0 0
    %1380 = vperm.xlu0 %1379, %v1352
    %v1381 = vpop.permute.xlu0 %1380
    %1382 = vset.pattern.permute.xlu0 0
    %1383 = vperm.xlu0 %1382, %v1354
    %v1384 = vpop.permute.xlu0 %1383
    %1385 = vset.pattern.permute.xlu0 0
    %1386 = vperm.xlu0 %1385, %v1356
    %v1387 = vpop.permute.xlu0 %1386
    %1388 = vset.pattern.permute.xlu0 0
    %1389 = vperm.xlu0 %1388, %v1358
    %v1390 = vpop.permute.xlu0 %1389
    %v1391 = vlaneseq
    %v1392 = vshrl.u32 %v1391, 7
    %v1393 = vsub.s32 %v1249, %v1392
    %v1394 = vrot.slane %v1369, %v1393
    %v1395 = vlaneseq
    %v1396 = vshrl.u32 %v1395, 7
    %v1397 = vsub.s32 %v1249, %v1396
    %v1398 = vrot.slane %v1372, %v1397
    %v1399 = vlaneseq
    %v1400 = vshrl.u32 %v1399, 7
    %v1401 = vsub.s32 %v1249, %v1400
    %v1402 = vrot.slane %v1375, %v1401
    %v1403 = vlaneseq
    %v1404 = vshrl.u32 %v1403, 7
    %v1405 = vsub.s32 %v1249, %v1404
    %v1406 = vrot.slane %v1378, %v1405
    %v1407 = vlaneseq
    %v1408 = vshrl.u32 %v1407, 7
    %v1409 = vsub.s32 %v1249, %v1408
    %v1410 = vrot.slane %v1381, %v1409
    %v1411 = vlaneseq
    %v1412 = vshrl.u32 %v1411, 7
    %v1413 = vsub.s32 %v1249, %v1412
    %v1414 = vrot.slane %v1384, %v1413
    %v1415 = vlaneseq
    %v1416 = vshrl.u32 %v1415, 7
    %v1417 = vsub.s32 %v1249, %v1416
    %v1418 = vrot.slane %v1387, %v1417
    %v1419 = vlaneseq
    %v1420 = vshrl.u32 %v1419, 7
    %v1421 = vsub.s32 %v1249, %v1420
    %v1422 = vrot.slane %v1390, %v1421
    %v1423 = vsel %vm589, %v1398, %v1394
    %v1424 = vsel %vm591, %v1402, %v1423
    %v1425 = vsel %vm593, %v1406, %v1424
    %v1426 = vsel %vm595, %v1410, %v1425
    %v1427 = vsel %vm597, %v1414, %v1426
    %v1428 = vsel %vm599, %v1418, %v1427
    %v1429 = vsel %vm601, %v1422, %v1428
    %v1431 = vsel %vm1290, %v1429, 0.0
    %1432 = vadd.xlane.f32.xlu0 %v1431
    %v1433 = vpop.xlane.xlu0 %1432
    %v1434 = vrcp.pop %v1433
    %v1436 = vlaneseq
    %v1437 = vshrl.u32 %v1436, 7
    %v1438 = vsub.s32 0, %v1437
    %v1439 = vrot.slane %v1434, %v1438
    %v1440 = vlaneseq
    %v1441 = vshrl.u32 %v1440, 7
    %v1442 = vsub.s32 1, %v1441
    %v1443 = vrot.slane %v1434, %v1442
    %v1444 = vlaneseq
    %v1445 = vshrl.u32 %v1444, 7
    %v1446 = vsub.s32 2, %v1445
    %v1447 = vrot.slane %v1434, %v1446
    %v1448 = vlaneseq
    %v1449 = vshrl.u32 %v1448, 7
    %v1450 = vsub.s32 3, %v1449
    %v1451 = vrot.slane %v1434, %v1450
    %v1452 = vlaneseq
    %v1453 = vshrl.u32 %v1452, 7
    %v1454 = vsub.s32 4, %v1453
    %v1455 = vrot.slane %v1434, %v1454
    %v1456 = vlaneseq
    %v1457 = vshrl.u32 %v1456, 7
    %v1458 = vsub.s32 5, %v1457
    %v1459 = vrot.slane %v1434, %v1458
    %v1460 = vlaneseq
    %v1461 = vshrl.u32 %v1460, 7
    %v1462 = vsub.s32 6, %v1461
    %v1463 = vrot.slane %v1434, %v1462
    %v1464 = vlaneseq
    %v1465 = vshrl.u32 %v1464, 7
    %v1466 = vsub.s32 7, %v1465
    %v1467 = vrot.slane %v1434, %v1466
    %v1476 = vmul.f32 %v1344, %v1439
    %v1477 = vmul.f32 %v1346, %v1443
    %v1478 = vmul.f32 %v1348, %v1447
    %v1479 = vmul.f32 %v1350, %v1451
    %v1480 = vmul.f32 %v1352, %v1455
    %v1481 = vmul.f32 %v1354, %v1459
    %v1482 = vmul.f32 %v1356, %v1463
    %v1483 = vmul.f32 %v1358, %v1467
    %v1484 = vlaneseq
    %v1485 = vshrl.u32 %v1484, 7
    %vm1486 = vcmp.eq.s32.totalorder %v1485, %v1249
    %v1487 = vsel %vm1486, 1, 0
    %v1488 = vcvt.s32.f32 %v1487
    %1497 = vset.pattern.permute.xlu0 0
    %1498 = vperm.xlu0 %1497, %v1476
    %v1499 = vpop.permute.xlu0 %1498
    %1500 = vset.pattern.permute.xlu0 0
    %1501 = vperm.xlu0 %1500, %v1477
    %v1502 = vpop.permute.xlu0 %1501
    %1503 = vset.pattern.permute.xlu0 0
    %1504 = vperm.xlu0 %1503, %v1478
    %v1505 = vpop.permute.xlu0 %1504
    %1506 = vset.pattern.permute.xlu0 0
    %1507 = vperm.xlu0 %1506, %v1479
    %v1508 = vpop.permute.xlu0 %1507
    %1509 = vset.pattern.permute.xlu0 0
    %1510 = vperm.xlu0 %1509, %v1480
    %v1511 = vpop.permute.xlu0 %1510
    %1512 = vset.pattern.permute.xlu0 0
    %1513 = vperm.xlu0 %1512, %v1481
    %v1514 = vpop.permute.xlu0 %1513
    %1515 = vset.pattern.permute.xlu0 0
    %1516 = vperm.xlu0 %1515, %v1482
    %v1517 = vpop.permute.xlu0 %1516
    %1518 = vset.pattern.permute.xlu0 0
    %1519 = vperm.xlu0 %1518, %v1483
    %v1520 = vpop.permute.xlu0 %1519
    %v1521 = vlaneseq
    %v1522 = vshrl.u32 %v1521, 7
    %v1523 = vsub.s32 %v1249, %v1522
    %v1524 = vrot.slane %v1499, %v1523
    %v1525 = vlaneseq
    %v1526 = vshrl.u32 %v1525, 7
    %v1527 = vsub.s32 %v1249, %v1526
    %v1528 = vrot.slane %v1502, %v1527
    %v1529 = vlaneseq
    %v1530 = vshrl.u32 %v1529, 7
    %v1531 = vsub.s32 %v1249, %v1530
    %v1532 = vrot.slane %v1505, %v1531
    %v1533 = vlaneseq
    %v1534 = vshrl.u32 %v1533, 7
    %v1535 = vsub.s32 %v1249, %v1534
    %v1536 = vrot.slane %v1508, %v1535
    %v1537 = vlaneseq
    %v1538 = vshrl.u32 %v1537, 7
    %v1539 = vsub.s32 %v1249, %v1538
    %v1540 = vrot.slane %v1511, %v1539
    %v1541 = vlaneseq
    %v1542 = vshrl.u32 %v1541, 7
    %v1543 = vsub.s32 %v1249, %v1542
    %v1544 = vrot.slane %v1514, %v1543
    %v1545 = vlaneseq
    %v1546 = vshrl.u32 %v1545, 7
    %v1547 = vsub.s32 %v1249, %v1546
    %v1548 = vrot.slane %v1517, %v1547
    %v1549 = vlaneseq
    %v1550 = vshrl.u32 %v1549, 7
    %v1551 = vsub.s32 %v1249, %v1550
    %v1552 = vrot.slane %v1520, %v1551
    %v1553 = vsel %vm589, %v1528, %v1524
    %v1554 = vsel %vm591, %v1532, %v1553
    %v1555 = vsel %vm593, %v1536, %v1554
    %v1556 = vsel %vm595, %v1540, %v1555
    %v1557 = vsel %vm597, %v1544, %v1556
    %v1558 = vsel %vm599, %v1548, %v1557
    %v1559 = vsel %vm601, %v1552, %v1558
    %v1561 = vsel %vm1290, %v1488, 0
    %v1563 = vsel %vm1290, %v1559, 0
    %1565 = vmatprep.subr.mxu0 0.0
    %1566 = vmatpush1.xpose.msra.mxu0 %v1563
    %1567 = vmatprep.subr.mxu0 0.0
    %1568 = vmatpush1.xpose.msra.mxu0 0.0
    %1569 = vmatprep.subr.mxu0 0.0
    %1570 = vmatpush1.xpose.msra.mxu0 0.0
    %1571 = vmatprep.subr.mxu0 0.0
    %1572 = vmatpush1.xpose.msra.mxu0 0.0
    %1573 = vmatprep.subr.mxu0 0.0
    %1574 = vmatpush1.xpose.msra.mxu0 0.0
    %1575 = vmatprep.subr.mxu0 0.0
    %1576 = vmatpush1.xpose.msra.mxu0 0.0
    %1577 = vmatprep.subr.mxu0 0.0
    %1578 = vmatpush1.xpose.msra.mxu0 0.0
    %1579 = vmatprep.subr.mxu0 0.0
    %1580 = vmatpush1.xpose.msra.mxu0 0.0
    %1581 = vmatprep.subr.mxu0 0.0
    %1582 = vmatpush1.xpose.msra.mxu0 0.0
    %1583 = vmatprep.subr.mxu0 0.0
    %1584 = vmatpush1.xpose.msra.mxu0 0.0
    %1585 = vmatprep.subr.mxu0 0.0
    %1586 = vmatpush1.xpose.msra.mxu0 0.0
    %1587 = vmatprep.subr.mxu0 0.0
    %1588 = vmatpush1.xpose.msra.mxu0 0.0
    %1589 = vmatprep.subr.mxu0 0.0
    %1590 = vmatpush1.xpose.msra.mxu0 0.0
    %1591 = vmatprep.subr.mxu0 0.0
    %1592 = vmatpush1.xpose.msra.mxu0 0.0
    %1593 = vmatprep.subr.mxu0 0.0
    %1594 = vmatpush1.xpose.msra.mxu0 0.0
    %1595 = vmatprep.subr.mxu0 0.0
    %1596 = vmatpush1.xpose.msra.mxu0 0.0
    %1597 = vmatprep.subr.mxu0 0.0
    %1598 = vmatpush1.xpose.msra.mxu0 0.0
    %1599 = vmatprep.subr.mxu0 0.0
    %1600 = vmatpush1.xpose.msra.mxu0 0.0
    %1601 = vmatprep.subr.mxu0 0.0
    %1602 = vmatpush1.xpose.msra.mxu0 0.0
    %1603 = vmatprep.subr.mxu0 0.0
    %1604 = vmatpush1.xpose.msra.mxu0 0.0
    %1605 = vmatprep.subr.mxu0 0.0
    %1606 = vmatpush1.xpose.msra.mxu0 0.0
    %1607 = vmatprep.subr.mxu0 0.0
    %1608 = vmatpush1.xpose.msra.mxu0 0.0
    %1609 = vmatprep.subr.mxu0 0.0
    %1610 = vmatpush1.xpose.msra.mxu0 0.0
    %1611 = vmatprep.subr.mxu0 0.0
    %1612 = vmatpush1.xpose.msra.mxu0 0.0
    %1613 = vmatprep.subr.mxu0 0.0
    %1614 = vmatpush1.xpose.msra.mxu0 0.0
    %1615 = vmatprep.subr.mxu0 0.0
    %1616 = vmatpush1.xpose.msra.mxu0 0.0
    %1617 = vmatprep.subr.mxu0 0.0
    %1618 = vmatpush1.xpose.msra.mxu0 0.0
    %1619 = vmatprep.subr.mxu0 0.0
    %1620 = vmatpush1.xpose.msra.mxu0 0.0
    %1621 = vmatprep.subr.mxu0 0.0
    %1622 = vmatpush1.xpose.msra.mxu0 0.0
    %1623 = vmatprep.subr.mxu0 0.0
    %1624 = vmatpush1.xpose.msra.mxu0 0.0
    %1625 = vmatprep.subr.mxu0 0.0
    %1626 = vmatpush1.xpose.msra.mxu0 0.0
    %1627 = vmatprep.subr.mxu0 0.0
    %1628 = vmatpush1.xpose.msra.mxu0 0.0
    %1629 = vmatprep.mubr.f32.mxu0 0.0
    %1630 = vmatmul.mubr.f32.gmra.mrb[0].mxu0 %v1561
    %v1631 = vpop.f32.mrb[0].mxu0
    %v1632 = vadd.f32 0.0, %v1631
    %v1633 = vpop.f32.mrb[0].mxu0
    %1634 = vdwg.mxu0
    %vm1635 = vcmask 60416
    %1636 = vst.msk [vmem:[#allocation2] sm:$0xf] %vm1635, %v1632
    // Predicated region
    $region38: #{tpu_custom_call.1} parent=1 // pred_check
      _
    $region39: #{tpu_custom_call.1} parent=1 // pred_check_branch
      %1638 = sbr.rel (0) target = $region41
    $region40: #{tpu_custom_call.1} parent=1 // pred_region
      %s1640 = ssub.s32 64, 64
      %1641 = vsyncadd [#allocation3], %s1640
      %s1643 = sshll.u32 [#allocation2], 4
      %s1644 = int_to_ptr.vmem [resolvable:$true] %s1643
      %1646 = dma.vmem_to_hbm [thread:$0]  %s1644, 64, %s9, [#allocation3]
    $region41: #{tpu_custom_call.1} parent=1 // pred_fallthru
      _
    // Predicated region
    $region42: #{tpu_custom_call.1} parent=1 // pred_check
      _
    $region43: #{tpu_custom_call.1} parent=1 // pred_check_branch
      %1648 = sbr.rel (0) target = $region45
    $region44: #{tpu_custom_call.1} parent=1 // pred_region
      %1649 = dma.done [#allocation3], 64
    $region45: #{tpu_custom_call.1} parent=1 // pred_fallthru
      _
    %1650 = vsyncpa [#allocation3], 1

// kernel: tpu_custom_call.1
$region0: #{tpu_custom_call.1}
  #allocation0 [shape = 'u32[]', space=smem, size = 0x4, offset = 0x4, fixed_abs, tag = 'smem constant byte address 0x4 - core index']
  #allocation1 [shape = 'u32[144,128]{1,0:T(1,128)}', space=vmem, size = 0x12000, scoped, tag = 'internal scratch']
  %s0 = inlined_call_operand.vmem [shape: f32[8,8,64], index: 0, kind: input, shape index: {}]
  %s1 = inlined_call_operand.vmem [shape: f32[8,8,64], index: 1, kind: input, shape index: {}]
  %s2 = inlined_call_operand.vmem [shape: f32[8,4,64], index: 2, kind: input, shape index: {}]
  %s3 = inlined_call_operand.vmem [shape: f32[64,32], index: 3, kind: input, shape index: {}]
  %s4 = inlined_call_operand.vmem [shape: f32[1,32], index: 4, kind: input, shape index: {}]
  %s5 = inlined_call_operand.vmem [shape: f32[64,32], index: 5, kind: input, shape index: {}]
  %s6 = inlined_call_operand.vmem [shape: f32[64,32], index: 6, kind: input, shape index: {}]
  %s7 = inlined_call_operand.vmem [shape: f32[1,32], index: 7, kind: input, shape index: {}]
  %s8 = inlined_call_operand.vmem [shape: f32[64,64], index: 8, kind: input, shape index: {}]
  %s9 = inlined_call_operand.hbm [shape: f32[1,4,8], index: 9, kind: output, shape index: {}]
  %s10 = sld [smem:[#allocation0]]
  $region46: #{tpu_custom_call.1} parent=0
    _
  %s12 = ssub.s32 1, %s10
  %s13 = scalar_select 0, %s12, %s10
  $region1: #{tpu_custom_call.1} parent=0
    #allocation2 [shape = 'u8[2048]{0}', space=vmem, size = 0x800, scoped, tag = 'output window, operand 0, single buffered']
    #allocation3 [shape = 's32[1]{0}', space=sflag, size = 0x4, scoped, tag = 'scoped memory for tpu_custom_call.1']
    %14 = vsyncpa [#allocation3], 0
    // Predicated region
    $region2: #{tpu_custom_call.1} parent=1 // pred_check
      _
    $region3: #{tpu_custom_call.1} parent=1 // pred_check_branch
      %16 = sbr.rel (0) target = $region5
    $region4: #{tpu_custom_call.1} parent=1 // pred_region
      _
    $region5: #{tpu_custom_call.1} parent=1 // pred_fallthru
      _
    // Predicated region
    $region6: #{tpu_custom_call.1} parent=1 // pred_check
      _
    $region7: #{tpu_custom_call.1} parent=1 // pred_check_branch
      %18 = sbr.rel (0) target = $region9
    $region8: #{tpu_custom_call.1} parent=1 // pred_region
      _
    $region9: #{tpu_custom_call.1} parent=1 // pred_fallthru
      _
    // Predicated region
    $region10: #{tpu_custom_call.1} parent=1 // pred_check
      _
    $region11: #{tpu_custom_call.1} parent=1 // pred_check_branch
      %20 = sbr.rel (0) target = $region13
    $region12: #{tpu_custom_call.1} parent=1 // pred_region
      _
    $region13: #{tpu_custom_call.1} parent=1 // pred_fallthru
      _
    // Predicated region
    $region14: #{tpu_custom_call.1} parent=1 // pred_check
      _
    $region15: #{tpu_custom_call.1} parent=1 // pred_check_branch
      %22 = sbr.rel (0) target = $region17
    $region16: #{tpu_custom_call.1} parent=1 // pred_region
      _
    $region17: #{tpu_custom_call.1} parent=1 // pred_fallthru
      _
    // Predicated region
    $region18: #{tpu_custom_call.1} parent=1 // pred_check
      _
    $region19: #{tpu_custom_call.1} parent=1 // pred_check_branch
      %24 = sbr.rel (0) target = $region21
    $region20: #{tpu_custom_call.1} parent=1 // pred_region
      _
    $region21: #{tpu_custom_call.1} parent=1 // pred_fallthru
      _
    // Predicated region
    $region22: #{tpu_custom_call.1} parent=1 // pred_check
      _
    $region23: #{tpu_custom_call.1} parent=1 // pred_check_branch
      %26 = sbr.rel (0) target = $region25
    $region24: #{tpu_custom_call.1} parent=1 // pred_region
      _
    $region25: #{tpu_custom_call.1} parent=1 // pred_fallthru
      _
    // Predicated region
    $region26: #{tpu_custom_call.1} parent=1 // pred_check
      _
    $region27: #{tpu_custom_call.1} parent=1 // pred_check_branch
      %28 = sbr.rel (0) target = $region29
    $region28: #{tpu_custom_call.1} parent=1 // pred_region
      _
    $region29: #{tpu_custom_call.1} parent=1 // pred_fallthru
      _
    // Predicated region
    $region30: #{tpu_custom_call.1} parent=1 // pred_check
      _
    $region31: #{tpu_custom_call.1} parent=1 // pred_check_branch
      %30 = sbr.rel (0) target = $region33
    $region32: #{tpu_custom_call.1} parent=1 // pred_region
      _
    $region33: #{tpu_custom_call.1} parent=1 // pred_fallthru
      _
    // Predicated region
    $region34: #{tpu_custom_call.1} parent=1 // pred_check
      _
    $region35: #{tpu_custom_call.1} parent=1 // pred_check_branch
      %32 = sbr.rel (0) target = $region37
    $region36: #{tpu_custom_call.1} parent=1 // pred_region
      _
    $region37: #{tpu_custom_call.1} parent=1 // pred_fallthru
      _
    %v33 = vld [vmem:[%s4] sm:$0x1]
    %v34 = vld [vmem:[%s7] sm:$0x1]
    %v35 = vld [vmem:[%s0] sm:$0xff]
    %v36 = vld [vmem:[%s0 + $0x8] sm:$0xff]
    %v37 = vld [vmem:[%s0 + $0x10] sm:$0xff]
    %v38 = vld [vmem:[%s0 + $0x18] sm:$0xff]
    %v39 = vld [vmem:[%s0 + $0x20] sm:$0xff]
    %v40 = vld [vmem:[%s0 + $0x28] sm:$0xff]
    %v41 = vld [vmem:[%s0 + $0x30] sm:$0xff]
    %v42 = vld [vmem:[%s0 + $0x38] sm:$0xff]
    %v43 = vld [vmem:[%s3] sm:$0xff]
    %v44 = vld [vmem:[%s3 + $0x8] sm:$0xff]
    %v45 = vld [vmem:[%s3 + $0x10] sm:$0xff]
    %v46 = vld [vmem:[%s3 + $0x18] sm:$0xff]
    %v47 = vld [vmem:[%s3 + $0x20] sm:$0xff]
    %v48 = vld [vmem:[%s3 + $0x28] sm:$0xff]
    %v49 = vld [vmem:[%s3 + $0x30] sm:$0xff]
    %v50 = vld [vmem:[%s3 + $0x38] sm:$0xff]
    %vm51 = vcmask 523264
    %v53 = vsel %vm51, %v35, 0
    %v56 = vsel %vm51, %v36, 0
    %v59 = vsel %vm51, %v37, 0
    %v62 = vsel %vm51, %v38, 0
    %v65 = vsel %vm51, %v39, 0
    %v68 = vsel %vm51, %v40, 0
    %v71 = vsel %vm51, %v41, 0
    %v74 = vsel %vm51, %v42, 0
    %76 = vmatprep.subr.mxu0 0.0
    %77 = vmatpush1.msra.mxu0 %v43
    %78 = vmatprep.subr.mxu0 0.0
    %79 = vmatpush1.msra.mxu0 %v44
    %80 = vmatprep.subr.mxu0 0.0
    %81 = vmatpush1.msra.mxu0 %v45
    %82 = vmatprep.subr.mxu0 0.0
    %83 = vmatpush1.msra.mxu0 %v46
    %84 = vmatprep.subr.mxu0 0.0
    %85 = vmatpush1.msra.mxu0 %v47
    %86 = vmatprep.subr.mxu0 0.0
    %87 = vmatpush1.msra.mxu0 %v48
    %88 = vmatprep.subr.mxu0 0.0
    %89 = vmatpush1.msra.mxu0 %v49
    %90 = vmatprep.subr.mxu0 0.0
    %91 = vmatpush1.msra.mxu0 %v50
    %92 = vmatprep.subr.mxu0 0.0
    %93 = vmatpush1.msra.mxu0 0.0
    %94 = vmatprep.subr.mxu0 0.0
    %95 = vmatpush1.msra.mxu0 0.0
    %96 = vmatprep.subr.mxu0 0.0
    %97 = vmatpush1.msra.mxu0 0.0
    %98 = vmatprep.subr.mxu0 0.0
    %99 = vmatpush1.msra.mxu0 0.0
    %100 = vmatprep.subr.mxu0 0.0
    %101 = vmatpush1.msra.mxu0 0.0
    %102 = vmatprep.subr.mxu0 0.0
    %103 = vmatpush1.msra.mxu0 0.0
    %104 = vmatprep.subr.mxu0 0.0
    %105 = vmatpush1.msra.mxu0 0.0
    %106 = vmatprep.subr.mxu0 0.0
    %107 = vmatpush1.msra.mxu0 0.0
    %108 = vmatprep.subr.mxu0 0.0
    %109 = vmatpush1.msra.mxu0 0.0
    %110 = vmatprep.subr.mxu0 0.0
    %111 = vmatpush1.msra.mxu0 0.0
    %112 = vmatprep.subr.mxu0 0.0
    %113 = vmatpush1.msra.mxu0 0.0
    %114 = vmatprep.subr.mxu0 0.0
    %115 = vmatpush1.msra.mxu0 0.0
    %116 = vmatprep.subr.mxu0 0.0
    %117 = vmatpush1.msra.mxu0 0.0
    %118 = vmatprep.subr.mxu0 0.0
    %119 = vmatpush1.msra.mxu0 0.0
    %120 = vmatprep.subr.mxu0 0.0
    %121 = vmatpush1.msra.mxu0 0.0
    %122 = vmatprep.subr.mxu0 0.0
    %123 = vmatpush1.msra.mxu0 0.0
    %124 = vmatprep.subr.mxu0 0.0
    %125 = vmatpush1.msra.mxu0 0.0
    %126 = vmatprep.subr.mxu0 0.0
    %127 = vmatpush1.msra.mxu0 0.0
    %128 = vmatprep.subr.mxu0 0.0
    %129 = vmatpush1.msra.mxu0 0.0
    %130 = vmatprep.subr.mxu0 0.0
    %131 = vmatpush1.msra.mxu0 0.0
    %132 = vmatprep.subr.mxu0 0.0
    %133 = vmatpush1.msra.mxu0 0.0
    %134 = vmatprep.subr.mxu0 0.0
    %135 = vmatpush1.msra.mxu0 0.0
    %136 = vmatprep.subr.mxu0 0.0
    %137 = vmatpush1.msra.mxu0 0.0
    %138 = vmatprep.subr.mxu0 0.0
    %139 = vmatpush1.msra.mxu0 0.0
    %140 = vmatprep.mubr.f32.mxu0 0.0
    %141 = vmatmul.mubr.f32.gmra.mrb[0].mxu0 %v53
    %v142 = vpop.f32.mrb[0].mxu0
    %v143 = vadd.f32 0.0, %v142
    %v144 = vpop.f32.mrb[0].mxu0
    %145 = vmatprep.mubr.f32.mxu0 0.0
    %146 = vmatmul.mubr.f32.gmra.mrb[0].mxu0 %v56
    %v147 = vpop.f32.mrb[0].mxu0
    %v148 = vadd.f32 0.0, %v147
    %v149 = vpop.f32.mrb[0].mxu0
    %150 = vmatprep.mubr.f32.mxu0 0.0
    %151 = vmatmul.mubr.f32.gmra.mrb[0].mxu0 %v59
    %v152 = vpop.f32.mrb[0].mxu0
    %v153 = vadd.f32 0.0, %v152
    %v154 = vpop.f32.mrb[0].mxu0
    %155 = vmatprep.mubr.f32.mxu0 0.0
    %156 = vmatmul.mubr.f32.gmra.mrb[0].mxu0 %v62
    %v157 = vpop.f32.mrb[0].mxu0
    %v158 = vadd.f32 0.0, %v157
    %v159 = vpop.f32.mrb[0].mxu0
    %160 = vmatprep.mubr.f32.mxu0 0.0
    %161 = vmatmul.mubr.f32.gmra.mrb[0].mxu0 %v65
    %v162 = vpop.f32.mrb[0].mxu0
    %v163 = vadd.f32 0.0, %v162
    %v164 = vpop.f32.mrb[0].mxu0
    %165 = vmatprep.mubr.f32.mxu0 0.0
    %166 = vmatmul.mubr.f32.gmra.mrb[0].mxu0 %v68
    %v167 = vpop.f32.mrb[0].mxu0
    %v168 = vadd.f32 0.0, %v167
    %v169 = vpop.f32.mrb[0].mxu0
    %170 = vmatprep.mubr.f32.mxu0 0.0
    %171 = vmatmul.mubr.f32.gmra.mrb[0].mxu0 %v71
    %v172 = vpop.f32.mrb[0].mxu0
    %v173 = vadd.f32 0.0, %v172
    %v174 = vpop.f32.mrb[0].mxu0
    %175 = vmatprep.mubr.f32.mxu0 0.0
    %176 = vmatmul.mubr.f32.gmra.mrb[0].mxu0 %v74
    %v177 = vpop.f32.mrb[0].mxu0
    %v178 = vadd.f32 0.0, %v177
    %v179 = vpop.f32.mrb[0].mxu0
    %180 = vdwg.mxu0
    %v181 = vtanh.pop %v143
    %v182 = vtanh.pop %v148
    %v183 = vtanh.pop %v153
    %v184 = vtanh.pop %v158
    %v185 = vtanh.pop %v163
    %v186 = vtanh.pop %v168
    %v187 = vtanh.pop %v173
    %v188 = vtanh.pop %v178
    %v190 = vlaneseq
    %v191 = vshrl.u32 %v190, 7
    %v192 = vsub.s32 0, %v191
    %v193 = vrot.slane %v33, %v192
    %v195 = vmul.f32 %v181, %v193
    %v196 = vmul.f32 %v182, %v193
    %v197 = vmul.f32 %v183, %v193
    %v198 = vmul.f32 %v184, %v193
    %v199 = vmul.f32 %v185, %v193
    %v200 = vmul.f32 %v186, %v193
    %v201 = vmul.f32 %v187, %v193
    %v202 = vmul.f32 %v188, %v193
    %vm203 = vcmask 261120
    %v204 = vsel %vm203, %v195, 0.0
    %205 = vadd.xlane.f32.xlu0 %v204
    %v206 = vpop.xlane.xlu0 %205
    %v207 = vsel %vm203, %v196, 0.0
    %208 = vadd.xlane.f32.xlu0 %v207
    %v209 = vpop.xlane.xlu0 %208
    %v210 = vsel %vm203, %v197, 0.0
    %211 = vadd.xlane.f32.xlu0 %v210
    %v212 = vpop.xlane.xlu0 %211
    %v213 = vsel %vm203, %v198, 0.0
    %214 = vadd.xlane.f32.xlu0 %v213
    %v215 = vpop.xlane.xlu0 %214
    %v216 = vsel %vm203, %v199, 0.0
    %217 = vadd.xlane.f32.xlu0 %v216
    %v218 = vpop.xlane.xlu0 %217
    %v219 = vsel %vm203, %v200, 0.0
    %220 = vadd.xlane.f32.xlu0 %v219
    %v221 = vpop.xlane.xlu0 %220
    %v222 = vsel %vm203, %v201, 0.0
    %223 = vadd.xlane.f32.xlu0 %v222
    %v224 = vpop.xlane.xlu0 %223
    %v225 = vsel %vm203, %v202, 0.0
    %226 = vadd.xlane.f32.xlu0 %v225
    %v227 = vpop.xlane.xlu0 %226
    %v228 = vrot.slane %v206, 4
    %v229 = vmax.f32 %v206, %v228
    %v230 = vrot.slane %v229, 2
    %v231 = vmax.f32 %v229, %v230
    %v232 = vrot.slane %v231, 1
    %v233 = vmax.f32 %v231, %v232
    %v234 = vrot.slane %v209, 4
    %v235 = vmax.f32 %v209, %v234
    %v236 = vrot.slane %v235, 2
    %v237 = vmax.f32 %v235, %v236
    %v238 = vrot.slane %v237, 1
    %v239 = vmax.f32 %v237, %v238
    %v240 = vrot.slane %v212, 4
    %v241 = vmax.f32 %v212, %v240
    %v242 = vrot.slane %v241, 2
    %v243 = vmax.f32 %v241, %v242
    %v244 = vrot.slane %v243, 1
    %v245 = vmax.f32 %v243, %v244
    %v246 = vrot.slane %v215, 4
    %v247 = vmax.f32 %v215, %v246
    %v248 = vrot.slane %v247, 2
    %v249 = vmax.f32 %v247, %v248
    %v250 = vrot.slane %v249, 1
    %v251 = vmax.f32 %v249, %v250
    %v252 = vrot.slane %v218, 4
    %v253 = vmax.f32 %v218, %v252
    %v254 = vrot.slane %v253, 2
    %v255 = vmax.f32 %v253, %v254
    %v256 = vrot.slane %v255, 1
    %v257 = vmax.f32 %v255, %v256
    %v258 = vrot.slane %v221, 4
    %v259 = vmax.f32 %v221, %v258
    %v260 = vrot.slane %v259, 2
    %v261 = vmax.f32 %v259, %v260
    %v262 = vrot.slane %v261, 1
    %v263 = vmax.f32 %v261, %v262
    %v264 = vrot.slane %v224, 4
    %v265 = vmax.f32 %v224, %v264
    %v266 = vrot.slane %v265, 2
    %v267 = vmax.f32 %v265, %v266
    %v268 = vrot.slane %v267, 1
    %v269 = vmax.f32 %v267, %v268
    %v270 = vrot.slane %v227, 4
    %v271 = vmax.f32 %v227, %v270
    %v272 = vrot.slane %v271, 2
    %v273 = vmax.f32 %v271, %v272
    %v274 = vrot.slane %v273, 1
    %v275 = vmax.f32 %v273, %v274
    %v276 = vsub.f32 %v206, %v233
    %v277 = vsub.f32 %v209, %v239
    %v278 = vsub.f32 %v212, %v245
    %v279 = vsub.f32 %v215, %v251
    %v280 = vsub.f32 %v218, %v257
    %v281 = vsub.f32 %v221, %v263
    %v282 = vsub.f32 %v224, %v269
    %v283 = vsub.f32 %v227, %v275
    %v284 = vmul.f32 %v276, 1.442695
    %v285 = vpow.pop %v284
    %v286 = vmul.f32 %v277, 1.442695
    %v287 = vpow.pop %v286
    %v288 = vmul.f32 %v278, 1.442695
    %v289 = vpow.pop %v288
    %v290 = vmul.f32 %v279, 1.442695
    %v291 = vpow.pop %v290
    %v292 = vmul.f32 %v280, 1.442695
    %v293 = vpow.pop %v292
    %v294 = vmul.f32 %v281, 1.442695
    %v295 = vpow.pop %v294
    %v296 = vmul.f32 %v282, 1.442695
    %v297 = vpow.pop %v296
    %v298 = vmul.f32 %v283, 1.442695
    %v299 = vpow.pop %v298
    %v300 = vrot.slane %v285, 4
    %v301 = vadd.f32 %v285, %v300
    %v302 = vrot.slane %v301, 2
    %v303 = vadd.f32 %v301, %v302
    %v304 = vrot.slane %v303, 1
    %v305 = vadd.f32 %v303, %v304
    %v306 = vrot.slane %v287, 4
    %v307 = vadd.f32 %v287, %v306
    %v308 = vrot.slane %v307, 2
    %v309 = vadd.f32 %v307, %v308
    %v310 = vrot.slane %v309, 1
    %v311 = vadd.f32 %v309, %v310
    %v312 = vrot.slane %v289, 4
    %v313 = vadd.f32 %v289, %v312
    %v314 = vrot.slane %v313, 2
    %v315 = vadd.f32 %v313, %v314
    %v316 = vrot.slane %v315, 1
    %v317 = vadd.f32 %v315, %v316
    %v318 = vrot.slane %v291, 4
    %v319 = vadd.f32 %v291, %v318
    %v320 = vrot.slane %v319, 2
    %v321 = vadd.f32 %v319, %v320
    %v322 = vrot.slane %v321, 1
    %v323 = vadd.f32 %v321, %v322
    %v324 = vrot.slane %v293, 4
    %v325 = vadd.f32 %v293, %v324
    %v326 = vrot.slane %v325, 2
    %v327 = vadd.f32 %v325, %v326
    %v328 = vrot.slane %v327, 1
    %v329 = vadd.f32 %v327, %v328
    %v330 = vrot.slane %v295, 4
    %v331 = vadd.f32 %v295, %v330
    %v332 = vrot.slane %v331, 2
    %v333 = vadd.f32 %v331, %v332
    %v334 = vrot.slane %v333, 1
    %v335 = vadd.f32 %v333, %v334
    %v336 = vrot.slane %v297, 4
    %v337 = vadd.f32 %v297, %v336
    %v338 = vrot.slane %v337, 2
    %v339 = vadd.f32 %v337, %v338
    %v340 = vrot.slane %v339, 1
    %v341 = vadd.f32 %v339, %v340
    %v342 = vrot.slane %v299, 4
    %v343 = vadd.f32 %v299, %v342
    %v344 = vrot.slane %v343, 2
    %v345 = vadd.f32 %v343, %v344
    %v346 = vrot.slane %v345, 1
    %v347 = vadd.f32 %v345, %v346
    %v348 = vrcp.pop %v305
    %v349 = vrcp.pop %v311
    %v350 = vrcp.pop %v317
    %v351 = vrcp.pop %v323
    %v352 = vrcp.pop %v329
    %v353 = vrcp.pop %v335
    %v354 = vrcp.pop %v341
    %v355 = vrcp.pop %v347
    %v356 = vmul.f32 %v285, %v348
    %v357 = vmul.f32 %v287, %v349
    %v358 = vmul.f32 %v289, %v350
    %v359 = vmul.f32 %v291, %v351
    %v360 = vmul.f32 %v293, %v352
    %v361 = vmul.f32 %v295, %v353
    %v362 = vmul.f32 %v297, %v354
    %v363 = vmul.f32 %v299, %v355
    %v364 = vmul.f32 %v356, %v35
    %v365 = vmul.f32 %v357, %v36
    %v366 = vmul.f32 %v358, %v37
    %v367 = vmul.f32 %v359, %v38
    %v368 = vmul.f32 %v360, %v39
    %v369 = vmul.f32 %v361, %v40
    %v370 = vmul.f32 %v362, %v41
    %v371 = vmul.f32 %v363, %v42
    %v372 = vsel %vm51, %v364, 0.0
    %v373 = vrot.slane %v372, 4
    %v374 = vadd.f32 %v372, %v373
    %v375 = vrot.slane %v374, 2
    %v376 = vadd.f32 %v374, %v375
    %v377 = vrot.slane %v376, 1
    %v378 = vadd.f32 %v376, %v377
    %v379 = vsel %vm51, %v365, 0.0
    %v380 = vrot.slane %v379, 4
    %v381 = vadd.f32 %v379, %v380
    %v382 = vrot.slane %v381, 2
    %v383 = vadd.f32 %v381, %v382
    %v384 = vrot.slane %v383, 1
    %v385 = vadd.f32 %v383, %v384
    %v386 = vsel %vm51, %v366, 0.0
    %v387 = vrot.slane %v386, 4
    %v388 = vadd.f32 %v386, %v387
    %v389 = vrot.slane %v388, 2
    %v390 = vadd.f32 %v388, %v389
    %v391 = vrot.slane %v390, 1
    %v392 = vadd.f32 %v390, %v391
    %v393 = vsel %vm51, %v367, 0.0
    %v394 = vrot.slane %v393, 4
    %v395 = vadd.f32 %v393, %v394
    %v396 = vrot.slane %v395, 2
    %v397 = vadd.f32 %v395, %v396
    %v398 = vrot.slane %v397, 1
    %v399 = vadd.f32 %v397, %v398
    %v400 = vsel %vm51, %v368, 0.0
    %v401 = vrot.slane %v400, 4
    %v402 = vadd.f32 %v400, %v401
    %v403 = vrot.slane %v402, 2
    %v404 = vadd.f32 %v402, %v403
    %v405 = vrot.slane %v404, 1
    %v406 = vadd.f32 %v404, %v405
    %v407 = vsel %vm51, %v369, 0.0
    %v408 = vrot.slane %v407, 4
    %v409 = vadd.f32 %v407, %v408
    %v410 = vrot.slane %v409, 2
    %v411 = vadd.f32 %v409, %v410
    %v412 = vrot.slane %v411, 1
    %v413 = vadd.f32 %v411, %v412
    %v414 = vsel %vm51, %v370, 0.0
    %v415 = vrot.slane %v414, 4
    %v416 = vadd.f32 %v414, %v415
    %v417 = vrot.slane %v416, 2
    %v418 = vadd.f32 %v416, %v417
    %v419 = vrot.slane %v418, 1
    %v420 = vadd.f32 %v418, %v419
    %v421 = vsel %vm51, %v371, 0.0
    %v422 = vrot.slane %v421, 4
    %v423 = vadd.f32 %v421, %v422
    %v424 = vrot.slane %v423, 2
    %v425 = vadd.f32 %v423, %v424
    %v426 = vrot.slane %v425, 1
    %v427 = vadd.f32 %v425, %v426
    %v428 = vld [vmem:[%s1] sm:$0xff]
    %v429 = vld [vmem:[%s1 + $0x8] sm:$0xff]
    %v430 = vld [vmem:[%s1 + $0x10] sm:$0xff]
    %v431 = vld [vmem:[%s1 + $0x18] sm:$0xff]
    %v432 = vld [vmem:[%s1 + $0x20] sm:$0xff]
    %v433 = vld [vmem:[%s1 + $0x28] sm:$0xff]
    %v434 = vld [vmem:[%s1 + $0x30] sm:$0xff]
    %v435 = vld [vmem:[%s1 + $0x38] sm:$0xff]
    %v436 = vld [vmem:[%s5] sm:$0xff]
    %v437 = vld [vmem:[%s5 + $0x8] sm:$0xff]
    %v438 = vld [vmem:[%s5 + $0x10] sm:$0xff]
    %v439 = vld [vmem:[%s5 + $0x18] sm:$0xff]
    %v440 = vld [vmem:[%s5 + $0x20] sm:$0xff]
    %v441 = vld [vmem:[%s5 + $0x28] sm:$0xff]
    %v442 = vld [vmem:[%s5 + $0x30] sm:$0xff]
    %v443 = vld [vmem:[%s5 + $0x38] sm:$0xff]
    %v445 = vsel %vm51, %v428, 0
    %v448 = vsel %vm51, %v429, 0
    %v451 = vsel %vm51, %v430, 0
    %v454 = vsel %vm51, %v431, 0
    %v457 = vsel %vm51, %v432, 0
    %v460 = vsel %vm51, %v433, 0
    %v463 = vsel %vm51, %v434, 0
    %v466 = vsel %vm51, %v435, 0
    %468 = vmatprep.subr.mxu0 0.0
    %469 = vmatpush1.msra.mxu0 %v436
    %470 = vmatprep.subr.mxu0 0.0
    %471 = vmatpush1.msra.mxu0 %v437
    %472 = vmatprep.subr.mxu0 0.0
    %473 = vmatpush1.msra.mxu0 %v438
    %474 = vmatprep.subr.mxu0 0.0
    %475 = vmatpush1.msra.mxu0 %v439
    %476 = vmatprep.subr.mxu0 0.0
    %477 = vmatpush1.msra.mxu0 %v440
    %478 = vmatprep.subr.mxu0 0.0
    %479 = vmatpush1.msra.mxu0 %v441
    %480 = vmatprep.subr.mxu0 0.0
    %481 = vmatpush1.msra.mxu0 %v442
    %482 = vmatprep.subr.mxu0 0.0
    %483 = vmatpush1.msra.mxu0 %v443
    %484 = vmatprep.subr.mxu0 0.0
    %485 = vmatpush1.msra.mxu0 0.0
    %486 = vmatprep.subr.mxu0 0.0
    %487 = vmatpush1.msra.mxu0 0.0
    %488 = vmatprep.subr.mxu0 0.0
    %489 = vmatpush1.msra.mxu0 0.0
    %490 = vmatprep.subr.mxu0 0.0
    %491 = vmatpush1.msra.mxu0 0.0
    %492 = vmatprep.subr.mxu0 0.0
    %493 = vmatpush1.msra.mxu0 0.0
    %494 = vmatprep.subr.mxu0 0.0
    %495 = vmatpush1.msra.mxu0 0.0
    %496 = vmatprep.subr.mxu0 0.0
    %497 = vmatpush1.msra.mxu0 0.0
    %498 = vmatprep.subr.mxu0 0.0
    %499 = vmatpush1.msra.mxu0 0.0
    %500 = vmatprep.subr.mxu0 0.0
    %501 = vmatpush1.msra.mxu0 0.0
    %502 = vmatprep.subr.mxu0 0.0
    %503 = vmatpush1.msra.mxu0 0.0
    %504 = vmatprep.subr.mxu0 0.0
    %505 = vmatpush1.msra.mxu0 0.0
    %506 = vmatprep.subr.mxu0 0.0
    %507 = vmatpush1.msra.mxu0 0.0
    %508 = vmatprep.subr.mxu0 0.0
    %509 = vmatpush1.msra.mxu0 0.0
    %510 = vmatprep.subr.mxu0 0.0
    %511 = vmatpush1.msra.mxu0 0.0
    %512 = vmatprep.subr.mxu0 0.0
    %513 = vmatpush1.msra.mxu0 0.0
    %514 = vmatprep.subr.mxu0 0.0
    %515 = vmatpush1.msra.mxu0 0.0
    %516 = vmatprep.subr.mxu0 0.0
    %517 = vmatpush1.msra.mxu0 0.0
    %518 = vmatprep.subr.mxu0 0.0
    %519 = vmatpush1.msra.mxu0 0.0
    %520 = vmatprep.subr.mxu0 0.0
    %521 = vmatpush1.msra.mxu0 0.0
    %522 = vmatprep.subr.mxu0 0.0
    %523 = vmatpush1.msra.mxu0 0.0
    %524 = vmatprep.subr.mxu0 0.0
    %525 = vmatpush1.msra.mxu0 0.0
    %526 = vmatprep.subr.mxu0 0.0
    %527 = vmatpush1.msra.mxu0 0.0
    %528 = vmatprep.subr.mxu0 0.0
    %529 = vmatpush1.msra.mxu0 0.0
    %530 = vmatprep.subr.mxu0 0.0
    %531 = vmatpush1.msra.mxu0 0.0
    %532 = vmatprep.mubr.f32.mxu0 0.0
    %533 = vmatmul.mubr.f32.gmra.mrb[0].mxu0 %v445
    %v534 = vpop.f32.mrb[0].mxu0
    %v535 = vadd.f32 0.0, %v534
    %v536 = vpop.f32.mrb[0].mxu0
    %537 = vmatprep.mubr.f32.mxu0 0.0
    %538 = vmatmul.mubr.f32.gmra.mrb[0].mxu0 %v448
    %v539 = vpop.f32.mrb[0].mxu0
    %v540 = vadd.f32 0.0, %v539
    %v541 = vpop.f32.mrb[0].mxu0
    %542 = vmatprep.mubr.f32.mxu0 0.0
    %543 = vmatmul.mubr.f32.gmra.mrb[0].mxu0 %v451
    %v544 = vpop.f32.mrb[0].mxu0
    %v545 = vadd.f32 0.0, %v544
    %v546 = vpop.f32.mrb[0].mxu0
    %547 = vmatprep.mubr.f32.mxu0 0.0
    %548 = vmatmul.mubr.f32.gmra.mrb[0].mxu0 %v454
    %v549 = vpop.f32.mrb[0].mxu0
    %v550 = vadd.f32 0.0, %v549
    %v551 = vpop.f32.mrb[0].mxu0
    %552 = vmatprep.mubr.f32.mxu0 0.0
    %553 = vmatmul.mubr.f32.gmra.mrb[0].mxu0 %v457
    %v554 = vpop.f32.mrb[0].mxu0
    %v555 = vadd.f32 0.0, %v554
    %v556 = vpop.f32.mrb[0].mxu0
    %557 = vmatprep.mubr.f32.mxu0 0.0
    %558 = vmatmul.mubr.f32.gmra.mrb[0].mxu0 %v460
    %v559 = vpop.f32.mrb[0].mxu0
    %v560 = vadd.f32 0.0, %v559
    %v561 = vpop.f32.mrb[0].mxu0
    %562 = vmatprep.mubr.f32.mxu0 0.0
    %563 = vmatmul.mubr.f32.gmra.mrb[0].mxu0 %v463
    %v564 = vpop.f32.mrb[0].mxu0
    %v565 = vadd.f32 0.0, %v564
    %v566 = vpop.f32.mrb[0].mxu0
    %567 = vmatprep.mubr.f32.mxu0 0.0
    %568 = vmatmul.mubr.f32.gmra.mrb[0].mxu0 %v466
    %v569 = vpop.f32.mrb[0].mxu0
    %v570 = vadd.f32 0.0, %v569
    %v571 = vpop.f32.mrb[0].mxu0
    %572 = vdwg.mxu0
    %v573 = vld [vmem:[%s6] sm:$0xff]
    %v574 = vld [vmem:[%s6 + $0x8] sm:$0xff]
    %v575 = vld [vmem:[%s6 + $0x10] sm:$0xff]
    %v576 = vld [vmem:[%s6 + $0x18] sm:$0xff]
    %v577 = vld [vmem:[%s6 + $0x20] sm:$0xff]
    %v578 = vld [vmem:[%s6 + $0x28] sm:$0xff]
    %v579 = vld [vmem:[%s6 + $0x30] sm:$0xff]
    %v580 = vld [vmem:[%s6 + $0x38] sm:$0xff]
    %vm589 = vcmask 1041409
    %v590 = vsel %vm589, %v385, %v378
    %vm591 = vcmask 1042434
    %v592 = vsel %vm591, %v392, %v590
    %vm593 = vcmask 1043459
    %v594 = vsel %vm593, %v399, %v592
    %vm595 = vcmask 1044484
    %v596 = vsel %vm595, %v406, %v594
    %vm597 = vcmask 1045509
    %v598 = vsel %vm597, %v413, %v596
    %vm599 = vcmask 1046534
    %v600 = vsel %vm599, %v420, %v598
    %vm601 = vcmask 1047559
    %v602 = vsel %vm601, %v427, %v600
    %v603 = vsel %vm51, %v602, 0
    %605 = vmatprep.subr.mxu0 0.0
    %606 = vmatpush1.msra.mxu0 %v573
    %607 = vmatprep.subr.mxu0 0.0
    %608 = vmatpush1.msra.mxu0 %v574
    %609 = vmatprep.subr.mxu0 0.0
    %610 = vmatpush1.msra.mxu0 %v575
    %611 = vmatprep.subr.mxu0 0.0
    %612 = vmatpush1.msra.mxu0 %v576
    %613 = vmatprep.subr.mxu0 0.0
    %614 = vmatpush1.msra.mxu0 %v577
    %615 = vmatprep.subr.mxu0 0.0
    %616 = vmatpush1.msra.mxu0 %v578
    %617 = vmatprep.subr.mxu0 0.0
    %618 = vmatpush1.msra.mxu0 %v579
    %619 = vmatprep.subr.mxu0 0.0
    %620 = vmatpush1.msra.mxu0 %v580
    %621 = vmatprep.subr.mxu0 0.0
    %622 = vmatpush1.msra.mxu0 0.0
    %623 = vmatprep.subr.mxu0 0.0
    %624 = vmatpush1.msra.mxu0 0.0
    %625 = vmatprep.subr.mxu0 0.0
    %626 = vmatpush1.msra.mxu0 0.0
    %627 = vmatprep.subr.mxu0 0.0
    %628 = vmatpush1.msra.mxu0 0.0
    %629 = vmatprep.subr.mxu0 0.0
    %630 = vmatpush1.msra.mxu0 0.0
    %631 = vmatprep.subr.mxu0 0.0
    %632 = vmatpush1.msra.mxu0 0.0
    %633 = vmatprep.subr.mxu0 0.0
    %634 = vmatpush1.msra.mxu0 0.0
    %635 = vmatprep.subr.mxu0 0.0
    %636 = vmatpush1.msra.mxu0 0.0
    %637 = vmatprep.subr.mxu0 0.0
    %638 = vmatpush1.msra.mxu0 0.0
    %639 = vmatprep.subr.mxu0 0.0
    %640 = vmatpush1.msra.mxu0 0.0
    %641 = vmatprep.subr.mxu0 0.0
    %642 = vmatpush1.msra.mxu0 0.0
    %643 = vmatprep.subr.mxu0 0.0
    %644 = vmatpush1.msra.mxu0 0.0
    %645 = vmatprep.subr.mxu0 0.0
    %646 = vmatpush1.msra.mxu0 0.0
    %647 = vmatprep.subr.mxu0 0.0
    %648 = vmatpush1.msra.mxu0 0.0
    %649 = vmatprep.subr.mxu0 0.0
    %650 = vmatpush1.msra.mxu0 0.0
    %651 = vmatprep.subr.mxu0 0.0
    %652 = vmatpush1.msra.mxu0 0.0
    %653 = vmatprep.subr.mxu0 0.0
    %654 = vmatpush1.msra.mxu0 0.0
    %655 = vmatprep.subr.mxu0 0.0
    %656 = vmatpush1.msra.mxu0 0.0
    %657 = vmatprep.subr.mxu0 0.0
    %658 = vmatpush1.msra.mxu0 0.0
    %659 = vmatprep.subr.mxu0 0.0
    %660 = vmatpush1.msra.mxu0 0.0
    %661 = vmatprep.subr.mxu0 0.0
    %662 = vmatpush1.msra.mxu0 0.0
    %663 = vmatprep.subr.mxu0 0.0
    %664 = vmatpush1.msra.mxu0 0.0
    %665 = vmatprep.subr.mxu0 0.0
    %666 = vmatpush1.msra.mxu0 0.0
    %667 = vmatprep.subr.mxu0 0.0
    %668 = vmatpush1.msra.mxu0 0.0
    %669 = vmatprep.mubr.f32.mxu0 0.0
    %670 = vmatmul.mubr.f32.gmra.mrb[0].mxu0 %v603
    %v671 = vpop.f32.mrb[0].mxu0
    %v672 = vadd.f32 0.0, %v671
    %v673 = vpop.f32.mrb[0].mxu0
    %674 = vdwg.mxu0
    %v676 = vcombine.high %v672, %v672
    %v678 = vunpack.c.l.s4 1966171168
    %v679 = vunpack.c.0.s8 %v678
    %v680 = vlaneseq
    %v681 = vshrl.u32 %v680, 7
    %v682 = vsub.s32 %v679, %v681
    %v683 = vrot.slane %v672, %v682
    %v685 = vunpack.c.l.s4 1966171168
    %v686 = vunpack.c.0.s8 %v685
    %v687 = vlaneseq
    %v688 = vshrl.u32 %v687, 7
    %v689 = vsub.s32 %v686, %v688
    %v690 = vrot.slane %v676, %v689
    %v691 = vcombine.high %v683, %v683
    %v692 = vcombine.high %v690, %v690
    %v694 = vunpack.c.l.s4 1966171168
    %v695 = vunpack.c.0.s8 %v694
    %v696 = vlaneseq
    %v697 = vshrl.u32 %v696, 7
    %v698 = vsub.s32 %v695, %v697
    %v699 = vrot.slane %v683, %v698
    %v701 = vunpack.c.l.s4 1966171168
    %v702 = vunpack.c.0.s8 %v701
    %v703 = vlaneseq
    %v704 = vshrl.u32 %v703, 7
    %v705 = vsub.s32 %v702, %v704
    %v706 = vrot.slane %v690, %v705
    %v708 = vunpack.c.l.s4 1966171168
    %v709 = vunpack.c.0.s8 %v708
    %v710 = vlaneseq
    %v711 = vshrl.u32 %v710, 7
    %v712 = vsub.s32 %v709, %v711
    %v713 = vrot.slane %v691, %v712
    %v715 = vunpack.c.l.s4 1966171168
    %v716 = vunpack.c.0.s8 %v715
    %v717 = vlaneseq
    %v718 = vshrl.u32 %v717, 7
    %v719 = vsub.s32 %v716, %v718
    %v720 = vrot.slane %v692, %v719
    %v721 = vcombine.high %v699, %v699
    %v722 = vcombine.high %v706, %v706
    %v723 = vcombine.high %v713, %v713
    %v724 = vcombine.high %v720, %v720
    %v725 = vlaneseq
    %v726 = vshrl.u32 %v725, 7
    %v727 = vsub.s32 0, %v726
    %v728 = vrot.slane %v699, %v727
    %v729 = vlaneseq
    %v730 = vshrl.u32 %v729, 7
    %v731 = vsub.s32 0, %v730
    %v732 = vrot.slane %v713, %v731
    %v733 = vlaneseq
    %v734 = vshrl.u32 %v733, 7
    %v735 = vsub.s32 0, %v734
    %v736 = vrot.slane %v721, %v735
    %v737 = vlaneseq
    %v738 = vshrl.u32 %v737, 7
    %v739 = vsub.s32 0, %v738
    %v740 = vrot.slane %v723, %v739
    %v741 = vlaneseq
    %v742 = vshrl.u32 %v741, 7
    %v743 = vsub.s32 0, %v742
    %v744 = vrot.slane %v706, %v743
    %v745 = vlaneseq
    %v746 = vshrl.u32 %v745, 7
    %v747 = vsub.s32 0, %v746
    %v748 = vrot.slane %v720, %v747
    %v749 = vlaneseq
    %v750 = vshrl.u32 %v749, 7
    %v751 = vsub.s32 0, %v750
    %v752 = vrot.slane %v722, %v751
    %v753 = vlaneseq
    %v754 = vshrl.u32 %v753, 7
    %v755 = vsub.s32 0, %v754
    %v756 = vrot.slane %v724, %v755
    %v765 = vadd.f32 %v535, %v728
    %v766 = vadd.f32 %v540, %v732
    %v767 = vadd.f32 %v545, %v736
    %v768 = vadd.f32 %v550, %v740
    %v769 = vadd.f32 %v555, %v744
    %v770 = vadd.f32 %v560, %v748
    %v771 = vadd.f32 %v565, %v752
    %v772 = vadd.f32 %v570, %v756
    %v774 = vlaneseq
    %v775 = vshrl.u32 %v774, 7
    %v776 = vsub.s32 0, %v775
    %v777 = vrot.slane %v34, %v776
    %v779 = vmul.f32 %v765, %v777
    %v780 = vmul.f32 %v766, %v777
    %v781 = vmul.f32 %v767, %v777
    %v782 = vmul.f32 %v768, %v777
    %v783 = vmul.f32 %v769, %v777
    %v784 = vmul.f32 %v770, %v777
    %v785 = vmul.f32 %v771, %v777
    %v786 = vmul.f32 %v772, %v777
    %v787 = vsel %vm203, %v779, 0.0
    %788 = vadd.xlane.f32.xlu0 %v787
    %v789 = vpop.xlane.xlu0 %788
    %v790 = vsel %vm203, %v780, 0.0
    %791 = vadd.xlane.f32.xlu0 %v790
    %v792 = vpop.xlane.xlu0 %791
    %v793 = vsel %vm203, %v781, 0.0
    %794 = vadd.xlane.f32.xlu0 %v793
    %v795 = vpop.xlane.xlu0 %794
    %v796 = vsel %vm203, %v782, 0.0
    %797 = vadd.xlane.f32.xlu0 %v796
    %v798 = vpop.xlane.xlu0 %797
    %v799 = vsel %vm203, %v783, 0.0
    %800 = vadd.xlane.f32.xlu0 %v799
    %v801 = vpop.xlane.xlu0 %800
    %v802 = vsel %vm203, %v784, 0.0
    %803 = vadd.xlane.f32.xlu0 %v802
    %v804 = vpop.xlane.xlu0 %803
    %v805 = vsel %vm203, %v785, 0.0
    %806 = vadd.xlane.f32.xlu0 %v805
    %v807 = vpop.xlane.xlu0 %806
    %v808 = vsel %vm203, %v786, 0.0
    %809 = vadd.xlane.f32.xlu0 %v808
    %v810 = vpop.xlane.xlu0 %809
    %v811 = vrot.slane %v789, 4
    %v812 = vmax.f32 %v789, %v811
    %v813 = vrot.slane %v812, 2
    %v814 = vmax.f32 %v812, %v813
    %v815 = vrot.slane %v814, 1
    %v816 = vmax.f32 %v814, %v815
    %v817 = vrot.slane %v792, 4
    %v818 = vmax.f32 %v792, %v817
    %v819 = vrot.slane %v818, 2
    %v820 = vmax.f32 %v818, %v819
    %v821 = vrot.slane %v820, 1
    %v822 = vmax.f32 %v820, %v821
    %v823 = vrot.slane %v795, 4
    %v824 = vmax.f32 %v795, %v823
    %v825 = vrot.slane %v824, 2
    %v826 = vmax.f32 %v824, %v825
    %v827 = vrot.slane %v826, 1
    %v828 = vmax.f32 %v826, %v827
    %v829 = vrot.slane %v798, 4
    %v830 = vmax.f32 %v798, %v829
    %v831 = vrot.slane %v830, 2
    %v832 = vmax.f32 %v830, %v831
    %v833 = vrot.slane %v832, 1
    %v834 = vmax.f32 %v832, %v833
    %v835 = vrot.slane %v801, 4
    %v836 = vmax.f32 %v801, %v835
    %v837 = vrot.slane %v836, 2
    %v838 = vmax.f32 %v836, %v837
    %v839 = vrot.slane %v838, 1
    %v840 = vmax.f32 %v838, %v839
    %v841 = vrot.slane %v804, 4
    %v842 = vmax.f32 %v804, %v841
    %v843 = vrot.slane %v842, 2
    %v844 = vmax.f32 %v842, %v843
    %v845 = vrot.slane %v844, 1
    %v846 = vmax.f32 %v844, %v845
    %v847 = vrot.slane %v807, 4
    %v848 = vmax.f32 %v807, %v847
    %v849 = vrot.slane %v848, 2
    %v850 = vmax.f32 %v848, %v849
    %v851 = vrot.slane %v850, 1
    %v852 = vmax.f32 %v850, %v851
    %v853 = vrot.slane %v810, 4
    %v854 = vmax.f32 %v810, %v853
    %v855 = vrot.slane %v854, 2
    %v856 = vmax.f32 %v854, %v855
    %v857 = vrot.slane %v856, 1
    %v858 = vmax.f32 %v856, %v857
    %v859 = vsub.f32 %v789, %v816
    %v860 = vsub.f32 %v792, %v822
    %v861 = vsub.f32 %v795, %v828
    %v862 = vsub.f32 %v798, %v834
    %v863 = vsub.f32 %v801, %v840
    %v864 = vsub.f32 %v804, %v846
    %v865 = vsub.f32 %v807, %v852
    %v866 = vsub.f32 %v810, %v858
    %v867 = vmul.f32 %v859, 1.442695
    %v868 = vpow.pop %v867
    %v869 = vmul.f32 %v860, 1.442695
    %v870 = vpow.pop %v869
    %v871 = vmul.f32 %v861, 1.442695
    %v872 = vpow.pop %v871
    %v873 = vmul.f32 %v862, 1.442695
    %v874 = vpow.pop %v873
    %v875 = vmul.f32 %v863, 1.442695
    %v876 = vpow.pop %v875
    %v877 = vmul.f32 %v864, 1.442695
    %v878 = vpow.pop %v877
    %v879 = vmul.f32 %v865, 1.442695
    %v880 = vpow.pop %v879
    %v881 = vmul.f32 %v866, 1.442695
    %v882 = vpow.pop %v881
    %v883 = vrot.slane %v868, 4
    %v884 = vadd.f32 %v868, %v883
    %v885 = vrot.slane %v884, 2
    %v886 = vadd.f32 %v884, %v885
    %v887 = vrot.slane %v886, 1
    %v888 = vadd.f32 %v886, %v887
    %v889 = vrot.slane %v870, 4
    %v890 = vadd.f32 %v870, %v889
    %v891 = vrot.slane %v890, 2
    %v892 = vadd.f32 %v890, %v891
    %v893 = vrot.slane %v892, 1
    %v894 = vadd.f32 %v892, %v893
    %v895 = vrot.slane %v872, 4
    %v896 = vadd.f32 %v872, %v895
    %v897 = vrot.slane %v896, 2
    %v898 = vadd.f32 %v896, %v897
    %v899 = vrot.slane %v898, 1
    %v900 = vadd.f32 %v898, %v899
    %v901 = vrot.slane %v874, 4
    %v902 = vadd.f32 %v874, %v901
    %v903 = vrot.slane %v902, 2
    %v904 = vadd.f32 %v902, %v903
    %v905 = vrot.slane %v904, 1
    %v906 = vadd.f32 %v904, %v905
    %v907 = vrot.slane %v876, 4
    %v908 = vadd.f32 %v876, %v907
    %v909 = vrot.slane %v908, 2
    %v910 = vadd.f32 %v908, %v909
    %v911 = vrot.slane %v910, 1
    %v912 = vadd.f32 %v910, %v911
    %v913 = vrot.slane %v878, 4
    %v914 = vadd.f32 %v878, %v913
    %v915 = vrot.slane %v914, 2
    %v916 = vadd.f32 %v914, %v915
    %v917 = vrot.slane %v916, 1
    %v918 = vadd.f32 %v916, %v917
    %v919 = vrot.slane %v880, 4
    %v920 = vadd.f32 %v880, %v919
    %v921 = vrot.slane %v920, 2
    %v922 = vadd.f32 %v920, %v921
    %v923 = vrot.slane %v922, 1
    %v924 = vadd.f32 %v922, %v923
    %v925 = vrot.slane %v882, 4
    %v926 = vadd.f32 %v882, %v925
    %v927 = vrot.slane %v926, 2
    %v928 = vadd.f32 %v926, %v927
    %v929 = vrot.slane %v928, 1
    %v930 = vadd.f32 %v928, %v929
    %v931 = vrcp.pop %v888
    %v932 = vrcp.pop %v894
    %v933 = vrcp.pop %v900
    %v934 = vrcp.pop %v906
    %v935 = vrcp.pop %v912
    %v936 = vrcp.pop %v918
    %v937 = vrcp.pop %v924
    %v938 = vrcp.pop %v930
    %v939 = vmul.f32 %v868, %v931
    %v940 = vmul.f32 %v870, %v932
    %v941 = vmul.f32 %v872, %v933
    %v942 = vmul.f32 %v874, %v934
    %v943 = vmul.f32 %v876, %v935
    %v944 = vmul.f32 %v878, %v936
    %v945 = vmul.f32 %v880, %v937
    %v946 = vmul.f32 %v882, %v938
    %v947 = vmul.f32 %v939, %v428
    %v948 = vmul.f32 %v940, %v429
    %v949 = vmul.f32 %v941, %v430
    %v950 = vmul.f32 %v942, %v431
    %v951 = vmul.f32 %v943, %v432
    %v952 = vmul.f32 %v944, %v433
    %v953 = vmul.f32 %v945, %v434
    %v954 = vmul.f32 %v946, %v435
    %v955 = vsel %vm51, %v947, 0.0
    %v956 = vrot.slane %v955, 4
    %v957 = vadd.f32 %v955, %v956
    %v958 = vrot.slane %v957, 2
    %v959 = vadd.f32 %v957, %v958
    %v960 = vrot.slane %v959, 1
    %v961 = vadd.f32 %v959, %v960
    %v962 = vsel %vm51, %v948, 0.0
    %v963 = vrot.slane %v962, 4
    %v964 = vadd.f32 %v962, %v963
    %v965 = vrot.slane %v964, 2
    %v966 = vadd.f32 %v964, %v965
    %v967 = vrot.slane %v966, 1
    %v968 = vadd.f32 %v966, %v967
    %v969 = vsel %vm51, %v949, 0.0
    %v970 = vrot.slane %v969, 4
    %v971 = vadd.f32 %v969, %v970
    %v972 = vrot.slane %v971, 2
    %v973 = vadd.f32 %v971, %v972
    %v974 = vrot.slane %v973, 1
    %v975 = vadd.f32 %v973, %v974
    %v976 = vsel %vm51, %v950, 0.0
    %v977 = vrot.slane %v976, 4
    %v978 = vadd.f32 %v976, %v977
    %v979 = vrot.slane %v978, 2
    %v980 = vadd.f32 %v978, %v979
    %v981 = vrot.slane %v980, 1
    %v982 = vadd.f32 %v980, %v981
    %v983 = vsel %vm51, %v951, 0.0
    %v984 = vrot.slane %v983, 4
    %v985 = vadd.f32 %v983, %v984
    %v986 = vrot.slane %v985, 2
    %v987 = vadd.f32 %v985, %v986
    %v988 = vrot.slane %v987, 1
    %v989 = vadd.f32 %v987, %v988
    %v990 = vsel %vm51, %v952, 0.0
    %v991 = vrot.slane %v990, 4
    %v992 = vadd.f32 %v990, %v991
    %v993 = vrot.slane %v992, 2
    %v994 = vadd.f32 %v992, %v993
    %v995 = vrot.slane %v994, 1
    %v996 = vadd.f32 %v994, %v995
    %v997 = vsel %vm51, %v953, 0.0
    %v998 = vrot.slane %v997, 4
    %v999 = vadd.f32 %v997, %v998
    %v1000 = vrot.slane %v999, 2
    %v1001 = vadd.f32 %v999, %v1000
    %v1002 = vrot.slane %v1001, 1
    %v1003 = vadd.f32 %v1001, %v1002
    %v1004 = vsel %vm51, %v954, 0.0
    %v1005 = vrot.slane %v1004, 4
    %v1006 = vadd.f32 %v1004, %v1005
    %v1007 = vrot.slane %v1006, 2
    %v1008 = vadd.f32 %v1006, %v1007
    %v1009 = vrot.slane %v1008, 1
    %v1010 = vadd.f32 %v1008, %v1009
    %v1011 = vld [vmem:[%s8] sm:$0xff]
    %v1012 = vld [vmem:[%s8 + $0x8] sm:$0xff]
    %v1013 = vld [vmem:[%s8 + $0x10] sm:$0xff]
    %v1014 = vld [vmem:[%s8 + $0x18] sm:$0xff]
    %v1015 = vld [vmem:[%s8 + $0x20] sm:$0xff]
    %v1016 = vld [vmem:[%s8 + $0x28] sm:$0xff]
    %v1017 = vld [vmem:[%s8 + $0x30] sm:$0xff]
    %v1018 = vld [vmem:[%s8 + $0x38] sm:$0xff]
    %v1027 = vsel %vm589, %v968, %v961
    %v1028 = vsel %vm591, %v975, %v1027
    %v1029 = vsel %vm593, %v982, %v1028
    %v1030 = vsel %vm595, %v989, %v1029
    %v1031 = vsel %vm597, %v996, %v1030
    %v1032 = vsel %vm599, %v1003, %v1031
    %v1033 = vsel %vm601, %v1010, %v1032
    %v1034 = vsel %vm51, %v1033, 0
    %1036 = vmatprep.subr.mxu0 0.0
    %1037 = vmatpush1.msra.mxu0 %v1011
    %1038 = vmatprep.subr.mxu0 0.0
    %1039 = vmatpush1.msra.mxu0 %v1012
    %1040 = vmatprep.subr.mxu0 0.0
    %1041 = vmatpush1.msra.mxu0 %v1013
    %1042 = vmatprep.subr.mxu0 0.0
    %1043 = vmatpush1.msra.mxu0 %v1014
    %1044 = vmatprep.subr.mxu0 0.0
    %1045 = vmatpush1.msra.mxu0 %v1015
    %1046 = vmatprep.subr.mxu0 0.0
    %1047 = vmatpush1.msra.mxu0 %v1016
    %1048 = vmatprep.subr.mxu0 0.0
    %1049 = vmatpush1.msra.mxu0 %v1017
    %1050 = vmatprep.subr.mxu0 0.0
    %1051 = vmatpush1.msra.mxu0 %v1018
    %1052 = vmatprep.subr.mxu0 0.0
    %1053 = vmatpush1.msra.mxu0 0.0
    %1054 = vmatprep.subr.mxu0 0.0
    %1055 = vmatpush1.msra.mxu0 0.0
    %1056 = vmatprep.subr.mxu0 0.0
    %1057 = vmatpush1.msra.mxu0 0.0
    %1058 = vmatprep.subr.mxu0 0.0
    %1059 = vmatpush1.msra.mxu0 0.0
    %1060 = vmatprep.subr.mxu0 0.0
    %1061 = vmatpush1.msra.mxu0 0.0
    %1062 = vmatprep.subr.mxu0 0.0
    %1063 = vmatpush1.msra.mxu0 0.0
    %1064 = vmatprep.subr.mxu0 0.0
    %1065 = vmatpush1.msra.mxu0 0.0
    %1066 = vmatprep.subr.mxu0 0.0
    %1067 = vmatpush1.msra.mxu0 0.0
    %1068 = vmatprep.subr.mxu0 0.0
    %1069 = vmatpush1.msra.mxu0 0.0
    %1070 = vmatprep.subr.mxu0 0.0
    %1071 = vmatpush1.msra.mxu0 0.0
    %1072 = vmatprep.subr.mxu0 0.0
    %1073 = vmatpush1.msra.mxu0 0.0
    %1074 = vmatprep.subr.mxu0 0.0
    %1075 = vmatpush1.msra.mxu0 0.0
    %1076 = vmatprep.subr.mxu0 0.0
    %1077 = vmatpush1.msra.mxu0 0.0
    %1078 = vmatprep.subr.mxu0 0.0
    %1079 = vmatpush1.msra.mxu0 0.0
    %1080 = vmatprep.subr.mxu0 0.0
    %1081 = vmatpush1.msra.mxu0 0.0
    %1082 = vmatprep.subr.mxu0 0.0
    %1083 = vmatpush1.msra.mxu0 0.0
    %1084 = vmatprep.subr.mxu0 0.0
    %1085 = vmatpush1.msra.mxu0 0.0
    %1086 = vmatprep.subr.mxu0 0.0
    %1087 = vmatpush1.msra.mxu0 0.0
    %1088 = vmatprep.subr.mxu0 0.0
    %1089 = vmatpush1.msra.mxu0 0.0
    %1090 = vmatprep.subr.mxu0 0.0
    %1091 = vmatpush1.msra.mxu0 0.0
    %1092 = vmatprep.subr.mxu0 0.0
    %1093 = vmatpush1.msra.mxu0 0.0
    %1094 = vmatprep.subr.mxu0 0.0
    %1095 = vmatpush1.msra.mxu0 0.0
    %1096 = vmatprep.subr.mxu0 0.0
    %1097 = vmatpush1.msra.mxu0 0.0
    %1098 = vmatprep.subr.mxu0 0.0
    %1099 = vmatpush1.msra.mxu0 0.0
    %1100 = vmatprep.mubr.f32.mxu0 0.0
    %1101 = vmatmul.mubr.f32.gmra.mrb[0].mxu0 %v1034
    %v1102 = vpop.f32.mrb[0].mxu0
    %v1103 = vadd.f32 0.0, %v1102
    %v1104 = vpop.f32.mrb[0].mxu0
    %1105 = vdwg.mxu0
    %vm1106 = vcmp.gt.f32.partialorder %v1103, 0.0
    %v1107 = vmul.f32 %v1103, 0.01
    %v1108 = vsel %vm1106, %v1103, %v1107
    %v1109 = vld [vmem:[%s2] sm:$0xf]
    %v1110 = vld [vmem:[%s2 + $0x4] sm:$0xf]
    %v1111 = vld [vmem:[%s2 + $0x8] sm:$0xf]
    %v1112 = vld [vmem:[%s2 + $0xc] sm:$0xf]
    %v1113 = vld [vmem:[%s2 + $0x10] sm:$0xf]
    %v1114 = vld [vmem:[%s2 + $0x14] sm:$0xf]
    %v1115 = vld [vmem:[%s2 + $0x18] sm:$0xf]
    %v1116 = vld [vmem:[%s2 + $0x1c] sm:$0xf]
    %v1118 = vcombine.high %v1108, %v1108
    %v1120 = vunpack.c.l.s4 1966171168
    %v1121 = vunpack.c.0.s8 %v1120
    %v1122 = vlaneseq
    %v1123 = vshrl.u32 %v1122, 7
    %v1124 = vsub.s32 %v1121, %v1123
    %v1125 = vrot.slane %v1108, %v1124
    %v1127 = vunpack.c.l.s4 1966171168
    %v1128 = vunpack.c.0.s8 %v1127
    %v1129 = vlaneseq
    %v1130 = vshrl.u32 %v1129, 7
    %v1131 = vsub.s32 %v1128, %v1130
    %v1132 = vrot.slane %v1118, %v1131
    %v1133 = vcombine.high %v1125, %v1125
    %v1134 = vcombine.high %v1132, %v1132
    %v1136 = vunpack.c.l.s4 1966171168
    %v1137 = vunpack.c.0.s8 %v1136
    %v1138 = vlaneseq
    %v1139 = vshrl.u32 %v1138, 7
    %v1140 = vsub.s32 %v1137, %v1139
    %v1141 = vrot.slane %v1125, %v1140
    %v1143 = vunpack.c.l.s4 1966171168
    %v1144 = vunpack.c.0.s8 %v1143
    %v1145 = vlaneseq
    %v1146 = vshrl.u32 %v1145, 7
    %v1147 = vsub.s32 %v1144, %v1146
    %v1148 = vrot.slane %v1132, %v1147
    %v1150 = vunpack.c.l.s4 1966171168
    %v1151 = vunpack.c.0.s8 %v1150
    %v1152 = vlaneseq
    %v1153 = vshrl.u32 %v1152, 7
    %v1154 = vsub.s32 %v1151, %v1153
    %v1155 = vrot.slane %v1133, %v1154
    %v1157 = vunpack.c.l.s4 1966171168
    %v1158 = vunpack.c.0.s8 %v1157
    %v1159 = vlaneseq
    %v1160 = vshrl.u32 %v1159, 7
    %v1161 = vsub.s32 %v1158, %v1160
    %v1162 = vrot.slane %v1134, %v1161
    %v1163 = vcombine.high %v1141, %v1141
    %v1164 = vcombine.high %v1148, %v1148
    %v1165 = vcombine.high %v1155, %v1155
    %v1166 = vcombine.high %v1162, %v1162
    %v1167 = vlaneseq
    %v1168 = vshrl.u32 %v1167, 7
    %v1169 = vsub.s32 0, %v1168
    %v1170 = vrot.slane %v1141, %v1169
    %v1171 = vlaneseq
    %v1172 = vshrl.u32 %v1171, 7
    %v1173 = vsub.s32 0, %v1172
    %v1174 = vrot.slane %v1155, %v1173
    %v1175 = vlaneseq
    %v1176 = vshrl.u32 %v1175, 7
    %v1177 = vsub.s32 0, %v1176
    %v1178 = vrot.slane %v1163, %v1177
    %v1179 = vlaneseq
    %v1180 = vshrl.u32 %v1179, 7
    %v1181 = vsub.s32 0, %v1180
    %v1182 = vrot.slane %v1165, %v1181
    %v1183 = vlaneseq
    %v1184 = vshrl.u32 %v1183, 7
    %v1185 = vsub.s32 0, %v1184
    %v1186 = vrot.slane %v1148, %v1185
    %v1187 = vlaneseq
    %v1188 = vshrl.u32 %v1187, 7
    %v1189 = vsub.s32 0, %v1188
    %v1190 = vrot.slane %v1162, %v1189
    %v1191 = vlaneseq
    %v1192 = vshrl.u32 %v1191, 7
    %v1193 = vsub.s32 0, %v1192
    %v1194 = vrot.slane %v1164, %v1193
    %v1195 = vlaneseq
    %v1196 = vshrl.u32 %v1195, 7
    %v1197 = vsub.s32 0, %v1196
    %v1198 = vrot.slane %v1166, %v1197
    %v1207 = vmul.f32 %v1109, %v1170
    %v1208 = vmul.f32 %v1110, %v1174
    %v1209 = vmul.f32 %v1111, %v1178
    %v1210 = vmul.f32 %v1112, %v1182
    %v1211 = vmul.f32 %v1113, %v1186
    %v1212 = vmul.f32 %v1114, %v1190
    %v1213 = vmul.f32 %v1115, %v1194
    %v1214 = vmul.f32 %v1116, %v1198
    %vm1215 = vcmask 519168
    %v1216 = vsel %vm1215, %v1207, 0.0
    %1217 = vadd.xlane.f32.xlu0 %v1216
    %v1218 = vpop.xlane.xlu0 %1217
    %v1219 = vsel %vm1215, %v1208, 0.0
    %1220 = vadd.xlane.f32.xlu0 %v1219
    %v1221 = vpop.xlane.xlu0 %1220
    %v1222 = vsel %vm1215, %v1209, 0.0
    %1223 = vadd.xlane.f32.xlu0 %v1222
    %v1224 = vpop.xlane.xlu0 %1223
    %v1225 = vsel %vm1215, %v1210, 0.0
    %1226 = vadd.xlane.f32.xlu0 %v1225
    %v1227 = vpop.xlane.xlu0 %1226
    %v1228 = vsel %vm1215, %v1211, 0.0
    %1229 = vadd.xlane.f32.xlu0 %v1228
    %v1230 = vpop.xlane.xlu0 %1229
    %v1231 = vsel %vm1215, %v1212, 0.0
    %1232 = vadd.xlane.f32.xlu0 %v1231
    %v1233 = vpop.xlane.xlu0 %1232
    %v1234 = vsel %vm1215, %v1213, 0.0
    %1235 = vadd.xlane.f32.xlu0 %v1234
    %v1236 = vpop.xlane.xlu0 %1235
    %v1237 = vsel %vm1215, %v1214, 0.0
    %1238 = vadd.xlane.f32.xlu0 %v1237
    %v1239 = vpop.xlane.xlu0 %1238
    %v1248 = vlaneseq
    %v1249 = vand.u32 %v1248, 127
    %v1250 = vlaneseq
    %v1251 = vshrl.u32 %v1250, 7
    %v1252 = vsub.s32 %v1249, %v1251
    %v1253 = vrot.slane %v1218, %v1252
    %v1254 = vlaneseq
    %v1255 = vshrl.u32 %v1254, 7
    %v1256 = vsub.s32 %v1249, %v1255
    %v1257 = vrot.slane %v1221, %v1256
    %v1258 = vlaneseq
    %v1259 = vshrl.u32 %v1258, 7
    %v1260 = vsub.s32 %v1249, %v1259
    %v1261 = vrot.slane %v1224, %v1260
    %v1262 = vlaneseq
    %v1263 = vshrl.u32 %v1262, 7
    %v1264 = vsub.s32 %v1249, %v1263
    %v1265 = vrot.slane %v1227, %v1264
    %v1266 = vlaneseq
    %v1267 = vshrl.u32 %v1266, 7
    %v1268 = vsub.s32 %v1249, %v1267
    %v1269 = vrot.slane %v1230, %v1268
    %v1270 = vlaneseq
    %v1271 = vshrl.u32 %v1270, 7
    %v1272 = vsub.s32 %v1249, %v1271
    %v1273 = vrot.slane %v1233, %v1272
    %v1274 = vlaneseq
    %v1275 = vshrl.u32 %v1274, 7
    %v1276 = vsub.s32 %v1249, %v1275
    %v1277 = vrot.slane %v1236, %v1276
    %v1278 = vlaneseq
    %v1279 = vshrl.u32 %v1278, 7
    %v1280 = vsub.s32 %v1249, %v1279
    %v1281 = vrot.slane %v1239, %v1280
    %v1282 = vsel %vm589, %v1257, %v1253
    %v1283 = vsel %vm591, %v1261, %v1282
    %v1284 = vsel %vm593, %v1265, %v1283
    %v1285 = vsel %vm595, %v1269, %v1284
    %v1286 = vsel %vm597, %v1273, %v1285
    %v1287 = vsel %vm599, %v1277, %v1286
    %v1288 = vsel %vm601, %v1281, %v1287
    %vm1290 = vcmask 31744
    %v1291 = vsel %vm1290, %v1288, -inf
    %1292 = vmax.xlane.f32.xlu0 %v1291
    %v1293 = vpop.xlane.xlu0 %1292
    %v1295 = vlaneseq
    %v1296 = vshrl.u32 %v1295, 7
    %v1297 = vsub.s32 0, %v1296
    %v1298 = vrot.slane %v1293, %v1297
    %v1299 = vlaneseq
    %v1300 = vshrl.u32 %v1299, 7
    %v1301 = vsub.s32 1, %v1300
    %v1302 = vrot.slane %v1293, %v1301
    %v1303 = vlaneseq
    %v1304 = vshrl.u32 %v1303, 7
    %v1305 = vsub.s32 2, %v1304
    %v1306 = vrot.slane %v1293, %v1305
    %v1307 = vlaneseq
    %v1308 = vshrl.u32 %v1307, 7
    %v1309 = vsub.s32 3, %v1308
    %v1310 = vrot.slane %v1293, %v1309
    %v1311 = vlaneseq
    %v1312 = vshrl.u32 %v1311, 7
    %v1313 = vsub.s32 4, %v1312
    %v1314 = vrot.slane %v1293, %v1313
    %v1315 = vlaneseq
    %v1316 = vshrl.u32 %v1315, 7
    %v1317 = vsub.s32 5, %v1316
    %v1318 = vrot.slane %v1293, %v1317
    %v1319 = vlaneseq
    %v1320 = vshrl.u32 %v1319, 7
    %v1321 = vsub.s32 6, %v1320
    %v1322 = vrot.slane %v1293, %v1321
    %v1323 = vlaneseq
    %v1324 = vshrl.u32 %v1323, 7
    %v1325 = vsub.s32 7, %v1324
    %v1326 = vrot.slane %v1293, %v1325
    %v1335 = vsub.f32 %v1218, %v1298
    %v1336 = vsub.f32 %v1221, %v1302
    %v1337 = vsub.f32 %v1224, %v1306
    %v1338 = vsub.f32 %v1227, %v1310
    %v1339 = vsub.f32 %v1230, %v1314
    %v1340 = vsub.f32 %v1233, %v1318
    %v1341 = vsub.f32 %v1236, %v1322
    %v1342 = vsub.f32 %v1239, %v1326
    %v1343 = vmul.f32 %v1335, 1.442695
    %v1344 = vpow.pop %v1343
    %v1345 = vmul.f32 %v1336, 1.442695
    %v1346 = vpow.pop %v1345
    %v1347 = vmul.f32 %v1337, 1.442695
    %v1348 = vpow.pop %v1347
    %v1349 = vmul.f32 %v1338, 1.442695
    %v1350 = vpow.pop %v1349
    %v1351 = vmul.f32 %v1339, 1.442695
    %v1352 = vpow.pop %v1351
    %v1353 = vmul.f32 %v1340, 1.442695
    %v1354 = vpow.pop %v1353
    %v1355 = vmul.f32 %v1341, 1.442695
    %v1356 = vpow.pop %v1355
    %v1357 = vmul.f32 %v1342, 1.442695
    %v1358 = vpow.pop %v1357
    %1367 = vset.pattern.permute.xlu0 0
    %1368 = vperm.xlu0 %1367, %v1344
    %v1369 = vpop.permute.xlu0 %1368
    %1370 = vset.pattern.permute.xlu0 0
    %1371 = vperm.xlu0 %1370, %v1346
    %v1372 = vpop.permute.xlu0 %1371
    %1373 = vset.pattern.permute.xlu0 0
    %1374 = vperm.xlu0 %1373, %v1348
    %v1375 = vpop.permute.xlu0 %1374
    %1376 = vset.pattern.permute.xlu0 0
    %1377 = vperm.xlu0 %1376, %v1350
    %v1378 = vpop.permute.xlu0 %1377
    %1379 = vset.pattern.permute.xlu0 0
    %1380 = vperm.xlu0 %1379, %v1352
    %v1381 = vpop.permute.xlu0 %1380
    %1382 = vset.pattern.permute.xlu0 0
    %1383 = vperm.xlu0 %1382, %v1354
    %v1384 = vpop.permute.xlu0 %1383
    %1385 = vset.pattern.permute.xlu0 0
    %1386 = vperm.xlu0 %1385, %v1356
    %v1387 = vpop.permute.xlu0 %1386
    %1388 = vset.pattern.permute.xlu0 0
    %1389 = vperm.xlu0 %1388, %v1358
    %v1390 = vpop.permute.xlu0 %1389
    %v1391 = vlaneseq
    %v1392 = vshrl.u32 %v1391, 7
    %v1393 = vsub.s32 %v1249, %v1392
    %v1394 = vrot.slane %v1369, %v1393
    %v1395 = vlaneseq
    %v1396 = vshrl.u32 %v1395, 7
    %v1397 = vsub.s32 %v1249, %v1396
    %v1398 = vrot.slane %v1372, %v1397
    %v1399 = vlaneseq
    %v1400 = vshrl.u32 %v1399, 7
    %v1401 = vsub.s32 %v1249, %v1400
    %v1402 = vrot.slane %v1375, %v1401
    %v1403 = vlaneseq
    %v1404 = vshrl.u32 %v1403, 7
    %v1405 = vsub.s32 %v1249, %v1404
    %v1406 = vrot.slane %v1378, %v1405
    %v1407 = vlaneseq
    %v1408 = vshrl.u32 %v1407, 7
    %v1409 = vsub.s32 %v1249, %v1408
    %v1410 = vrot.slane %v1381, %v1409
    %v1411 = vlaneseq
    %v1412 = vshrl.u32 %v1411, 7
    %v1413 = vsub.s32 %v1249, %v1412
    %v1414 = vrot.slane %v1384, %v1413
    %v1415 = vlaneseq
    %v1416 = vshrl.u32 %v1415, 7
    %v1417 = vsub.s32 %v1249, %v1416
    %v1418 = vrot.slane %v1387, %v1417
    %v1419 = vlaneseq
    %v1420 = vshrl.u32 %v1419, 7
    %v1421 = vsub.s32 %v1249, %v1420
    %v1422 = vrot.slane %v1390, %v1421
    %v1423 = vsel %vm589, %v1398, %v1394
    %v1424 = vsel %vm591, %v1402, %v1423
    %v1425 = vsel %vm593, %v1406, %v1424
    %v1426 = vsel %vm595, %v1410, %v1425
    %v1427 = vsel %vm597, %v1414, %v1426
    %v1428 = vsel %vm599, %v1418, %v1427
    %v1429 = vsel %vm601, %v1422, %v1428
    %v1431 = vsel %vm1290, %v1429, 0.0
    %1432 = vadd.xlane.f32.xlu0 %v1431
    %v1433 = vpop.xlane.xlu0 %1432
    %v1434 = vrcp.pop %v1433
    %v1436 = vlaneseq
    %v1437 = vshrl.u32 %v1436, 7
    %v1438 = vsub.s32 0, %v1437
    %v1439 = vrot.slane %v1434, %v1438
    %v1440 = vlaneseq
    %v1441 = vshrl.u32 %v1440, 7
    %v1442 = vsub.s32 1, %v1441
    %v1443 = vrot.slane %v1434, %v1442
    %v1444 = vlaneseq
    %v1445 = vshrl.u32 %v1444, 7
    %v1446 = vsub.s32 2, %v1445
    %v1447 = vrot.slane %v1434, %v1446
    %v1448 = vlaneseq
    %v1449 = vshrl.u32 %v1448, 7
    %v1450 = vsub.s32 3, %v1449
    %v1451 = vrot.slane %v1434, %v1450
    %v1452 = vlaneseq
    %v1453 = vshrl.u32 %v1452, 7
    %v1454 = vsub.s32 4, %v1453
    %v1455 = vrot.slane %v1434, %v1454
    %v1456 = vlaneseq
    %v1457 = vshrl.u32 %v1456, 7
    %v1458 = vsub.s32 5, %v1457
    %v1459 = vrot.slane %v1434, %v1458
    %v1460 = vlaneseq
    %v1461 = vshrl.u32 %v1460, 7
    %v1462 = vsub.s32 6, %v1461
    %v1463 = vrot.slane %v1434, %v1462
    %v1464 = vlaneseq
    %v1465 = vshrl.u32 %v1464, 7
    %v1466 = vsub.s32 7, %v1465
    %v1467 = vrot.slane %v1434, %v1466
    %v1476 = vmul.f32 %v1344, %v1439
    %v1477 = vmul.f32 %v1346, %v1443
    %v1478 = vmul.f32 %v1348, %v1447
    %v1479 = vmul.f32 %v1350, %v1451
    %v1480 = vmul.f32 %v1352, %v1455
    %v1481 = vmul.f32 %v1354, %v1459
    %v1482 = vmul.f32 %v1356, %v1463
    %v1483 = vmul.f32 %v1358, %v1467
    %v1484 = vlaneseq
    %v1485 = vshrl.u32 %v1484, 7
    %vm1486 = vcmp.eq.s32.totalorder %v1485, %v1249
    %v1487 = vsel %vm1486, 1, 0
    %v1488 = vcvt.s32.f32 %v1487
    %1497 = vset.pattern.permute.xlu0 0
    %1498 = vperm.xlu0 %1497, %v1476
    %v1499 = vpop.permute.xlu0 %1498
    %1500 = vset.pattern.permute.xlu0 0
    %1501 = vperm.xlu0 %1500, %v1477
    %v1502 = vpop.permute.xlu0 %1501
    %1503 = vset.pattern.permute.xlu0 0
    %1504 = vperm.xlu0 %1503, %v1478
    %v1505 = vpop.permute.xlu0 %1504
    %1506 = vset.pattern.permute.xlu0 0
    %1507 = vperm.xlu0 %1506, %v1479
    %v1508 = vpop.permute.xlu0 %1507
    %1509 = vset.pattern.permute.xlu0 0
    %1510 = vperm.xlu0 %1509, %v1480
    %v1511 = vpop.permute.xlu0 %1510
    %1512 = vset.pattern.permute.xlu0 0
    %1513 = vperm.xlu0 %1512, %v1481
    %v1514 = vpop.permute.xlu0 %1513
    %1515 = vset.pattern.permute.xlu0 0
    %1516 = vperm.xlu0 %1515, %v1482
    %v1517 = vpop.permute.xlu0 %1516
    %1518 = vset.pattern.permute.xlu0 0
    %1519 = vperm.xlu0 %1518, %v1483
    %v1520 = vpop.permute.xlu0 %1519
    %v1521 = vlaneseq
    %v1522 = vshrl.u32 %v1521, 7
    %v1523 = vsub.s32 %v1249, %v1522
    %v1524 = vrot.slane %v1499, %v1523
    %v1525 = vlaneseq
    %v1526 = vshrl.u32 %v1525, 7
    %v1527 = vsub.s32 %v1249, %v1526
    %v1528 = vrot.slane %v1502, %v1527
    %v1529 = vlaneseq
    %v1530 = vshrl.u32 %v1529, 7
    %v1531 = vsub.s32 %v1249, %v1530
    %v1532 = vrot.slane %v1505, %v1531
    %v1533 = vlaneseq
    %v1534 = vshrl.u32 %v1533, 7
    %v1535 = vsub.s32 %v1249, %v1534
    %v1536 = vrot.slane %v1508, %v1535
    %v1537 = vlaneseq
    %v1538 = vshrl.u32 %v1537, 7
    %v1539 = vsub.s32 %v1249, %v1538
    %v1540 = vrot.slane %v1511, %v1539
    %v1541 = vlaneseq
    %v1542 = vshrl.u32 %v1541, 7
    %v1543 = vsub.s32 %v1249, %v1542
    %v1544 = vrot.slane %v1514, %v1543
    %v1545 = vlaneseq
    %v1546 = vshrl.u32 %v1545, 7
    %v1547 = vsub.s32 %v1249, %v1546
    %v1548 = vrot.slane %v1517, %v1547
    %v1549 = vlaneseq
    %v1550 = vshrl.u32 %v1549, 7
    %v1551 = vsub.s32 %v1249, %v1550
    %v1552 = vrot.slane %v1520, %v1551
    %v1553 = vsel %vm589, %v1528, %v1524
    %v1554 = vsel %vm591, %v1532, %v1553
    %v1555 = vsel %vm593, %v1536, %v1554
    %v1556 = vsel %vm595, %v1540, %v1555
    %v1557 = vsel %vm597, %v1544, %v1556
    %v1558 = vsel %vm599, %v1548, %v1557
    %v1559 = vsel %vm601, %v1552, %v1558
    %v1561 = vsel %vm1290, %v1488, 0
    %v1563 = vsel %vm1290, %v1559, 0
    %1565 = vmatprep.subr.mxu0 0.0
    %1566 = vmatpush1.xpose.msra.mxu0 %v1563
    %1567 = vmatprep.subr.mxu0 0.0
    %1568 = vmatpush1.xpose.msra.mxu0 0.0
    %1569 = vmatprep.subr.mxu0 0.0
    %1570 = vmatpush1.xpose.msra.mxu0 0.0
    %1571 = vmatprep.subr.mxu0 0.0
    %1572 = vmatpush1.xpose.msra.mxu0 0.0
    %1573 = vmatprep.subr.mxu0 0.0
    %1574 = vmatpush1.xpose.msra.mxu0 0.0
    %1575 = vmatprep.subr.mxu0 0.0
    %1576 = vmatpush1.xpose.msra.mxu0 0.0
    %1577 = vmatprep.subr.mxu0 0.0
    %1578 = vmatpush1.xpose.msra.mxu0 0.0
    %1579 = vmatprep.subr.mxu0 0.0
    %1580 = vmatpush1.xpose.msra.mxu0 0.0
    %1581 = vmatprep.subr.mxu0 0.0
    %1582 = vmatpush1.xpose.msra.mxu0 0.0
    %1583 = vmatprep.subr.mxu0 0.0
    %1584 = vmatpush1.xpose.msra.mxu0 0.0
    %1585 = vmatprep.subr.mxu0 0.0
    %1586 = vmatpush1.xpose.msra.mxu0 0.0
    %1587 = vmatprep.subr.mxu0 0.0
    %1588 = vmatpush1.xpose.msra.mxu0 0.0
    %1589 = vmatprep.subr.mxu0 0.0
    %1590 = vmatpush1.xpose.msra.mxu0 0.0
    %1591 = vmatprep.subr.mxu0 0.0
    %1592 = vmatpush1.xpose.msra.mxu0 0.0
    %1593 = vmatprep.subr.mxu0 0.0
    %1594 = vmatpush1.xpose.msra.mxu0 0.0
    %1595 = vmatprep.subr.mxu0 0.0
    %1596 = vmatpush1.xpose.msra.mxu0 0.0
    %1597 = vmatprep.subr.mxu0 0.0
    %1598 = vmatpush1.xpose.msra.mxu0 0.0
    %1599 = vmatprep.subr.mxu0 0.0
    %1600 = vmatpush1.xpose.msra.mxu0 0.0
    %1601 = vmatprep.subr.mxu0 0.0
    %1602 = vmatpush1.xpose.msra.mxu0 0.0
    %1603 = vmatprep.subr.mxu0 0.0
    %1604 = vmatpush1.xpose.msra.mxu0 0.0
    %1605 = vmatprep.subr.mxu0 0.0
    %1606 = vmatpush1.xpose.msra.mxu0 0.0
    %1607 = vmatprep.subr.mxu0 0.0
    %1608 = vmatpush1.xpose.msra.mxu0 0.0
    %1609 = vmatprep.subr.mxu0 0.0
    %1610 = vmatpush1.xpose.msra.mxu0 0.0
    %1611 = vmatprep.subr.mxu0 0.0
    %1612 = vmatpush1.xpose.msra.mxu0 0.0
    %1613 = vmatprep.subr.mxu0 0.0
    %1614 = vmatpush1.xpose.msra.mxu0 0.0
    %1615 = vmatprep.subr.mxu0 0.0
    %1616 = vmatpush1.xpose.msra.mxu0 0.0
    %1617 = vmatprep.subr.mxu0 0.0
    %1618 = vmatpush1.xpose.msra.mxu0 0.0
    %1619 = vmatprep.subr.mxu0 0.0
    %1620 = vmatpush1.xpose.msra.mxu0 0.0
    %1621 = vmatprep.subr.mxu0 0.0
    %1622 = vmatpush1.xpose.msra.mxu0 0.0
    %1623 = vmatprep.subr.mxu0 0.0
    %1624 = vmatpush1.xpose.msra.mxu0 0.0
    %1625 = vmatprep.subr.mxu0 0.0
    %1626 = vmatpush1.xpose.msra.mxu0 0.0
    %1627 = vmatprep.subr.mxu0 0.0
    %1628 = vmatpush1.xpose.msra.mxu0 0.0
    %1629 = vmatprep.mubr.f32.mxu0 0.0
    %1630 = vmatmul.mubr.f32.gmra.mrb[0].mxu0 %v1561
    %v1631 = vpop.f32.mrb[0].mxu0
    %v1632 = vadd.f32 0.0, %v1631
    %v1633 = vpop.f32.mrb[0].mxu0
    %1634 = vdwg.mxu0
    %vm1635 = vcmask 60416
    %1636 = vst.msk [vmem:[#allocation2] sm:$0xf] %vm1635, %v1632
    // Predicated region
    $region38: #{tpu_custom_call.1} parent=1 // pred_check
      _
    $region39: #{tpu_custom_call.1} parent=1 // pred_check_branch
      %1638 = sbr.rel (0) target = $region41
    $region40: #{tpu_custom_call.1} parent=1 // pred_region
      %s1640 = ssub.s32 64, 64
      %1641 = vsyncadd [#allocation3], %s1640
      %s1643 = sshll.u32 [#allocation2], 4
      %s1644 = int_to_ptr.vmem [resolvable:$true] %s1643
      %1646 = dma.vmem_to_hbm [thread:$0]  %s1644, 64, %s9, [#allocation3]
    $region41: #{tpu_custom_call.1} parent=1 // pred_fallthru
      _
    // Predicated region
    $region42: #{tpu_custom_call.1} parent=1 // pred_check
      _
    $region43: #{tpu_custom_call.1} parent=1 // pred_check_branch
      %1648 = sbr.rel (0) target = $region45
    $region44: #{tpu_custom_call.1} parent=1 // pred_region
      %1649 = dma.done [#allocation3], 64
    $region45: #{tpu_custom_call.1} parent=1 // pred_fallthru
      _
    %1650 = vsyncpa [#allocation3], 1

</llo_original>
